<compile_context>
chip_gen: v5e
topology: v5e:2x2
jax: 0.10.0
libtpu: 0.0.40
codegen_flags: <defaults>
</compile_context>

<pallas_src>
import functools

import jax
import jax.numpy as jnp
from jax.experimental import pallas as pl
from jax.experimental.pallas import tpu as pltpu

_BN_EPS = 1e-5


# ----------------------------------------------------------------------------
# Fused kernel helpers
# ----------------------------------------------------------------------------
def _im2col_3x3(pad_ref, H, W):
    """Build the (H*W, 9*C) im2col patch matrix from a zero-padded (H+2, W+2, C)
    VMEM scratch.  Column order: taps (dh, dw) row-major, channel fastest."""
    C = pad_ref.shape[-1]
    taps = [pad_ref[dh:dh + H, dw:dw + W, :].reshape(H * W, C)
            for dh in range(3) for dw in range(3)]
    return jnp.concatenate(taps, axis=-1)


def _up2_fused_kernel(x1_ref, x2_ref, bt_ref, w1_ref, s1_ref, b1_ref,
                      w2_ref, s2_ref, b2_ref, o_ref, pad1_ref, pad2_ref,
                      *, C1, C2, H, W):
    # x1_ref : (1, C1, H1*W1)        raw NCHW (flattened spatial) skip/low-res input
    # x2_ref : (1, H, W, C2)         skip connection, channels-last
    # bt_ref : (H*W, H1*W1)          fused bilinear-upsample + F.pad matrix
    # w1_ref : (9*Cin, mid)          im2col conv1 weight   (Cin = C1 + C2)
    # w2_ref : (Cout, 9*mid)         im2col conv2 weight (channel-first output)
    # s*/b*  : folded BatchNorm (eval) scale / bias
    # o_ref  : (1, Cout, H*W)        lane-dense output block
    f32 = jnp.float32

    # (1) bilinear 2x upsample (align_corners=True) fused with F.pad as ONE
    #     MXU matmul:  up[s, c] = sum_t Bt[s, t] * x1[c, t]   (NT dot, no transpose)
    up = jax.lax.dot_general(
        bt_ref[...], x1_ref[0].astype(f32),
        dimension_numbers=(((1,), (1,)), ((), ())),
        preferred_element_type=f32)                                  # (H*W, C1)

    # (2) channel concat [x2, up] + 1-pixel zero border (conv padding=1),
    #     materialized once in VMEM -- no HBM round trip.
    pad1_ref[...] = jnp.zeros_like(pad1_ref)
    pad1_ref[1:H + 1, 1:W + 1, :] = jnp.concatenate(
        [x2_ref[0].astype(f32), up.reshape(H, W, C1)], axis=-1)

    # (3) conv1 (3x3, pad=1, no bias) as a single im2col matmul,
    #     then folded BatchNorm (eval mode) + ReLU.
    p1 = _im2col_3x3(pad1_ref, H, W)                                 # (H*W, 9*Cin)
    y1 = jnp.dot(p1, w1_ref[...], preferred_element_type=f32)        # (H*W, mid)
    y1 = jnp.maximum(y1 * s1_ref[...] + b1_ref[...], 0.0)

    # (4) conv2: same im2col trick, computed channel-first so the final store
    #     is lane-dense (Cout rows x H*W lanes).
    pad2_ref[...] = jnp.zeros_like(pad2_ref)
    pad2_ref[1:H + 1, 1:W + 1, :] = y1.reshape(H, W, y1.shape[-1])
    p2 = _im2col_3x3(pad2_ref, H, W)                                 # (H*W, 9*mid)
    y2 = jax.lax.dot_general(
        w2_ref[...], p2,
        dimension_numbers=(((1,), (1,)), ((), ())),
        preferred_element_type=f32)                                  # (Cout, H*W)
    y2 = jnp.maximum(y2 * s2_ref[...] + b2_ref[...], 0.0)

    o_ref[0] = y2.astype(o_ref.dtype)


# ----------------------------------------------------------------------------
# Host-side helpers
# ----------------------------------------------------------------------------
def _interp_matrix_1d(n_in, n_out):
    """(n_out, n_in) bilinear interpolation matrix, align_corners=True."""
    if n_in == 1:
        return jnp.ones((n_out, 1), jnp.float32)
    src = jnp.arange(n_out, dtype=jnp.float32) * ((n_in - 1) / (n_out - 1))
    i0 = jnp.clip(jnp.floor(src).astype(jnp.int32), 0, n_in - 2)
    frac = src - i0.astype(jnp.float32)
    lo = jax.nn.one_hot(i0, n_in, dtype=jnp.float32) * (1.0 - frac)[:, None]
    hi = jax.nn.one_hot(i0 + 1, n_in, dtype=jnp.float32) * frac[:, None]
    return lo + hi


def init_up2_params(key, in_channels, out_channels, dtype=jnp.float32):
    """Parameters in PyTorch layout: conv weights (Cout, Cin, 3, 3); BatchNorm as
    gamma/beta/running_mean/running_var (eval mode)."""
    mid = in_channels // 2
    k1, k2, k3, k4, k5, k6 = jax.random.split(key, 6)

    def bn(kg, kb, c):
        return {"gamma": 1.0 + 0.1 * jax.random.normal(kg, (c,), dtype),
                "beta": 0.1 * jax.random.normal(kb, (c,), dtype),
                "mean": jnp.zeros((c,), dtype),
                "var": jnp.ones((c,), dtype)}

    return {
        "w1": 0.1 * jax.random.normal(k1, (mid, in_channels, 3, 3), dtype),
        "bn1": bn(k3, k4, mid),
        "w2": 0.1 * jax.random.normal(k2, (out_channels, mid, 3, 3), dtype),
        "bn2": bn(k5, k6, out_channels),
    }


def up2_forward(params, x1_nchw, x2_nchw, eps=_BN_EPS):
    """Up_2.forward (bilinear path): NCHW in, NCHW out."""
    N, C1, H1, W1 = x1_nchw.shape
    N2, C2, H2, W2 = x2_nchw.shape
    assert N == N2

    w1, w2 = params["w1"], params["w2"]
    mid, Cin = w1.shape[0], w1.shape[1]
    Cout = w2.shape[0]
    assert Cin == C1 + C2 and w2.shape[1] == mid

    # bilinear 2x upsample + F.pad folded into one (H2*W2, H1*W1) matrix
    dy, dx = H2 - 2 * H1, W2 - 2 * W1
    Ar = jnp.pad(_interp_matrix_1d(H1, 2 * H1), ((dy // 2, dy - dy // 2), (0, 0)))
    Ac = jnp.pad(_interp_matrix_1d(W1, 2 * W1), ((dx // 2, dx - dx // 2), (0, 0)))
    bt = jnp.kron(Ar, Ac)                                            # (H2*W2, H1*W1)

    # repack conv weights for im2col; fold BatchNorm (eval mode) into scale/bias
    w1m = jnp.transpose(w1, (2, 3, 1, 0)).reshape(9 * Cin, mid)      # (9*Cin, mid)
    w2m = jnp.transpose(w2, (0, 2, 3, 1)).reshape(Cout, 9 * mid)     # (Cout, 9*mid)

    def fold(bn, shape):
        scale = bn["gamma"] / jnp.sqrt(bn["var"] + eps)
        bias = bn["beta"] - bn["mean"] * scale
        return scale.reshape(shape), bias.reshape(shape)

    s1, b1 = fold(params["bn1"], (1, mid))
    s2, b2 = fold(params["bn2"], (Cout, 1))

    # cheap layout plumbing: x1 stays NCHW (spatial flattened, free reshape);
    # x2 goes channels-last (the only wrapper-side relayout, ~KBs).
    x1_flat = x1_nchw.reshape(N, C1, H1 * W1)
    x2_nhwc = jnp.transpose(x2_nchw, (0, 2, 3, 1))

    kernel = functools.partial(_up2_fused_kernel, C1=C1, C2=C2, H=H2, W=W2)

    out_flat = pl.pallas_call(
        kernel,
        out_shape=jax.ShapeDtypeStruct((N, Cout, H2 * W2), x2_nchw.dtype),
        grid=(N,),
        in_specs=[
            pl.BlockSpec((1, C1, H1 * W1), lambda b: (b, 0, 0)),
            pl.BlockSpec((1, H2, W2, C2), lambda b: (b, 0, 0, 0)),
            pl.BlockSpec((H2 * W2, H1 * W1), lambda b: (0, 0)),
            pl.BlockSpec((9 * Cin, mid), lambda b: (0, 0)),
            pl.BlockSpec((1, mid), lambda b: (0, 0)),
            pl.BlockSpec((1, mid), lambda b: (0, 0)),
            pl.BlockSpec((Cout, 9 * mid), lambda b: (0, 0)),
            pl.BlockSpec((Cout, 1), lambda b: (0, 0)),
            pl.BlockSpec((Cout, 1), lambda b: (0, 0)),
        ],
        out_specs=pl.BlockSpec((1, Cout, H2 * W2), lambda b: (b, 0, 0)),
        scratch_shapes=[
            pltpu.VMEM((H2 + 2, W2 + 2, Cin), jnp.float32),
            pltpu.VMEM((H2 + 2, W2 + 2, mid), jnp.float32),
        ],
        compiler_params=pltpu.CompilerParams(
            dimension_semantics=("parallel",),
            vmem_limit_bytes=32 * 1024 * 1024,
        ),
    )(x1_flat, x2_nhwc, bt, w1m, s1, b1, w2m, s2, b2)

    # output was stored channel-first -> only a free contiguous reshape to NCHW
    return out_flat.reshape(N, Cout, H2, W2)


# ----------------------------------------------------------------------------
# Pure-JAX reference (NCHW), mirroring the PyTorch module, for self-check
# ----------------------------------------------------------------------------
def _reference_forward(params, x1, x2, eps=_BN_EPS):
    def up2x(x):
        _, _, H, W = x.shape

        def coords(n_in, n_out):
            s = jnp.arange(n_out, dtype=jnp.float32) * (n_in - 1) / (n_out - 1)
            i0 = jnp.clip(jnp.floor(s).astype(jnp.int32), 0, n_in - 2)
            return i0, i0 + 1, s - i0.astype(jnp.float32)

        y0, y1, wy = coords(H, 2 * H)
        x0, x1i, wx = coords(W, 2 * W)
        rows = (x[:, :, y0, :] * (1.0 - wy)[None, None, :, None]
                + x[:, :, y1, :] * wy[None, None, :, None])
        return rows[:, :, :, x0] * (1.0 - wx) + rows[:, :, :, x1i] * wx

    def conv_bn_relu(x, w, bn):
        y = jax.lax.conv_general_dilated(
            x, w, window_strides=(1, 1), padding=((1, 1), (1, 1)),
            dimension_numbers=("NCHW", "OIHW", "NCHW"))
        scale = bn["gamma"] / jnp.sqrt(bn["var"] + eps)
        bias = bn["beta"] - bn["mean"] * scale
        return jnp.maximum(
            y * scale[None, :, None, None] + bias[None, :, None, None], 0.0)

    u = up2x(x1)
    dy, dx = x2.shape[2] - u.shape[2], x2.shape[3] - u.shape[3]
    u = jnp.pad(u, ((0, 0), (0, 0),
                    (dy // 2, dy - dy // 2), (dx // 2, dx - dx // 2)))
    x = jnp.concatenate([x2, u], axis=1)
    x = conv_bn_relu(x, params["w1"], params["bn1"])
    x = conv_bn_relu(x, params["w2"], params["bn2"])
    return x


if __name__ == "__main__":
    # Up_2(in_channels=8, out_channels=4): x2 has 4 channels, x1 has 4 channels
    # at half the spatial resolution (standard UNet decoder shapes).
    in_channels, out_channels = 8, 4
    N, C_half, H1, W1 = 2, in_channels // 2, 8, 8
    H2, W2 = 2 * H1, 2 * W1

    key = jax.random.PRNGKey(0)
    kx1, kx2, kp = jax.random.split(key, 3)
    x1 = jax.random.normal(kx1, (N, C_half, H1, W1), jnp.float32)    # NCHW
    x2 = jax.random.normal(kx2, (N, C_half, H2, W2), jnp.float32)    # NCHW
    params = init_up2_params(kp, in_channels, out_channels)

    out = jax.jit(up2_forward)(params, x1, x2)
    jax.block_until_ready(out)
    assert out.shape == (N, out_channels, H2, W2), out.shape

    ref = _reference_forward(params, x1, x2)
    assert jnp.allclose(out, ref, rtol=5e-2, atol=5e-2), \
        float(jnp.max(jnp.abs(out - ref)))

    print("KERNEL_OK")
</pallas_src>

<mosaic_0001>
module attributes {stable_mosaic.version = 11 : i64} {
  func.func @_up2_fused_kernel(%arg0: i32, %arg1: memref<1x4x64xf32, #tpu.memory_space<vmem>>, %arg2: memref<1x16x16x4xf32, #tpu.memory_space<vmem>>, %arg3: memref<256x64xf32, #tpu.memory_space<vmem>>, %arg4: memref<72x4xf32, #tpu.memory_space<vmem>>, %arg5: memref<1x4xf32, #tpu.memory_space<vmem>>, %arg6: memref<1x4xf32, #tpu.memory_space<vmem>>, %arg7: memref<4x36xf32, #tpu.memory_space<vmem>>, %arg8: memref<4x1xf32, #tpu.memory_space<vmem>>, %arg9: memref<4x1xf32, #tpu.memory_space<vmem>>, %arg10: memref<1x4x256xf32, #tpu.memory_space<vmem>>, %arg11: memref<18x18x8xf32, #tpu.memory_space<vmem>>, %arg12: memref<18x18x4xf32, #tpu.memory_space<vmem>>) attributes {dimension_semantics = [#tpu.dimension_semantics<parallel>], iteration_bounds = array<i64: 2>, scalar_prefetch = 0 : i64, scratch_operands = 2 : i64, tpu.core_type = #tpu.core_type<tc>, window_params = [{transform_indices = @transform_0, window_bounds = array<i64: 1, 4, 64>}, {transform_indices = @transform_1, window_bounds = array<i64: 1, 16, 16, 4>}, {pipeline_mode = #tpu.pipeline_mode<synchronous>, transform_indices = @transform_2, window_bounds = array<i64: 256, 64>}, {pipeline_mode = #tpu.pipeline_mode<synchronous>, transform_indices = @transform_3, window_bounds = array<i64: 72, 4>}, {pipeline_mode = #tpu.pipeline_mode<synchronous>, transform_indices = @transform_4, window_bounds = array<i64: 1, 4>}, {pipeline_mode = #tpu.pipeline_mode<synchronous>, transform_indices = @transform_5, window_bounds = array<i64: 1, 4>}, {pipeline_mode = #tpu.pipeline_mode<synchronous>, transform_indices = @transform_6, window_bounds = array<i64: 4, 36>}, {pipeline_mode = #tpu.pipeline_mode<synchronous>, transform_indices = @transform_7, window_bounds = array<i64: 4, 1>}, {pipeline_mode = #tpu.pipeline_mode<synchronous>, transform_indices = @transform_8, window_bounds = array<i64: 4, 1>}, {transform_indices = @transform_9, window_bounds = array<i64: 1, 4, 256>}]} {
    %c0 = arith.constant 0 : index
    %c0_0 = arith.constant 0 : index
    %0 = vector.load %arg3[%c0, %c0_0] : memref<256x64xf32, #tpu.memory_space<vmem>>, vector<256x64xf32>
    %c0_1 = arith.constant 0 : index
    %c0_2 = arith.constant 0 : index
    %c0_3 = arith.constant 0 : index
    %1 = vector.load %arg1[%c0_1, %c0_2, %c0_3] : memref<1x4x64xf32, #tpu.memory_space<vmem>>, vector<1x4x64xf32>
    %2 = vector.shape_cast %1 : vector<1x4x64xf32> to vector<4x64xf32>
    %cst = arith.constant dense<0.000000e+00> : vector<256x4xf32>
    %3 = tpu.matmul %0, %2, %cst {dimension_numbers = #tpu.dot_dimension_numbers<[1], [1], [0], [0], [0, 0, 1, 0], [], []>} : vector<256x64xf32>, vector<4x64xf32>, vector<256x4xf32> -> vector<256x4xf32>
    %cst_4 = arith.constant 0.000000e+00 : f32
    %4 = vector.broadcast %cst_4 : f32 to vector<18x18x8xf32>
    %c0_5 = arith.constant 0 : index
    %c0_6 = arith.constant 0 : index
    %c0_7 = arith.constant 0 : index
    %5 = vector.load %arg11[%c0_5, %c0_6, %c0_7] : memref<18x18x8xf32, #tpu.memory_space<vmem>>, vector<18x18x8xf32>
    tpu.vector_store %arg11[%c0_5, %c0_6, %c0_7], %4 {strides = array<i32>} : memref<18x18x8xf32, #tpu.memory_space<vmem>>, vector<18x18x8xf32>,
    %c0_8 = arith.constant 0 : index
    %c0_9 = arith.constant 0 : index
    %c0_10 = arith.constant 0 : index
    %c0_11 = arith.constant 0 : index
    %6 = vector.load %arg2[%c0_8, %c0_9, %c0_10, %c0_11] : memref<1x16x16x4xf32, #tpu.memory_space<vmem>>, vector<1x16x16x4xf32>
    %7 = vector.shape_cast %6 : vector<1x16x16x4xf32> to vector<16x16x4xf32>
    %8 = vector.shape_cast %3 : vector<256x4xf32> to vector<16x16x4xf32>
    %9 = tpu.concatenate %7, %8 in 2 : vector<16x16x4xf32>, vector<16x16x4xf32> -> vector<16x16x8xf32>
    %c1 = arith.constant 1 : index
    %c1_12 = arith.constant 1 : index
    %c0_13 = arith.constant 0 : index
    %10 = vector.load %arg11[%c1, %c1_12, %c0_13] : memref<18x18x8xf32, #tpu.memory_space<vmem>>, vector<16x16x8xf32>
    tpu.vector_store %arg11[%c1, %c1_12, %c0_13], %9 {strides = array<i32>} : memref<18x18x8xf32, #tpu.memory_space<vmem>>, vector<16x16x8xf32>,
    %c0_14 = arith.constant 0 : index
    %c0_15 = arith.constant 0 : index
    %c0_16 = arith.constant 0 : index
    %11 = vector.load %arg11[%c0_14, %c0_15, %c0_16] : memref<18x18x8xf32, #tpu.memory_space<vmem>>, vector<16x16x8xf32>
    %12 = vector.shape_cast %11 : vector<16x16x8xf32> to vector<256x8xf32>
    %c0_17 = arith.constant 0 : index
    %c1_18 = arith.constant 1 : index
    %c0_19 = arith.constant 0 : index
    %13 = vector.load %arg11[%c0_17, %c1_18, %c0_19] : memref<18x18x8xf32, #tpu.memory_space<vmem>>, vector<16x16x8xf32>
    %14 = vector.shape_cast %13 : vector<16x16x8xf32> to vector<256x8xf32>
    %c0_20 = arith.constant 0 : index
    %c2 = arith.constant 2 : index
    %c0_21 = arith.constant 0 : index
    %15 = vector.load %arg11[%c0_20, %c2, %c0_21] : memref<18x18x8xf32, #tpu.memory_space<vmem>>, vector<16x16x8xf32>
    %16 = vector.shape_cast %15 : vector<16x16x8xf32> to vector<256x8xf32>
    %c1_22 = arith.constant 1 : index
    %c0_23 = arith.constant 0 : index
    %c0_24 = arith.constant 0 : index
    %17 = vector.load %arg11[%c1_22, %c0_23, %c0_24] : memref<18x18x8xf32, #tpu.memory_space<vmem>>, vector<16x16x8xf32>
    %18 = vector.shape_cast %17 : vector<16x16x8xf32> to vector<256x8xf32>
    %c1_25 = arith.constant 1 : index
    %c1_26 = arith.constant 1 : index
    %c0_27 = arith.constant 0 : index
    %19 = vector.load %arg11[%c1_25, %c1_26, %c0_27] : memref<18x18x8xf32, #tpu.memory_space<vmem>>, vector<16x16x8xf32>
    %20 = vector.shape_cast %19 : vector<16x16x8xf32> to vector<256x8xf32>
    %c1_28 = arith.constant 1 : index
    %c2_29 = arith.constant 2 : index
    %c0_30 = arith.constant 0 : index
    %21 = vector.load %arg11[%c1_28, %c2_29, %c0_30] : memref<18x18x8xf32, #tpu.memory_space<vmem>>, vector<16x16x8xf32>
    %22 = vector.shape_cast %21 : vector<16x16x8xf32> to vector<256x8xf32>
    %c2_31 = arith.constant 2 : index
    %c0_32 = arith.constant 0 : index
    %c0_33 = arith.constant 0 : index
    %23 = vector.load %arg11[%c2_31, %c0_32, %c0_33] : memref<18x18x8xf32, #tpu.memory_space<vmem>>, vector<16x16x8xf32>
    %24 = vector.shape_cast %23 : vector<16x16x8xf32> to vector<256x8xf32>
    %c2_34 = arith.constant 2 : index
    %c1_35 = arith.constant 1 : index
    %c0_36 = arith.constant 0 : index
    %25 = vector.load %arg11[%c2_34, %c1_35, %c0_36] : memref<18x18x8xf32, #tpu.memory_space<vmem>>, vector<16x16x8xf32>
    %26 = vector.shape_cast %25 : vector<16x16x8xf32> to vector<256x8xf32>
    %c2_37 = arith.constant 2 : index
    %c2_38 = arith.constant 2 : index
    %c0_39 = arith.constant 0 : index
    %27 = vector.load %arg11[%c2_37, %c2_38, %c0_39] : memref<18x18x8xf32, #tpu.memory_space<vmem>>, vector<16x16x8xf32>
    %28 = vector.shape_cast %27 : vector<16x16x8xf32> to vector<256x8xf32>
    %29 = tpu.concatenate %12, %14, %16, %18, %20, %22, %24, %26, %28 in 1 : vector<256x8xf32>, vector<256x8xf32>, vector<256x8xf32>, vector<256x8xf32>, vector<256x8xf32>, vector<256x8xf32>, vector<256x8xf32>, vector<256x8xf32>, vector<256x8xf32> -> vector<256x72xf32>
    %c0_40 = arith.constant 0 : index
    %c0_41 = arith.constant 0 : index
    %30 = vector.load %arg4[%c0_40, %c0_41] : memref<72x4xf32, #tpu.memory_space<vmem>>, vector<72x4xf32>
    %cst_42 = arith.constant dense<0.000000e+00> : vector<256x4xf32>
    %31 = tpu.matmul %29, %30, %cst_42 {dimension_numbers = #tpu.dot_dimension_numbers<[1], [0], [0], [1], [0, 0, 1, 1], [], []>} : vector<256x72xf32>, vector<72x4xf32>, vector<256x4xf32> -> vector<256x4xf32>
    %c0_43 = arith.constant 0 : index
    %c0_44 = arith.constant 0 : index
    %32 = vector.load %arg5[%c0_43, %c0_44] : memref<1x4xf32, #tpu.memory_space<vmem>>, vector<1x4xf32>
    %33 = vector.broadcast %32 : vector<1x4xf32> to vector<256x4xf32>
    %34 = arith.mulf %31, %33 : vector<256x4xf32>
    %c0_45 = arith.constant 0 : index
    %c0_46 = arith.constant 0 : index
    %35 = vector.load %arg6[%c0_45, %c0_46] : memref<1x4xf32, #tpu.memory_space<vmem>>, vector<1x4xf32>
    %36 = vector.broadcast %35 : vector<1x4xf32> to vector<256x4xf32>
    %37 = arith.addf %34, %36 : vector<256x4xf32>
    %cst_47 = arith.constant 0.000000e+00 : f32
    %38 = vector.broadcast %cst_47 : f32 to vector<256x4xf32>
    %39 = arith.maximumf %37, %38 : vector<256x4xf32>
    %cst_48 = arith.constant 0.000000e+00 : f32
    %40 = vector.broadcast %cst_48 : f32 to vector<18x18x4xf32>
    %c0_49 = arith.constant 0 : index
    %c0_50 = arith.constant 0 : index
    %c0_51 = arith.constant 0 : index
    %41 = vector.load %arg12[%c0_49, %c0_50, %c0_51] : memref<18x18x4xf32, #tpu.memory_space<vmem>>, vector<18x18x4xf32>
    tpu.vector_store %arg12[%c0_49, %c0_50, %c0_51], %40 {strides = array<i32>} : memref<18x18x4xf32, #tpu.memory_space<vmem>>, vector<18x18x4xf32>,
    %42 = vector.shape_cast %39 : vector<256x4xf32> to vector<16x16x4xf32>
    %c1_52 = arith.constant 1 : index
    %c1_53 = arith.constant 1 : index
    %c0_54 = arith.constant 0 : index
    %43 = vector.load %arg12[%c1_52, %c1_53, %c0_54] : memref<18x18x4xf32, #tpu.memory_space<vmem>>, vector<16x16x4xf32>
    tpu.vector_store %arg12[%c1_52, %c1_53, %c0_54], %42 {strides = array<i32>} : memref<18x18x4xf32, #tpu.memory_space<vmem>>, vector<16x16x4xf32>,
    %c0_55 = arith.constant 0 : index
    %c0_56 = arith.constant 0 : index
    %c0_57 = arith.constant 0 : index
    %44 = vector.load %arg12[%c0_55, %c0_56, %c0_57] : memref<18x18x4xf32, #tpu.memory_space<vmem>>, vector<16x16x4xf32>
    %45 = vector.shape_cast %44 : vector<16x16x4xf32> to vector<256x4xf32>
    %c0_58 = arith.constant 0 : index
    %c1_59 = arith.constant 1 : index
    %c0_60 = arith.constant 0 : index
    %46 = vector.load %arg12[%c0_58, %c1_59, %c0_60] : memref<18x18x4xf32, #tpu.memory_space<vmem>>, vector<16x16x4xf32>
    %47 = vector.shape_cast %46 : vector<16x16x4xf32> to vector<256x4xf32>
    %c0_61 = arith.constant 0 : index
    %c2_62 = arith.constant 2 : index
    %c0_63 = arith.constant 0 : index
    %48 = vector.load %arg12[%c0_61, %c2_62, %c0_63] : memref<18x18x4xf32, #tpu.memory_space<vmem>>, vector<16x16x4xf32>
    %49 = vector.shape_cast %48 : vector<16x16x4xf32> to vector<256x4xf32>
    %c1_64 = arith.constant 1 : index
    %c0_65 = arith.constant 0 : index
    %c0_66 = arith.constant 0 : index
    %50 = vector.load %arg12[%c1_64, %c0_65, %c0_66] : memref<18x18x4xf32, #tpu.memory_space<vmem>>, vector<16x16x4xf32>
    %51 = vector.shape_cast %50 : vector<16x16x4xf32> to vector<256x4xf32>
    %c1_67 = arith.constant 1 : index
    %c1_68 = arith.constant 1 : index
    %c0_69 = arith.constant 0 : index
    %52 = vector.load %arg12[%c1_67, %c1_68, %c0_69] : memref<18x18x4xf32, #tpu.memory_space<vmem>>, vector<16x16x4xf32>
    %53 = vector.shape_cast %52 : vector<16x16x4xf32> to vector<256x4xf32>
    %c1_70 = arith.constant 1 : index
    %c2_71 = arith.constant 2 : index
    %c0_72 = arith.constant 0 : index
    %54 = vector.load %arg12[%c1_70, %c2_71, %c0_72] : memref<18x18x4xf32, #tpu.memory_space<vmem>>, vector<16x16x4xf32>
    %55 = vector.shape_cast %54 : vector<16x16x4xf32> to vector<256x4xf32>
    %c2_73 = arith.constant 2 : index
    %c0_74 = arith.constant 0 : index
    %c0_75 = arith.constant 0 : index
    %56 = vector.load %arg12[%c2_73, %c0_74, %c0_75] : memref<18x18x4xf32, #tpu.memory_space<vmem>>, vector<16x16x4xf32>
    %57 = vector.shape_cast %56 : vector<16x16x4xf32> to vector<256x4xf32>
    %c2_76 = arith.constant 2 : index
    %c1_77 = arith.constant 1 : index
    %c0_78 = arith.constant 0 : index
    %58 = vector.load %arg12[%c2_76, %c1_77, %c0_78] : memref<18x18x4xf32, #tpu.memory_space<vmem>>, vector<16x16x4xf32>
    %59 = vector.shape_cast %58 : vector<16x16x4xf32> to vector<256x4xf32>
    %c2_79 = arith.constant 2 : index
    %c2_80 = arith.constant 2 : index
    %c0_81 = arith.constant 0 : index
    %60 = vector.load %arg12[%c2_79, %c2_80, %c0_81] : memref<18x18x4xf32, #tpu.memory_space<vmem>>, vector<16x16x4xf32>
    %61 = vector.shape_cast %60 : vector<16x16x4xf32> to vector<256x4xf32>
    %62 = tpu.concatenate %45, %47, %49, %51, %53, %55, %57, %59, %61 in 1 : vector<256x4xf32>, vector<256x4xf32>, vector<256x4xf32>, vector<256x4xf32>, vector<256x4xf32>, vector<256x4xf32>, vector<256x4xf32>, vector<256x4xf32>, vector<256x4xf32> -> vector<256x36xf32>
    %c0_82 = arith.constant 0 : index
    %c0_83 = arith.constant 0 : index
    %63 = vector.load %arg7[%c0_82, %c0_83] : memref<4x36xf32, #tpu.memory_space<vmem>>, vector<4x36xf32>
    %cst_84 = arith.constant dense<0.000000e+00> : vector<4x256xf32>
    %64 = tpu.matmul %63, %62, %cst_84 {dimension_numbers = #tpu.dot_dimension_numbers<[1], [1], [0], [0], [0, 0, 1, 0], [], []>} : vector<4x36xf32>, vector<256x36xf32>, vector<4x256xf32> -> vector<4x256xf32>
    %c0_85 = arith.constant 0 : index
    %c0_86 = arith.constant 0 : index
    %65 = vector.load %arg8[%c0_85, %c0_86] : memref<4x1xf32, #tpu.memory_space<vmem>>, vector<4x1xf32>
    %66 = vector.broadcast %65 : vector<4x1xf32> to vector<4x256xf32>
    %67 = arith.mulf %64, %66 : vector<4x256xf32>
    %c0_87 = arith.constant 0 : index
    %c0_88 = arith.constant 0 : index
    %68 = vector.load %arg9[%c0_87, %c0_88] : memref<4x1xf32, #tpu.memory_space<vmem>>, vector<4x1xf32>
    %69 = vector.broadcast %68 : vector<4x1xf32> to vector<4x256xf32>
    %70 = arith.addf %67, %69 : vector<4x256xf32>
    %cst_89 = arith.constant 0.000000e+00 : f32
    %71 = vector.broadcast %cst_89 : f32 to vector<4x256xf32>
    %72 = arith.maximumf %70, %71 : vector<4x256xf32>
    %c0_90 = arith.constant 0 : index
    %c0_91 = arith.constant 0 : index
    %c0_92 = arith.constant 0 : index
    %73 = vector.load %arg10[%c0_90, %c0_91, %c0_92] : memref<1x4x256xf32, #tpu.memory_space<vmem>>, vector<1x4x256xf32>
    %74 = vector.shape_cast %73 : vector<1x4x256xf32> to vector<4x256xf32>
    %75 = vector.shape_cast %72 : vector<4x256xf32> to vector<1x4x256xf32>
    tpu.vector_store %arg10[%c0_90, %c0_91, %c0_92], %75 {strides = array<i32>} : memref<1x4x256xf32, #tpu.memory_space<vmem>>, vector<1x4x256xf32>,
    return
  }
  func.func @transform_0(%arg0: i32) -> (i32, i32, i32) {
    %c0_i32 = arith.constant 0 : i32
    %c0_i32_0 = arith.constant 0 : i32
    %c0_i32_1 = arith.constant 0 : i32
    return %arg0, %c0_i32, %c0_i32_0 : i32, i32, i32
  }
  func.func @transform_1(%arg0: i32) -> (i32, i32, i32, i32) {
    %c0_i32 = arith.constant 0 : i32
    %c0_i32_0 = arith.constant 0 : i32
    %c0_i32_1 = arith.constant 0 : i32
    %c0_i32_2 = arith.constant 0 : i32
    return %arg0, %c0_i32, %c0_i32_0, %c0_i32_1 : i32, i32, i32, i32
  }
  func.func @transform_2(%arg0: i32) -> (i32, i32) {
    %c0_i32 = arith.constant 0 : i32
    %c0_i32_0 = arith.constant 0 : i32
    %c0_i32_1 = arith.constant 0 : i32
    return %c0_i32, %c0_i32_0 : i32, i32
  }
  func.func @transform_3(%arg0: i32) -> (i32, i32) {
    %c0_i32 = arith.constant 0 : i32
    %c0_i32_0 = arith.constant 0 : i32
    %c0_i32_1 = arith.constant 0 : i32
    return %c0_i32, %c0_i32_0 : i32, i32
  }
  func.func @transform_4(%arg0: i32) -> (i32, i32) {
    %c0_i32 = arith.constant 0 : i32
    %c0_i32_0 = arith.constant 0 : i32
    %c0_i32_1 = arith.constant 0 : i32
    return %c0_i32, %c0_i32_0 : i32, i32
  }
  func.func @transform_5(%arg0: i32) -> (i32, i32) {
    %c0_i32 = arith.constant 0 : i32
    %c0_i32_0 = arith.constant 0 : i32
    %c0_i32_1 = arith.constant 0 : i32
    return %c0_i32, %c0_i32_0 : i32, i32
  }
  func.func @transform_6(%arg0: i32) -> (i32, i32) {
    %c0_i32 = arith.constant 0 : i32
    %c0_i32_0 = arith.constant 0 : i32
    %c0_i32_1 = arith.constant 0 : i32
    return %c0_i32, %c0_i32_0 : i32, i32
  }
  func.func @transform_7(%arg0: i32) -> (i32, i32) {
    %c0_i32 = arith.constant 0 : i32
    %c0_i32_0 = arith.constant 0 : i32
    %c0_i32_1 = arith.constant 0 : i32
    return %c0_i32, %c0_i32_0 : i32, i32
  }
  func.func @transform_8(%arg0: i32) -> (i32, i32) {
    %c0_i32 = arith.constant 0 : i32
    %c0_i32_0 = arith.constant 0 : i32
    %c0_i32_1 = arith.constant 0 : i32
    return %c0_i32, %c0_i32_0 : i32, i32
  }
  func.func @transform_9(%arg0: i32) -> (i32, i32, i32) {
    %c0_i32 = arith.constant 0 : i32
    %c0_i32_0 = arith.constant 0 : i32
    %c0_i32_1 = arith.constant 0 : i32
    return %arg0, %c0_i32, %c0_i32_0 : i32, i32, i32
  }
}

</mosaic_0001>

<llo_original>
// kernel: up2_forward.1
$region0: #{up2_forward.1}
  #allocation0 [shape = 'u32[]', space=smem, size = 0x4, offset = 0x4, fixed_abs, tag = 'smem constant byte address 0x4 - core index']
  #allocation1 [shape = 'u32[72,128]{1,0:T(1,128)}', space=vmem, size = 0x9000, scoped, tag = 'internal scratch']
  #allocation2 [shape = 'f32[18,18,8]{2,1,0:T(8,128)}', space=vmem, size = 0x36000, scoped, tag = 'scratch operand']
  #allocation3 [shape = 'f32[18,18,4]{2,1,0:T(8,128)}', space=vmem, size = 0x36000, scoped, tag = 'scratch operand']
  %s0 = inlined_call_operand.vmem [shape: f32[2,4,64], index: 0, kind: input, shape index: {}]
  %s1 = inlined_call_operand.vmem [shape: f32[2,16,16,4], index: 1, kind: input, shape index: {}]
  %s2 = inlined_call_operand.vmem [shape: f32[256,64], index: 2, kind: input, shape index: {}]
  %s3 = inlined_call_operand.vmem [shape: f32[72,4], index: 3, kind: input, shape index: {}]
  %s4 = inlined_call_operand.vmem [shape: f32[1,4], index: 4, kind: input, shape index: {}]
  %s5 = inlined_call_operand.vmem [shape: f32[1,4], index: 5, kind: input, shape index: {}]
  %s6 = inlined_call_operand.vmem [shape: f32[4,36], index: 6, kind: input, shape index: {}]
  %s7 = inlined_call_operand.vmem [shape: f32[4,1], index: 7, kind: input, shape index: {}]
  %s8 = inlined_call_operand.vmem [shape: f32[4,1], index: 8, kind: input, shape index: {}]
  %s9 = inlined_call_operand.vmem [shape: f32[2,4,256], index: 9, kind: output, shape index: {}]
  %s10 = sld [smem:[#allocation0]]
  $region69: #{up2_forward.1} parent=0
    _
  %s12 = ssub.s32 1, %s10
  %s13 = scalar_select 0, %s12, %s10
  loop: start=0, step=1, limit=4
  $region2: #{up2_forward.1} parent=0 // loop_pre_header
    _
  $region3: #{up2_forward.1} parent=0 // loop_header
    %s15 = sphi 0, %s19
    %p16 = scmp.ge.s32.totalorder %s15, 4
    %s25 = sphi 0, %s27
    %s28 = sphi 0, %s25
    %s29 = sphi 0, %s28
    %s45 = sphi 0, %s29
    %s51 = sphi 0, %s53
    %s54 = sphi 0, %s51
    %s55 = sphi 0, %s54
    %s71 = sphi 0, %s55
    %s75 = sphi 0, %s75
    %s77 = sphi 0, %s75
    %s78 = sphi 0, %s77
    %s92 = sphi 0, %s78
    %s96 = sphi 0, %s96
    %s98 = sphi 0, %s96
    %s99 = sphi 0, %s98
    %s113 = sphi 0, %s99
    %s117 = sphi 0, %s117
    %s119 = sphi 0, %s117
    %s120 = sphi 0, %s119
    %s134 = sphi 0, %s120
    %s138 = sphi 0, %s138
    %s140 = sphi 0, %s138
    %s141 = sphi 0, %s140
    %s155 = sphi 0, %s141
    %s159 = sphi 0, %s159
    %s161 = sphi 0, %s159
    %s162 = sphi 0, %s161
    %s176 = sphi 0, %s162
    %s180 = sphi 0, %s180
    %s182 = sphi 0, %s180
    %s183 = sphi 0, %s182
    %s197 = sphi 0, %s183
    %s201 = sphi 0, %s201
    %s203 = sphi 0, %s201
    %s204 = sphi 0, %s203
    %s218 = sphi 0, %s204
    %s224 = sphi 0, %s226
    %s227 = sphi 0, %s224
    %s228 = sphi 0, %s227
    %s244 = sphi 0, %s228
  $region4: #{up2_forward.1} parent=0 // loop_header_branch
    %18 = sbr.rel (%p16) target = $region8
  $region5: #{up2_forward.1} parent=0 // loop_body
    %s20 = ssub.s32 %s15, 1
    %s21 = ssub.s32 %s15, 2
    %s22 = sadd.s32 %s15, 1
    %s23 = ssub.s32 %s15, %s22
    %p24 = scmp.eq.s32.totalorder %s23, 0
    %s26 = sadd.s32 %s25, 1
    %s27 = scalar_select %p24, %s25, %s26
    %p30 = pneg %p24
    %p31 = scmp.eq.s32.totalorder %s15, 1
    %p32 = por %p30, %p31
    %p33 = scmp.ne.s32.totalorder %s25, %s28
    %p34 = scmp.eq.s32.totalorder %s15, 0
    %p35 = por %p33, %p34
    %p36 = scmp.ne.s32.totalorder %s25, %s28
    %p37 = scmp.eq.s32.totalorder %s20, 1
    %p38 = por %p36, %p37
    %p39 = scmp.ne.s32.totalorder %s28, %s29
    %p40 = scmp.eq.s32.totalorder %s20, 0
    %p41 = por %p39, %p40
    %p42 = scmp.ne.s32.totalorder %s28, %s29
    %p43 = scmp.eq.s32.totalorder %s21, 1
    %p44 = por %p42, %p43
    %p46 = scmp.ne.s32.totalorder %s29, %s45
    %p47 = scmp.eq.s32.totalorder %s21, 0
    %p48 = por %p46, %p47
    %s49 = ssub.s32 %s15, %s22
    %p50 = scmp.eq.s32.totalorder %s49, 0
    %s52 = sadd.s32 %s51, 1
    %s53 = scalar_select %p50, %s51, %s52
    %p56 = pneg %p50
    %p57 = scmp.eq.s32.totalorder %s15, 1
    %p58 = por %p56, %p57
    %p59 = scmp.ne.s32.totalorder %s51, %s54
    %p60 = scmp.eq.s32.totalorder %s15, 0
    %p61 = por %p59, %p60
    %p62 = scmp.ne.s32.totalorder %s51, %s54
    %p63 = scmp.eq.s32.totalorder %s20, 1
    %p64 = por %p62, %p63
    %p65 = scmp.ne.s32.totalorder %s54, %s55
    %p66 = scmp.eq.s32.totalorder %s20, 0
    %p67 = por %p65, %p66
    %p68 = scmp.ne.s32.totalorder %s54, %s55
    %p69 = scmp.eq.s32.totalorder %s21, 1
    %p70 = por %p68, %p69
    %p72 = scmp.ne.s32.totalorder %s55, %s71
    %p73 = scmp.eq.s32.totalorder %s21, 0
    %p74 = por %p72, %p73
    %s76 = sadd.s32 %s75, 1
    %p79 = scmp.eq.s32.totalorder %s15, 1
    %p80 = scmp.ne.s32.totalorder %s75, %s77
    %p81 = scmp.eq.s32.totalorder %s15, 0
    %p82 = por %p80, %p81
    %p83 = scmp.ne.s32.totalorder %s75, %s77
    %p84 = scmp.eq.s32.totalorder %s20, 1
    %p85 = por %p83, %p84
    %p86 = scmp.ne.s32.totalorder %s77, %s78
    %p87 = scmp.eq.s32.totalorder %s20, 0
    %p88 = por %p86, %p87
    %p89 = scmp.ne.s32.totalorder %s77, %s78
    %p90 = scmp.eq.s32.totalorder %s21, 1
    %p91 = por %p89, %p90
    %p93 = scmp.ne.s32.totalorder %s78, %s92
    %p94 = scmp.eq.s32.totalorder %s21, 0
    %p95 = por %p93, %p94
    %s97 = sadd.s32 %s96, 1
    %p100 = scmp.eq.s32.totalorder %s15, 1
    %p101 = scmp.ne.s32.totalorder %s96, %s98
    %p102 = scmp.eq.s32.totalorder %s15, 0
    %p103 = por %p101, %p102
    %p104 = scmp.ne.s32.totalorder %s96, %s98
    %p105 = scmp.eq.s32.totalorder %s20, 1
    %p106 = por %p104, %p105
    %p107 = scmp.ne.s32.totalorder %s98, %s99
    %p108 = scmp.eq.s32.totalorder %s20, 0
    %p109 = por %p107, %p108
    %p110 = scmp.ne.s32.totalorder %s98, %s99
    %p111 = scmp.eq.s32.totalorder %s21, 1
    %p112 = por %p110, %p111
    %p114 = scmp.ne.s32.totalorder %s99, %s113
    %p115 = scmp.eq.s32.totalorder %s21, 0
    %p116 = por %p114, %p115
    %s118 = sadd.s32 %s117, 1
    %p121 = scmp.eq.s32.totalorder %s15, 1
    %p122 = scmp.ne.s32.totalorder %s117, %s119
    %p123 = scmp.eq.s32.totalorder %s15, 0
    %p124 = por %p122, %p123
    %p125 = scmp.ne.s32.totalorder %s117, %s119
    %p126 = scmp.eq.s32.totalorder %s20, 1
    %p127 = por %p125, %p126
    %p128 = scmp.ne.s32.totalorder %s119, %s120
    %p129 = scmp.eq.s32.totalorder %s20, 0
    %p130 = por %p128, %p129
    %p131 = scmp.ne.s32.totalorder %s119, %s120
    %p132 = scmp.eq.s32.totalorder %s21, 1
    %p133 = por %p131, %p132
    %p135 = scmp.ne.s32.totalorder %s120, %s134
    %p136 = scmp.eq.s32.totalorder %s21, 0
    %p137 = por %p135, %p136
    %s139 = sadd.s32 %s138, 1
    %p142 = scmp.eq.s32.totalorder %s15, 1
    %p143 = scmp.ne.s32.totalorder %s138, %s140
    %p144 = scmp.eq.s32.totalorder %s15, 0
    %p145 = por %p143, %p144
    %p146 = scmp.ne.s32.totalorder %s138, %s140
    %p147 = scmp.eq.s32.totalorder %s20, 1
    %p148 = por %p146, %p147
    %p149 = scmp.ne.s32.totalorder %s140, %s141
    %p150 = scmp.eq.s32.totalorder %s20, 0
    %p151 = por %p149, %p150
    %p152 = scmp.ne.s32.totalorder %s140, %s141
    %p153 = scmp.eq.s32.totalorder %s21, 1
    %p154 = por %p152, %p153
    %p156 = scmp.ne.s32.totalorder %s141, %s155
    %p157 = scmp.eq.s32.totalorder %s21, 0
    %p158 = por %p156, %p157
    %s160 = sadd.s32 %s159, 1
    %p163 = scmp.eq.s32.totalorder %s15, 1
    %p164 = scmp.ne.s32.totalorder %s159, %s161
    %p165 = scmp.eq.s32.totalorder %s15, 0
    %p166 = por %p164, %p165
    %p167 = scmp.ne.s32.totalorder %s159, %s161
    %p168 = scmp.eq.s32.totalorder %s20, 1
    %p169 = por %p167, %p168
    %p170 = scmp.ne.s32.totalorder %s161, %s162
    %p171 = scmp.eq.s32.totalorder %s20, 0
    %p172 = por %p170, %p171
    %p173 = scmp.ne.s32.totalorder %s161, %s162
    %p174 = scmp.eq.s32.totalorder %s21, 1
    %p175 = por %p173, %p174
    %p177 = scmp.ne.s32.totalorder %s162, %s176
    %p178 = scmp.eq.s32.totalorder %s21, 0
    %p179 = por %p177, %p178
    %s181 = sadd.s32 %s180, 1
    %p184 = scmp.eq.s32.totalorder %s15, 1
    %p185 = scmp.ne.s32.totalorder %s180, %s182
    %p186 = scmp.eq.s32.totalorder %s15, 0
    %p187 = por %p185, %p186
    %p188 = scmp.ne.s32.totalorder %s180, %s182
    %p189 = scmp.eq.s32.totalorder %s20, 1
    %p190 = por %p188, %p189
    %p191 = scmp.ne.s32.totalorder %s182, %s183
    %p192 = scmp.eq.s32.totalorder %s20, 0
    %p193 = por %p191, %p192
    %p194 = scmp.ne.s32.totalorder %s182, %s183
    %p195 = scmp.eq.s32.totalorder %s21, 1
    %p196 = por %p194, %p195
    %p198 = scmp.ne.s32.totalorder %s183, %s197
    %p199 = scmp.eq.s32.totalorder %s21, 0
    %p200 = por %p198, %p199
    %s202 = sadd.s32 %s201, 1
    %p205 = scmp.eq.s32.totalorder %s15, 1
    %p206 = scmp.ne.s32.totalorder %s201, %s203
    %p207 = scmp.eq.s32.totalorder %s15, 0
    %p208 = por %p206, %p207
    %p209 = scmp.ne.s32.totalorder %s201, %s203
    %p210 = scmp.eq.s32.totalorder %s20, 1
    %p211 = por %p209, %p210
    %p212 = scmp.ne.s32.totalorder %s203, %s204
    %p213 = scmp.eq.s32.totalorder %s20, 0
    %p214 = por %p212, %p213
    %p215 = scmp.ne.s32.totalorder %s203, %s204
    %p216 = scmp.eq.s32.totalorder %s21, 1
    %p217 = por %p215, %p216
    %p219 = scmp.ne.s32.totalorder %s204, %s218
    %p220 = scmp.eq.s32.totalorder %s21, 0
    %p221 = por %p219, %p220
    %s222 = ssub.s32 %s15, %s22
    %p223 = scmp.eq.s32.totalorder %s222, 0
    %s225 = sadd.s32 %s224, 1
    %s226 = scalar_select %p223, %s224, %s225
    %p229 = pneg %p223
    %p230 = scmp.eq.s32.totalorder %s15, 1
    %p231 = por %p229, %p230
    %p232 = scmp.ne.s32.totalorder %s224, %s227
    %p233 = scmp.eq.s32.totalorder %s15, 0
    %p234 = por %p232, %p233
    %p235 = scmp.ne.s32.totalorder %s224, %s227
    %p236 = scmp.eq.s32.totalorder %s20, 1
    %p237 = por %p235, %p236
    %p238 = scmp.ne.s32.totalorder %s227, %s228
    %p239 = scmp.eq.s32.totalorder %s20, 0
    %p240 = por %p238, %p239
    %p241 = scmp.ne.s32.totalorder %s227, %s228
    %p242 = scmp.eq.s32.totalorder %s21, 1
    %p243 = por %p241, %p242
    %p245 = scmp.ne.s32.totalorder %s228, %s244
    %p246 = scmp.eq.s32.totalorder %s21, 0
    %p247 = por %p245, %p246
    %p248 = scmp.le.s32.totalorder 1, %s15
    %p249 = scmp.lt.s32.totalorder %s15, 3
    %p250 = pnand %p248, %p249
    %p251 = pneg %p250
    // Predicated region
    $region9: #{up2_forward.1} parent=5 // pred_check
      _
    $region10: #{up2_forward.1} parent=5 // pred_check_branch
      %253 = sbr.rel (%p250) target = $region12
    $region11: #{up2_forward.1} parent=5 // pred_region
      %s254 = ssub.s32 %s15, 1
      // Predicated region
      $region13: #{up2_forward.1} parent=11 // pred_check
        %p255 = pneg %p88
      $region14: #{up2_forward.1} parent=11 // pred_check_branch
        %257 = sbr.rel (%p255) target = $region16
      $region15: #{up2_forward.1} parent=11 // pred_region
        _
      $region16: #{up2_forward.1} parent=11 // pred_fallthru
        _
      // Predicated region
      $region17: #{up2_forward.1} parent=11 // pred_check
        %p258 = pneg %p109
      $region18: #{up2_forward.1} parent=11 // pred_check_branch
        %260 = sbr.rel (%p258) target = $region20
      $region19: #{up2_forward.1} parent=11 // pred_region
        _
      $region20: #{up2_forward.1} parent=11 // pred_fallthru
        _
      // Predicated region
      $region21: #{up2_forward.1} parent=11 // pred_check
        %p261 = pneg %p130
      $region22: #{up2_forward.1} parent=11 // pred_check_branch
        %263 = sbr.rel (%p261) target = $region24
      $region23: #{up2_forward.1} parent=11 // pred_region
        _
      $region24: #{up2_forward.1} parent=11 // pred_fallthru
        _
      // Predicated region
      $region25: #{up2_forward.1} parent=11 // pred_check
        %p264 = pneg %p151
      $region26: #{up2_forward.1} parent=11 // pred_check_branch
        %266 = sbr.rel (%p264) target = $region28
      $region27: #{up2_forward.1} parent=11 // pred_region
        _
      $region28: #{up2_forward.1} parent=11 // pred_fallthru
        _
      // Predicated region
      $region29: #{up2_forward.1} parent=11 // pred_check
        %p267 = pneg %p172
      $region30: #{up2_forward.1} parent=11 // pred_check_branch
        %269 = sbr.rel (%p267) target = $region32
      $region31: #{up2_forward.1} parent=11 // pred_region
        _
      $region32: #{up2_forward.1} parent=11 // pred_fallthru
        _
      // Predicated region
      $region33: #{up2_forward.1} parent=11 // pred_check
        %p270 = pneg %p193
      $region34: #{up2_forward.1} parent=11 // pred_check_branch
        %272 = sbr.rel (%p270) target = $region36
      $region35: #{up2_forward.1} parent=11 // pred_region
        _
      $region36: #{up2_forward.1} parent=11 // pred_fallthru
        _
      // Predicated region
      $region37: #{up2_forward.1} parent=11 // pred_check
        %p273 = pneg %p214
      $region38: #{up2_forward.1} parent=11 // pred_check_branch
        %275 = sbr.rel (%p273) target = $region40
      $region39: #{up2_forward.1} parent=11 // pred_region
        _
      $region40: #{up2_forward.1} parent=11 // pred_fallthru
        _
    $region12: #{up2_forward.1} parent=5 // pred_fallthru
      _
    %p276 = scmp.lt.s32.totalorder %s15, 2
    // Predicated region
    $region41: #{up2_forward.1} parent=5 // pred_check
      %p277 = pneg %p276
    $region42: #{up2_forward.1} parent=5 // pred_check_branch
      %279 = sbr.rel (%p277) target = $region44
    $region43: #{up2_forward.1} parent=5 // pred_region
      // Predicated region
      $region45: #{up2_forward.1} parent=43 // pred_check
        %p280 = pneg %p35
      $region46: #{up2_forward.1} parent=43 // pred_check_branch
        %282 = sbr.rel (%p280) target = $region48
      $region47: #{up2_forward.1} parent=43 // pred_region
        %p283 = scmp.lt.s32.totalorder %s15, 1
        %s284 = scalar_select %p283, %s15, 1
        %s285 = smul.addr %s284, 4
        %s286 = scalar_lea.vmem %s0, %s285
      $region48: #{up2_forward.1} parent=43 // pred_fallthru
        _
      // Predicated region
      $region49: #{up2_forward.1} parent=43 // pred_check
        %p287 = pneg %p61
      $region50: #{up2_forward.1} parent=43 // pred_check_branch
        %289 = sbr.rel (%p287) target = $region52
      $region51: #{up2_forward.1} parent=43 // pred_region
        %p290 = scmp.lt.s32.totalorder %s15, 1
        %s291 = scalar_select %p290, %s15, 1
        %s292 = smul.addr %s291, 32
        %s293 = smul.addr %s292, 8
        %s294 = scalar_lea.vmem %s1, %s293
      $region52: #{up2_forward.1} parent=43 // pred_fallthru
        _
    $region44: #{up2_forward.1} parent=5 // pred_fallthru
      _
    %p295 = scmp.le.s32.totalorder 1, %s15
    %p296 = scmp.lt.s32.totalorder %s15, 3
    %p297 = pnand %p295, %p296
    %p298 = pneg %p297
    // Predicated region
    $region53: #{up2_forward.1} parent=5 // pred_check
      _
    $region54: #{up2_forward.1} parent=5 // pred_check_branch
      %300 = sbr.rel (%p297) target = $region56
    $region55: #{up2_forward.1} parent=5 // pred_region
      %s301 = ssub.s32 %s15, 1
      %p302 = scmp.lt.s32.totalorder %s20, 1
      %s303 = scalar_select %p302, %s20, 1
      %s304 = smul.addr %s303, 4
      %s305 = scalar_lea.vmem %s0, %s304
      %p306 = pneg %p41
      %p307 = pneg %p38
      %p308 = scmp.lt.s32.totalorder %s20, 1
      %s309 = scalar_select %p308, %s20, 1
      %s310 = smul.addr %s309, 32
      %s311 = smul.addr %s310, 8
      %s312 = scalar_lea.vmem %s1, %s311
      %p313 = pneg %p67
      %p314 = pneg %p64
      %p315 = pneg %p88
      %p316 = pneg %p85
      %p317 = pneg %p109
      %p318 = pneg %p106
      %p319 = pneg %p130
      %p320 = pneg %p127
      %p321 = pneg %p151
      %p322 = pneg %p148
      %p323 = pneg %p172
      %p324 = pneg %p169
      %p325 = pneg %p193
      %p326 = pneg %p190
      %p327 = pneg %p214
      %p328 = pneg %p211
      %p329 = pneg %p240
      %p330 = pneg %p237
      %p331 = scmp.lt.s32.totalorder %s20, 1
      %s332 = scalar_select %p331, %s20, 1
      %s333 = smul.addr %s332, 2
      %s334 = smul.addr %s333, 4
      %s335 = scalar_lea.vmem %s9, %s334
      %p336 = scmp.lt.s32.totalorder %s20, 1
      %s337 = scalar_select %p336, %s20, 1
      %s338 = smul.addr %s337, 4
      %s339 = scalar_lea.vmem %s0, %s338
      %p340 = scmp.lt.s32.totalorder %s20, 1
      %s341 = scalar_select %p340, %s20, 1
      %s342 = smul.addr %s341, 32
      %s343 = smul.addr %s342, 8
      %s344 = scalar_lea.vmem %s1, %s343
      %p345 = scmp.lt.s32.totalorder %s20, 1
      %s346 = scalar_select %p345, %s20, 1
      %s347 = smul.addr %s346, 2
      %s348 = smul.addr %s347, 4
      %s349 = scalar_lea.vmem %s9, %s348
      %v350 = vld [vmem:[%s2] sm:$0xff]
      %v351 = vld [vmem:[%s2 + $0x8] sm:$0xff]
      %v352 = vld [vmem:[%s2 + $0x10] sm:$0xff]
      %v353 = vld [vmem:[%s2 + $0x18] sm:$0xff]
      %v354 = vld [vmem:[%s2 + $0x20] sm:$0xff]
      %v355 = vld [vmem:[%s2 + $0x28] sm:$0xff]
      %v356 = vld [vmem:[%s2 + $0x30] sm:$0xff]
      %v357 = vld [vmem:[%s2 + $0x38] sm:$0xff]
      %v358 = vld [vmem:[%s2 + $0x40] sm:$0xff]
      %v359 = vld [vmem:[%s2 + $0x48] sm:$0xff]
      %v360 = vld [vmem:[%s2 + $0x50] sm:$0xff]
      %v361 = vld [vmem:[%s2 + $0x58] sm:$0xff]
      %v362 = vld [vmem:[%s2 + $0x60] sm:$0xff]
      %v363 = vld [vmem:[%s2 + $0x68] sm:$0xff]
      %v364 = vld [vmem:[%s2 + $0x70] sm:$0xff]
      %v365 = vld [vmem:[%s2 + $0x78] sm:$0xff]
      %v366 = vld [vmem:[%s2 + $0x80] sm:$0xff]
      %v367 = vld [vmem:[%s2 + $0x88] sm:$0xff]
      %v368 = vld [vmem:[%s2 + $0x90] sm:$0xff]
      %v369 = vld [vmem:[%s2 + $0x98] sm:$0xff]
      %v370 = vld [vmem:[%s2 + $0xa0] sm:$0xff]
      %v371 = vld [vmem:[%s2 + $0xa8] sm:$0xff]
      %v372 = vld [vmem:[%s2 + $0xb0] sm:$0xff]
      %v373 = vld [vmem:[%s2 + $0xb8] sm:$0xff]
      %v374 = vld [vmem:[%s2 + $0xc0] sm:$0xff]
      %v375 = vld [vmem:[%s2 + $0xc8] sm:$0xff]
      %v376 = vld [vmem:[%s2 + $0xd0] sm:$0xff]
      %v377 = vld [vmem:[%s2 + $0xd8] sm:$0xff]
      %v378 = vld [vmem:[%s2 + $0xe0] sm:$0xff]
      %v379 = vld [vmem:[%s2 + $0xe8] sm:$0xff]
      %v380 = vld [vmem:[%s2 + $0xf0] sm:$0xff]
      %v381 = vld [vmem:[%s2 + $0xf8] sm:$0xff]
      %v382 = vld [vmem:[%s339] sm:$0xf]
      %vm383 = vcmask 523264
      %v385 = vsel %vm383, %v350, 0
      %v388 = vsel %vm383, %v351, 0
      %v391 = vsel %vm383, %v352, 0
      %v394 = vsel %vm383, %v353, 0
      %v397 = vsel %vm383, %v354, 0
      %v400 = vsel %vm383, %v355, 0
      %v403 = vsel %vm383, %v356, 0
      %v406 = vsel %vm383, %v357, 0
      %v409 = vsel %vm383, %v358, 0
      %v412 = vsel %vm383, %v359, 0
      %v415 = vsel %vm383, %v360, 0
      %v418 = vsel %vm383, %v361, 0
      %v421 = vsel %vm383, %v362, 0
      %v424 = vsel %vm383, %v363, 0
      %v427 = vsel %vm383, %v364, 0
      %v430 = vsel %vm383, %v365, 0
      %v433 = vsel %vm383, %v366, 0
      %v436 = vsel %vm383, %v367, 0
      %v439 = vsel %vm383, %v368, 0
      %v442 = vsel %vm383, %v369, 0
      %v445 = vsel %vm383, %v370, 0
      %v448 = vsel %vm383, %v371, 0
      %v451 = vsel %vm383, %v372, 0
      %v454 = vsel %vm383, %v373, 0
      %v457 = vsel %vm383, %v374, 0
      %v460 = vsel %vm383, %v375, 0
      %v463 = vsel %vm383, %v376, 0
      %v466 = vsel %vm383, %v377, 0
      %v469 = vsel %vm383, %v378, 0
      %v472 = vsel %vm383, %v379, 0
      %v475 = vsel %vm383, %v380, 0
      %v478 = vsel %vm383, %v381, 0
      %v481 = vsel %vm383, %v382, 0
      %483 = vmatpush.xpose.msra.mxu0 0.0
      %484 = vmatpush.xpose.msra.mxu0 0.0
      %485 = vmatpush.xpose.msra.mxu0 0.0
      %486 = vmatpush.xpose.msra.mxu0 0.0
      %487 = vmatpush.xpose.msra.mxu0 0.0
      %488 = vmatpush.xpose.msra.mxu0 0.0
      %489 = vmatpush.xpose.msra.mxu0 0.0
      %490 = vmatpush.xpose.msra.mxu0 0.0
      %491 = vmatpush.xpose.msra.mxu0 0.0
      %492 = vmatpush.xpose.msra.mxu0 0.0
      %493 = vmatpush.xpose.msra.mxu0 0.0
      %494 = vmatpush.xpose.msra.mxu0 0.0
      %495 = vmatpush.xpose.msra.mxu0 0.0
      %496 = vmatpush.xpose.msra.mxu0 0.0
      %497 = vmatpush.xpose.msra.mxu0 0.0
      %498 = vmatpush.xpose.msra.mxu0 %v481
      %499 = vmatmul.f32.gmra.mxu0 %v385
      %v500 = vpop.f32.mrf.mxu0
      %v501 = vadd.f32 0.0, %v500
      %502 = vmatmul.f32.gmra.mxu0 %v388
      %v503 = vpop.f32.mrf.mxu0
      %v504 = vadd.f32 0.0, %v503
      %505 = vmatmul.f32.gmra.mxu0 %v391
      %v506 = vpop.f32.mrf.mxu0
      %v507 = vadd.f32 0.0, %v506
      %508 = vmatmul.f32.gmra.mxu0 %v394
      %v509 = vpop.f32.mrf.mxu0
      %v510 = vadd.f32 0.0, %v509
      %511 = vmatmul.f32.gmra.mxu0 %v397
      %v512 = vpop.f32.mrf.mxu0
      %v513 = vadd.f32 0.0, %v512
      %514 = vmatmul.f32.gmra.mxu0 %v400
      %v515 = vpop.f32.mrf.mxu0
      %v516 = vadd.f32 0.0, %v515
      %517 = vmatmul.f32.gmra.mxu0 %v403
      %v518 = vpop.f32.mrf.mxu0
      %v519 = vadd.f32 0.0, %v518
      %520 = vmatmul.f32.gmra.mxu0 %v406
      %v521 = vpop.f32.mrf.mxu0
      %v522 = vadd.f32 0.0, %v521
      %523 = vmatmul.f32.gmra.mxu0 %v409
      %v524 = vpop.f32.mrf.mxu0
      %v525 = vadd.f32 0.0, %v524
      %526 = vmatmul.f32.gmra.mxu0 %v412
      %v527 = vpop.f32.mrf.mxu0
      %v528 = vadd.f32 0.0, %v527
      %529 = vmatmul.f32.gmra.mxu0 %v415
      %v530 = vpop.f32.mrf.mxu0
      %v531 = vadd.f32 0.0, %v530
      %532 = vmatmul.f32.gmra.mxu0 %v418
      %v533 = vpop.f32.mrf.mxu0
      %v534 = vadd.f32 0.0, %v533
      %535 = vmatmul.f32.gmra.mxu0 %v421
      %v536 = vpop.f32.mrf.mxu0
      %v537 = vadd.f32 0.0, %v536
      %538 = vmatmul.f32.gmra.mxu0 %v424
      %v539 = vpop.f32.mrf.mxu0
      %v540 = vadd.f32 0.0, %v539
      %541 = vmatmul.f32.gmra.mxu0 %v427
      %v542 = vpop.f32.mrf.mxu0
      %v543 = vadd.f32 0.0, %v542
      %544 = vmatmul.f32.gmra.mxu0 %v430
      %v545 = vpop.f32.mrf.mxu0
      %v546 = vadd.f32 0.0, %v545
      %547 = vmatmul.f32.gmra.mxu0 %v433
      %v548 = vpop.f32.mrf.mxu0
      %v549 = vadd.f32 0.0, %v548
      %550 = vmatmul.f32.gmra.mxu0 %v436
      %v551 = vpop.f32.mrf.mxu0
      %v552 = vadd.f32 0.0, %v551
      %553 = vmatmul.f32.gmra.mxu0 %v439
      %v554 = vpop.f32.mrf.mxu0
      %v555 = vadd.f32 0.0, %v554
      %556 = vmatmul.f32.gmra.mxu0 %v442
      %v557 = vpop.f32.mrf.mxu0
      %v558 = vadd.f32 0.0, %v557
      %559 = vmatmul.f32.gmra.mxu0 %v445
      %v560 = vpop.f32.mrf.mxu0
      %v561 = vadd.f32 0.0, %v560
      %562 = vmatmul.f32.gmra.mxu0 %v448
      %v563 = vpop.f32.mrf.mxu0
      %v564 = vadd.f32 0.0, %v563
      %565 = vmatmul.f32.gmra.mxu0 %v451
      %v566 = vpop.f32.mrf.mxu0
      %v567 = vadd.f32 0.0, %v566
      %568 = vmatmul.f32.gmra.mxu0 %v454
      %v569 = vpop.f32.mrf.mxu0
      %v570 = vadd.f32 0.0, %v569
      %571 = vmatmul.f32.gmra.mxu0 %v457
      %v572 = vpop.f32.mrf.mxu0
      %v573 = vadd.f32 0.0, %v572
      %574 = vmatmul.f32.gmra.mxu0 %v460
      %v575 = vpop.f32.mrf.mxu0
      %v576 = vadd.f32 0.0, %v575
      %577 = vmatmul.f32.gmra.mxu0 %v463
      %v578 = vpop.f32.mrf.mxu0
      %v579 = vadd.f32 0.0, %v578
      %580 = vmatmul.f32.gmra.mxu0 %v466
      %v581 = vpop.f32.mrf.mxu0
      %v582 = vadd.f32 0.0, %v581
      %583 = vmatmul.f32.gmra.mxu0 %v469
      %v584 = vpop.f32.mrf.mxu0
      %v585 = vadd.f32 0.0, %v584
      %586 = vmatmul.f32.gmra.mxu0 %v472
      %v587 = vpop.f32.mrf.mxu0
      %v588 = vadd.f32 0.0, %v587
      %589 = vmatmul.f32.gmra.mxu0 %v475
      %v590 = vpop.f32.mrf.mxu0
      %v591 = vadd.f32 0.0, %v590
      %592 = vmatmul.f32.gmra.mxu0 %v478
      %v593 = vpop.f32.mrf.mxu0
      %v594 = vadd.f32 0.0, %v593
      %595 = vdwg.mxu0
      %vm596 = vcmask 64512
      %597 = vst.msk [vmem:[#allocation2] sm:$0xff] %vm596, 0.0
      %598 = vst.msk [vmem:[#allocation2 + $0x8] sm:$0xff] %vm596, 0.0
      %vm599 = vcmask 58368
      %600 = vst.msk [vmem:[#allocation2 + $0x10] sm:$0x3] %vm599, 0.0
      %601 = vst.msk [vmem:[#allocation2 + $0x18] sm:$0xff] %vm596, 0.0
      %602 = vst.msk [vmem:[#allocation2 + $0x20] sm:$0xff] %vm596, 0.0
      %603 = vst.msk [vmem:[#allocation2 + $0x28] sm:$0x3] %vm599, 0.0
      %604 = vst.msk [vmem:[#allocation2 + $0x30] sm:$0xff] %vm596, 0.0
      %605 = vst.msk [vmem:[#allocation2 + $0x38] sm:$0xff] %vm596, 0.0
      %606 = vst.msk [vmem:[#allocation2 + $0x40] sm:$0x3] %vm599, 0.0
      %607 = vst.msk [vmem:[#allocation2 + $0x48] sm:$0xff] %vm596, 0.0
      %608 = vst.msk [vmem:[#allocation2 + $0x50] sm:$0xff] %vm596, 0.0
      %609 = vst.msk [vmem:[#allocation2 + $0x58] sm:$0x3] %vm599, 0.0
      %610 = vst.msk [vmem:[#allocation2 + $0x60] sm:$0xff] %vm596, 0.0
      %611 = vst.msk [vmem:[#allocation2 + $0x68] sm:$0xff] %vm596, 0.0
      %612 = vst.msk [vmem:[#allocation2 + $0x70] sm:$0x3] %vm599, 0.0
      %613 = vst.msk [vmem:[#allocation2 + $0x78] sm:$0xff] %vm596, 0.0
      %614 = vst.msk [vmem:[#allocation2 + $0x80] sm:$0xff] %vm596, 0.0
      %615 = vst.msk [vmem:[#allocation2 + $0x88] sm:$0x3] %vm599, 0.0
      %616 = vst.msk [vmem:[#allocation2 + $0x90] sm:$0xff] %vm596, 0.0
      %617 = vst.msk [vmem:[#allocation2 + $0x98] sm:$0xff] %vm596, 0.0
      %618 = vst.msk [vmem:[#allocation2 + $0xa0] sm:$0x3] %vm599, 0.0
      %619 = vst.msk [vmem:[#allocation2 + $0xa8] sm:$0xff] %vm596, 0.0
      %620 = vst.msk [vmem:[#allocation2 + $0xb0] sm:$0xff] %vm596, 0.0
      %621 = vst.msk [vmem:[#allocation2 + $0xb8] sm:$0x3] %vm599, 0.0
      %622 = vst.msk [vmem:[#allocation2 + $0xc0] sm:$0xff] %vm596, 0.0
      %623 = vst.msk [vmem:[#allocation2 + $0xc8] sm:$0xff] %vm596, 0.0
      %624 = vst.msk [vmem:[#allocation2 + $0xd0] sm:$0x3] %vm599, 0.0
      %625 = vst.msk [vmem:[#allocation2 + $0xd8] sm:$0xff] %vm596, 0.0
      %626 = vst.msk [vmem:[#allocation2 + $0xe0] sm:$0xff] %vm596, 0.0
      %627 = vst.msk [vmem:[#allocation2 + $0xe8] sm:$0x3] %vm599, 0.0
      %628 = vst.msk [vmem:[#allocation2 + $0xf0] sm:$0xff] %vm596, 0.0
      %629 = vst.msk [vmem:[#allocation2 + $0xf8] sm:$0xff] %vm596, 0.0
      %630 = vst.msk [vmem:[#allocation2 + $0x100] sm:$0x3] %vm599, 0.0
      %631 = vst.msk [vmem:[#allocation2 + $0x108] sm:$0xff] %vm596, 0.0
      %632 = vst.msk [vmem:[#allocation2 + $0x110] sm:$0xff] %vm596, 0.0
      %633 = vst.msk [vmem:[#allocation2 + $0x118] sm:$0x3] %vm599, 0.0
      %634 = vst.msk [vmem:[#allocation2 + $0x120] sm:$0xff] %vm596, 0.0
      %635 = vst.msk [vmem:[#allocation2 + $0x128] sm:$0xff] %vm596, 0.0
      %636 = vst.msk [vmem:[#allocation2 + $0x130] sm:$0x3] %vm599, 0.0
      %637 = vst.msk [vmem:[#allocation2 + $0x138] sm:$0xff] %vm596, 0.0
      %638 = vst.msk [vmem:[#allocation2 + $0x140] sm:$0xff] %vm596, 0.0
      %639 = vst.msk [vmem:[#allocation2 + $0x148] sm:$0x3] %vm599, 0.0
      %640 = vst.msk [vmem:[#allocation2 + $0x150] sm:$0xff] %vm596, 0.0
      %641 = vst.msk [vmem:[#allocation2 + $0x158] sm:$0xff] %vm596, 0.0
      %642 = vst.msk [vmem:[#allocation2 + $0x160] sm:$0x3] %vm599, 0.0
      %643 = vst.msk [vmem:[#allocation2 + $0x168] sm:$0xff] %vm596, 0.0
      %644 = vst.msk [vmem:[#allocation2 + $0x170] sm:$0xff] %vm596, 0.0
      %645 = vst.msk [vmem:[#allocation2 + $0x178] sm:$0x3] %vm599, 0.0
      %646 = vst.msk [vmem:[#allocation2 + $0x180] sm:$0xff] %vm596, 0.0
      %647 = vst.msk [vmem:[#allocation2 + $0x188] sm:$0xff] %vm596, 0.0
      %648 = vst.msk [vmem:[#allocation2 + $0x190] sm:$0x3] %vm599, 0.0
      %649 = vst.msk [vmem:[#allocation2 + $0x198] sm:$0xff] %vm596, 0.0
      %650 = vst.msk [vmem:[#allocation2 + $0x1a0] sm:$0xff] %vm596, 0.0
      %651 = vst.msk [vmem:[#allocation2 + $0x1a8] sm:$0x3] %vm599, 0.0
      %v652 = vld [vmem:[%s344] sm:$0xff]
      %v653 = vld [vmem:[%s344 + $0x8] sm:$0xff]
      %v654 = vld [vmem:[%s344 + $0x10] sm:$0xff]
      %v655 = vld [vmem:[%s344 + $0x18] sm:$0xff]
      %v656 = vld [vmem:[%s344 + $0x20] sm:$0xff]
      %v657 = vld [vmem:[%s344 + $0x28] sm:$0xff]
      %v658 = vld [vmem:[%s344 + $0x30] sm:$0xff]
      %v659 = vld [vmem:[%s344 + $0x38] sm:$0xff]
      %v660 = vld [vmem:[%s344 + $0x40] sm:$0xff]
      %v661 = vld [vmem:[%s344 + $0x48] sm:$0xff]
      %v662 = vld [vmem:[%s344 + $0x50] sm:$0xff]
      %v663 = vld [vmem:[%s344 + $0x58] sm:$0xff]
      %v664 = vld [vmem:[%s344 + $0x60] sm:$0xff]
      %v665 = vld [vmem:[%s344 + $0x68] sm:$0xff]
      %v666 = vld [vmem:[%s344 + $0x70] sm:$0xff]
      %v667 = vld [vmem:[%s344 + $0x78] sm:$0xff]
      %v668 = vld [vmem:[%s344 + $0x80] sm:$0xff]
      %v669 = vld [vmem:[%s344 + $0x88] sm:$0xff]
      %v670 = vld [vmem:[%s344 + $0x90] sm:$0xff]
      %v671 = vld [vmem:[%s344 + $0x98] sm:$0xff]
      %v672 = vld [vmem:[%s344 + $0xa0] sm:$0xff]
      %v673 = vld [vmem:[%s344 + $0xa8] sm:$0xff]
      %v674 = vld [vmem:[%s344 + $0xb0] sm:$0xff]
      %v675 = vld [vmem:[%s344 + $0xb8] sm:$0xff]
      %v676 = vld [vmem:[%s344 + $0xc0] sm:$0xff]
      %v677 = vld [vmem:[%s344 + $0xc8] sm:$0xff]
      %v678 = vld [vmem:[%s344 + $0xd0] sm:$0xff]
      %v679 = vld [vmem:[%s344 + $0xd8] sm:$0xff]
      %v680 = vld [vmem:[%s344 + $0xe0] sm:$0xff]
      %v681 = vld [vmem:[%s344 + $0xe8] sm:$0xff]
      %v682 = vld [vmem:[%s344 + $0xf0] sm:$0xff]
      %v683 = vld [vmem:[%s344 + $0xf8] sm:$0xff]
      %716 = vrot.lane.b32.xlu0 %v501, 4
      %v717 = vpop.permute.xlu0 %716
      %718 = vrot.lane.b32.xlu0 %v504, 4
      %v719 = vpop.permute.xlu0 %718
      %720 = vrot.lane.b32.xlu0 %v507, 4
      %v721 = vpop.permute.xlu0 %720
      %722 = vrot.lane.b32.xlu0 %v510, 4
      %v723 = vpop.permute.xlu0 %722
      %724 = vrot.lane.b32.xlu0 %v513, 4
      %v725 = vpop.permute.xlu0 %724
      %726 = vrot.lane.b32.xlu0 %v516, 4
      %v727 = vpop.permute.xlu0 %726
      %728 = vrot.lane.b32.xlu0 %v519, 4
      %v729 = vpop.permute.xlu0 %728
      %730 = vrot.lane.b32.xlu0 %v522, 4
      %v731 = vpop.permute.xlu0 %730
      %732 = vrot.lane.b32.xlu0 %v525, 4
      %v733 = vpop.permute.xlu0 %732
      %734 = vrot.lane.b32.xlu0 %v528, 4
      %v735 = vpop.permute.xlu0 %734
      %736 = vrot.lane.b32.xlu0 %v531, 4
      %v737 = vpop.permute.xlu0 %736
      %738 = vrot.lane.b32.xlu0 %v534, 4
      %v739 = vpop.permute.xlu0 %738
      %740 = vrot.lane.b32.xlu0 %v537, 4
      %v741 = vpop.permute.xlu0 %740
      %742 = vrot.lane.b32.xlu0 %v540, 4
      %v743 = vpop.permute.xlu0 %742
      %744 = vrot.lane.b32.xlu0 %v543, 4
      %v745 = vpop.permute.xlu0 %744
      %746 = vrot.lane.b32.xlu0 %v546, 4
      %v747 = vpop.permute.xlu0 %746
      %748 = vrot.lane.b32.xlu0 %v549, 4
      %v749 = vpop.permute.xlu0 %748
      %750 = vrot.lane.b32.xlu0 %v552, 4
      %v751 = vpop.permute.xlu0 %750
      %752 = vrot.lane.b32.xlu0 %v555, 4
      %v753 = vpop.permute.xlu0 %752
      %754 = vrot.lane.b32.xlu0 %v558, 4
      %v755 = vpop.permute.xlu0 %754
      %756 = vrot.lane.b32.xlu0 %v561, 4
      %v757 = vpop.permute.xlu0 %756
      %758 = vrot.lane.b32.xlu0 %v564, 4
      %v759 = vpop.permute.xlu0 %758
      %760 = vrot.lane.b32.xlu0 %v567, 4
      %v761 = vpop.permute.xlu0 %760
      %762 = vrot.lane.b32.xlu0 %v570, 4
      %v763 = vpop.permute.xlu0 %762
      %764 = vrot.lane.b32.xlu0 %v573, 4
      %v765 = vpop.permute.xlu0 %764
      %766 = vrot.lane.b32.xlu0 %v576, 4
      %v767 = vpop.permute.xlu0 %766
      %768 = vrot.lane.b32.xlu0 %v579, 4
      %v769 = vpop.permute.xlu0 %768
      %770 = vrot.lane.b32.xlu0 %v582, 4
      %v771 = vpop.permute.xlu0 %770
      %772 = vrot.lane.b32.xlu0 %v585, 4
      %v773 = vpop.permute.xlu0 %772
      %774 = vrot.lane.b32.xlu0 %v588, 4
      %v775 = vpop.permute.xlu0 %774
      %776 = vrot.lane.b32.xlu0 %v591, 4
      %v777 = vpop.permute.xlu0 %776
      %778 = vrot.lane.b32.xlu0 %v594, 4
      %v779 = vpop.permute.xlu0 %778
      %vm812 = vcmask 31744
      %v813 = vsel %vm812, %v652, %v717
      %v814 = vsel %vm812, %v653, %v719
      %v815 = vsel %vm812, %v654, %v721
      %v816 = vsel %vm812, %v655, %v723
      %v817 = vsel %vm812, %v656, %v725
      %v818 = vsel %vm812, %v657, %v727
      %v819 = vsel %vm812, %v658, %v729
      %v820 = vsel %vm812, %v659, %v731
      %v821 = vsel %vm812, %v660, %v733
      %v822 = vsel %vm812, %v661, %v735
      %v823 = vsel %vm812, %v662, %v737
      %v824 = vsel %vm812, %v663, %v739
      %v825 = vsel %vm812, %v664, %v741
      %v826 = vsel %vm812, %v665, %v743
      %v827 = vsel %vm812, %v666, %v745
      %v828 = vsel %vm812, %v667, %v747
      %v829 = vsel %vm812, %v668, %v749
      %v830 = vsel %vm812, %v669, %v751
      %v831 = vsel %vm812, %v670, %v753
      %v832 = vsel %vm812, %v671, %v755
      %v833 = vsel %vm812, %v672, %v757
      %v834 = vsel %vm812, %v673, %v759
      %v835 = vsel %vm812, %v674, %v761
      %v836 = vsel %vm812, %v675, %v763
      %v837 = vsel %vm812, %v676, %v765
      %v838 = vsel %vm812, %v677, %v767
      %v839 = vsel %vm812, %v678, %v769
      %v840 = vsel %vm812, %v679, %v771
      %v841 = vsel %vm812, %v680, %v773
      %v842 = vsel %vm812, %v681, %v775
      %v843 = vsel %vm812, %v682, %v777
      %v844 = vsel %vm812, %v683, %v779
      %s845 = scalar_lea.vmem [#allocation2], 24
      %846 = vst.msk [vmem:[%s845 + $0x1] sm:$0xff] %vm596, %v813
      %847 = vst.msk [vmem:[%s845 + $0x9] sm:$0xff] %vm596, %v814
      %848 = vst.msk [vmem:[%s845 + $0x19] sm:$0xff] %vm596, %v815
      %849 = vst.msk [vmem:[%s845 + $0x21] sm:$0xff] %vm596, %v816
      %850 = vst.msk [vmem:[%s845 + $0x31] sm:$0xff] %vm596, %v817
      %851 = vst.msk [vmem:[%s845 + $0x39] sm:$0xff] %vm596, %v818
      %852 = vst.msk [vmem:[%s845 + $0x49] sm:$0xff] %vm596, %v819
      %853 = vst.msk [vmem:[%s845 + $0x51] sm:$0xff] %vm596, %v820
      %854 = vst.msk [vmem:[%s845 + $0x61] sm:$0xff] %vm596, %v821
      %855 = vst.msk [vmem:[%s845 + $0x69] sm:$0xff] %vm596, %v822
      %856 = vst.msk [vmem:[%s845 + $0x79] sm:$0xff] %vm596, %v823
      %857 = vst.msk [vmem:[%s845 + $0x81] sm:$0xff] %vm596, %v824
      %858 = vst.msk [vmem:[%s845 + $0x91] sm:$0xff] %vm596, %v825
      %859 = vst.msk [vmem:[%s845 + $0x99] sm:$0xff] %vm596, %v826
      %860 = vst.msk [vmem:[%s845 + $0xa9] sm:$0xff] %vm596, %v827
      %861 = vst.msk [vmem:[%s845 + $0xb1] sm:$0xff] %vm596, %v828
      %862 = vst.msk [vmem:[%s845 + $0xc1] sm:$0xff] %vm596, %v829
      %863 = vst.msk [vmem:[%s845 + $0xc9] sm:$0xff] %vm596, %v830
      %864 = vst.msk [vmem:[%s845 + $0xd9] sm:$0xff] %vm596, %v831
      %865 = vst.msk [vmem:[%s845 + $0xe1] sm:$0xff] %vm596, %v832
      %866 = vst.msk [vmem:[%s845 + $0xf1] sm:$0xff] %vm596, %v833
      %867 = vst.msk [vmem:[%s845 + $0xf9] sm:$0xff] %vm596, %v834
      %868 = vst.msk [vmem:[%s845 + $0x109] sm:$0xff] %vm596, %v835
      %869 = vst.msk [vmem:[%s845 + $0x111] sm:$0xff] %vm596, %v836
      %870 = vst.msk [vmem:[%s845 + $0x121] sm:$0xff] %vm596, %v837
      %871 = vst.msk [vmem:[%s845 + $0x129] sm:$0xff] %vm596, %v838
      %872 = vst.msk [vmem:[%s845 + $0x139] sm:$0xff] %vm596, %v839
      %873 = vst.msk [vmem:[%s845 + $0x141] sm:$0xff] %vm596, %v840
      %874 = vst.msk [vmem:[%s845 + $0x151] sm:$0xff] %vm596, %v841
      %875 = vst.msk [vmem:[%s845 + $0x159] sm:$0xff] %vm596, %v842
      %876 = vst.msk [vmem:[%s845 + $0x169] sm:$0xff] %vm596, %v843
      %877 = vst.msk [vmem:[%s845 + $0x171] sm:$0xff] %vm596, %v844
      %v878 = vld [vmem:[#allocation2] sm:$0xff]
      %v879 = vld [vmem:[#allocation2 + $0x8] sm:$0xff]
      %v880 = vld [vmem:[#allocation2 + $0x18] sm:$0xff]
      %v881 = vld [vmem:[#allocation2 + $0x20] sm:$0xff]
      %v882 = vld [vmem:[#allocation2 + $0x30] sm:$0xff]
      %v883 = vld [vmem:[#allocation2 + $0x38] sm:$0xff]
      %v884 = vld [vmem:[#allocation2 + $0x48] sm:$0xff]
      %v885 = vld [vmem:[#allocation2 + $0x50] sm:$0xff]
      %v886 = vld [vmem:[#allocation2 + $0x60] sm:$0xff]
      %v887 = vld [vmem:[#allocation2 + $0x68] sm:$0xff]
      %v888 = vld [vmem:[#allocation2 + $0x78] sm:$0xff]
      %v889 = vld [vmem:[#allocation2 + $0x80] sm:$0xff]
      %v890 = vld [vmem:[#allocation2 + $0x90] sm:$0xff]
      %v891 = vld [vmem:[#allocation2 + $0x98] sm:$0xff]
      %v892 = vld [vmem:[#allocation2 + $0xa8] sm:$0xff]
      %v893 = vld [vmem:[#allocation2 + $0xb0] sm:$0xff]
      %v894 = vld [vmem:[#allocation2 + $0xc0] sm:$0xff]
      %v895 = vld [vmem:[#allocation2 + $0xc8] sm:$0xff]
      %v896 = vld [vmem:[#allocation2 + $0xd8] sm:$0xff]
      %v897 = vld [vmem:[#allocation2 + $0xe0] sm:$0xff]
      %v898 = vld [vmem:[#allocation2 + $0xf0] sm:$0xff]
      %v899 = vld [vmem:[#allocation2 + $0xf8] sm:$0xff]
      %v900 = vld [vmem:[#allocation2 + $0x108] sm:$0xff]
      %v901 = vld [vmem:[#allocation2 + $0x110] sm:$0xff]
      %v902 = vld [vmem:[#allocation2 + $0x120] sm:$0xff]
      %v903 = vld [vmem:[#allocation2 + $0x128] sm:$0xff]
      %v904 = vld [vmem:[#allocation2 + $0x138] sm:$0xff]
      %v905 = vld [vmem:[#allocation2 + $0x140] sm:$0xff]
      %v906 = vld [vmem:[#allocation2 + $0x150] sm:$0xff]
      %v907 = vld [vmem:[#allocation2 + $0x158] sm:$0xff]
      %v908 = vld [vmem:[#allocation2 + $0x168] sm:$0xff]
      %v909 = vld [vmem:[#allocation2 + $0x170] sm:$0xff]
      %v910 = vld [vmem:[#allocation2 + $0x1] sm:$0xff]
      %v911 = vld [vmem:[#allocation2 + $0x9] sm:$0xff]
      %v912 = vld [vmem:[#allocation2 + $0x19] sm:$0xff]
      %v913 = vld [vmem:[#allocation2 + $0x21] sm:$0xff]
      %v914 = vld [vmem:[#allocation2 + $0x31] sm:$0xff]
      %v915 = vld [vmem:[#allocation2 + $0x39] sm:$0xff]
      %v916 = vld [vmem:[#allocation2 + $0x49] sm:$0xff]
      %v917 = vld [vmem:[#allocation2 + $0x51] sm:$0xff]
      %v918 = vld [vmem:[#allocation2 + $0x61] sm:$0xff]
      %v919 = vld [vmem:[#allocation2 + $0x69] sm:$0xff]
      %v920 = vld [vmem:[#allocation2 + $0x79] sm:$0xff]
      %v921 = vld [vmem:[#allocation2 + $0x81] sm:$0xff]
      %v922 = vld [vmem:[#allocation2 + $0x91] sm:$0xff]
      %v923 = vld [vmem:[#allocation2 + $0x99] sm:$0xff]
      %v924 = vld [vmem:[#allocation2 + $0xa9] sm:$0xff]
      %v925 = vld [vmem:[#allocation2 + $0xb1] sm:$0xff]
      %v926 = vld [vmem:[#allocation2 + $0xc1] sm:$0xff]
      %v927 = vld [vmem:[#allocation2 + $0xc9] sm:$0xff]
      %v928 = vld [vmem:[#allocation2 + $0xd9] sm:$0xff]
      %v929 = vld [vmem:[#allocation2 + $0xe1] sm:$0xff]
      %v930 = vld [vmem:[#allocation2 + $0xf1] sm:$0xff]
      %v931 = vld [vmem:[#allocation2 + $0xf9] sm:$0xff]
      %v932 = vld [vmem:[#allocation2 + $0x109] sm:$0xff]
      %v933 = vld [vmem:[#allocation2 + $0x111] sm:$0xff]
      %v934 = vld [vmem:[#allocation2 + $0x121] sm:$0xff]
      %v935 = vld [vmem:[#allocation2 + $0x129] sm:$0xff]
      %v936 = vld [vmem:[#allocation2 + $0x139] sm:$0xff]
      %v937 = vld [vmem:[#allocation2 + $0x141] sm:$0xff]
      %v938 = vld [vmem:[#allocation2 + $0x151] sm:$0xff]
      %v939 = vld [vmem:[#allocation2 + $0x159] sm:$0xff]
      %v940 = vld [vmem:[#allocation2 + $0x169] sm:$0xff]
      %v941 = vld [vmem:[#allocation2 + $0x171] sm:$0xff]
      %v942 = vld [vmem:[#allocation2 + $0x2] sm:$0xff]
      %v943 = vld [vmem:[#allocation2 + $0xa] sm:$0xff]
      %v944 = vld [vmem:[#allocation2 + $0x1a] sm:$0xff]
      %v945 = vld [vmem:[#allocation2 + $0x22] sm:$0xff]
      %v946 = vld [vmem:[#allocation2 + $0x32] sm:$0xff]
      %v947 = vld [vmem:[#allocation2 + $0x3a] sm:$0xff]
      %v948 = vld [vmem:[#allocation2 + $0x4a] sm:$0xff]
      %v949 = vld [vmem:[#allocation2 + $0x52] sm:$0xff]
      %v950 = vld [vmem:[#allocation2 + $0x62] sm:$0xff]
      %v951 = vld [vmem:[#allocation2 + $0x6a] sm:$0xff]
      %v952 = vld [vmem:[#allocation2 + $0x7a] sm:$0xff]
      %v953 = vld [vmem:[#allocation2 + $0x82] sm:$0xff]
      %v954 = vld [vmem:[#allocation2 + $0x92] sm:$0xff]
      %v955 = vld [vmem:[#allocation2 + $0x9a] sm:$0xff]
      %v956 = vld [vmem:[#allocation2 + $0xaa] sm:$0xff]
      %v957 = vld [vmem:[#allocation2 + $0xb2] sm:$0xff]
      %v958 = vld [vmem:[#allocation2 + $0xc2] sm:$0xff]
      %v959 = vld [vmem:[#allocation2 + $0xca] sm:$0xff]
      %v960 = vld [vmem:[#allocation2 + $0xda] sm:$0xff]
      %v961 = vld [vmem:[#allocation2 + $0xe2] sm:$0xff]
      %v962 = vld [vmem:[#allocation2 + $0xf2] sm:$0xff]
      %v963 = vld [vmem:[#allocation2 + $0xfa] sm:$0xff]
      %v964 = vld [vmem:[#allocation2 + $0x10a] sm:$0xff]
      %v965 = vld [vmem:[#allocation2 + $0x112] sm:$0xff]
      %v966 = vld [vmem:[#allocation2 + $0x122] sm:$0xff]
      %v967 = vld [vmem:[#allocation2 + $0x12a] sm:$0xff]
      %v968 = vld [vmem:[#allocation2 + $0x13a] sm:$0xff]
      %v969 = vld [vmem:[#allocation2 + $0x142] sm:$0xff]
      %v970 = vld [vmem:[#allocation2 + $0x152] sm:$0xff]
      %v971 = vld [vmem:[#allocation2 + $0x15a] sm:$0xff]
      %v972 = vld [vmem:[#allocation2 + $0x16a] sm:$0xff]
      %v973 = vld [vmem:[#allocation2 + $0x172] sm:$0xff]
      %v974 = vld [vmem:[%s845] sm:$0xff]
      %v975 = vld [vmem:[%s845 + $0x8] sm:$0xff]
      %v976 = vld [vmem:[%s845 + $0x18] sm:$0xff]
      %v977 = vld [vmem:[%s845 + $0x20] sm:$0xff]
      %v978 = vld [vmem:[%s845 + $0x30] sm:$0xff]
      %v979 = vld [vmem:[%s845 + $0x38] sm:$0xff]
      %v980 = vld [vmem:[%s845 + $0x48] sm:$0xff]
      %v981 = vld [vmem:[%s845 + $0x50] sm:$0xff]
      %v982 = vld [vmem:[%s845 + $0x60] sm:$0xff]
      %v983 = vld [vmem:[%s845 + $0x68] sm:$0xff]
      %v984 = vld [vmem:[%s845 + $0x78] sm:$0xff]
      %v985 = vld [vmem:[%s845 + $0x80] sm:$0xff]
      %v986 = vld [vmem:[%s845 + $0x90] sm:$0xff]
      %v987 = vld [vmem:[%s845 + $0x98] sm:$0xff]
      %v988 = vld [vmem:[%s845 + $0xa8] sm:$0xff]
      %v989 = vld [vmem:[%s845 + $0xb0] sm:$0xff]
      %v990 = vld [vmem:[%s845 + $0xc0] sm:$0xff]
      %v991 = vld [vmem:[%s845 + $0xc8] sm:$0xff]
      %v992 = vld [vmem:[%s845 + $0xd8] sm:$0xff]
      %v993 = vld [vmem:[%s845 + $0xe0] sm:$0xff]
      %v994 = vld [vmem:[%s845 + $0xf0] sm:$0xff]
      %v995 = vld [vmem:[%s845 + $0xf8] sm:$0xff]
      %v996 = vld [vmem:[%s845 + $0x108] sm:$0xff]
      %v997 = vld [vmem:[%s845 + $0x110] sm:$0xff]
      %v998 = vld [vmem:[%s845 + $0x120] sm:$0xff]
      %v999 = vld [vmem:[%s845 + $0x128] sm:$0xff]
      %v1000 = vld [vmem:[%s845 + $0x138] sm:$0xff]
      %v1001 = vld [vmem:[%s845 + $0x140] sm:$0xff]
      %v1002 = vld [vmem:[%s845 + $0x150] sm:$0xff]
      %v1003 = vld [vmem:[%s845 + $0x158] sm:$0xff]
      %v1004 = vld [vmem:[%s845 + $0x168] sm:$0xff]
      %v1005 = vld [vmem:[%s845 + $0x170] sm:$0xff]
      %v1006 = vld [vmem:[%s845 + $0x1] sm:$0xff]
      %v1007 = vld [vmem:[%s845 + $0x9] sm:$0xff]
      %v1008 = vld [vmem:[%s845 + $0x19] sm:$0xff]
      %v1009 = vld [vmem:[%s845 + $0x21] sm:$0xff]
      %v1010 = vld [vmem:[%s845 + $0x31] sm:$0xff]
      %v1011 = vld [vmem:[%s845 + $0x39] sm:$0xff]
      %v1012 = vld [vmem:[%s845 + $0x49] sm:$0xff]
      %v1013 = vld [vmem:[%s845 + $0x51] sm:$0xff]
      %v1014 = vld [vmem:[%s845 + $0x61] sm:$0xff]
      %v1015 = vld [vmem:[%s845 + $0x69] sm:$0xff]
      %v1016 = vld [vmem:[%s845 + $0x79] sm:$0xff]
      %v1017 = vld [vmem:[%s845 + $0x81] sm:$0xff]
      %v1018 = vld [vmem:[%s845 + $0x91] sm:$0xff]
      %v1019 = vld [vmem:[%s845 + $0x99] sm:$0xff]
      %v1020 = vld [vmem:[%s845 + $0xa9] sm:$0xff]
      %v1021 = vld [vmem:[%s845 + $0xb1] sm:$0xff]
      %v1022 = vld [vmem:[%s845 + $0xc1] sm:$0xff]
      %v1023 = vld [vmem:[%s845 + $0xc9] sm:$0xff]
      %v1024 = vld [vmem:[%s845 + $0xd9] sm:$0xff]
      %v1025 = vld [vmem:[%s845 + $0xe1] sm:$0xff]
      %v1026 = vld [vmem:[%s845 + $0xf1] sm:$0xff]
      %v1027 = vld [vmem:[%s845 + $0xf9] sm:$0xff]
      %v1028 = vld [vmem:[%s845 + $0x109] sm:$0xff]
      %v1029 = vld [vmem:[%s845 + $0x111] sm:$0xff]
      %v1030 = vld [vmem:[%s845 + $0x121] sm:$0xff]
      %v1031 = vld [vmem:[%s845 + $0x129] sm:$0xff]
      %v1032 = vld [vmem:[%s845 + $0x139] sm:$0xff]
      %v1033 = vld [vmem:[%s845 + $0x141] sm:$0xff]
      %v1034 = vld [vmem:[%s845 + $0x151] sm:$0xff]
      %v1035 = vld [vmem:[%s845 + $0x159] sm:$0xff]
      %v1036 = vld [vmem:[%s845 + $0x169] sm:$0xff]
      %v1037 = vld [vmem:[%s845 + $0x171] sm:$0xff]
      %v1038 = vld [vmem:[%s845 + $0x2] sm:$0xff]
      %v1039 = vld [vmem:[%s845 + $0xa] sm:$0xff]
      %v1040 = vld [vmem:[%s845 + $0x1a] sm:$0xff]
      %v1041 = vld [vmem:[%s845 + $0x22] sm:$0xff]
      %v1042 = vld [vmem:[%s845 + $0x32] sm:$0xff]
      %v1043 = vld [vmem:[%s845 + $0x3a] sm:$0xff]
      %v1044 = vld [vmem:[%s845 + $0x4a] sm:$0xff]
      %v1045 = vld [vmem:[%s845 + $0x52] sm:$0xff]
      %v1046 = vld [vmem:[%s845 + $0x62] sm:$0xff]
      %v1047 = vld [vmem:[%s845 + $0x6a] sm:$0xff]
      %v1048 = vld [vmem:[%s845 + $0x7a] sm:$0xff]
      %v1049 = vld [vmem:[%s845 + $0x82] sm:$0xff]
      %v1050 = vld [vmem:[%s845 + $0x92] sm:$0xff]
      %v1051 = vld [vmem:[%s845 + $0x9a] sm:$0xff]
      %v1052 = vld [vmem:[%s845 + $0xaa] sm:$0xff]
      %v1053 = vld [vmem:[%s845 + $0xb2] sm:$0xff]
      %v1054 = vld [vmem:[%s845 + $0xc2] sm:$0xff]
      %v1055 = vld [vmem:[%s845 + $0xca] sm:$0xff]
      %v1056 = vld [vmem:[%s845 + $0xda] sm:$0xff]
      %v1057 = vld [vmem:[%s845 + $0xe2] sm:$0xff]
      %v1058 = vld [vmem:[%s845 + $0xf2] sm:$0xff]
      %v1059 = vld [vmem:[%s845 + $0xfa] sm:$0xff]
      %v1060 = vld [vmem:[%s845 + $0x10a] sm:$0xff]
      %v1061 = vld [vmem:[%s845 + $0x112] sm:$0xff]
      %v1062 = vld [vmem:[%s845 + $0x122] sm:$0xff]
      %v1063 = vld [vmem:[%s845 + $0x12a] sm:$0xff]
      %v1064 = vld [vmem:[%s845 + $0x13a] sm:$0xff]
      %v1065 = vld [vmem:[%s845 + $0x142] sm:$0xff]
      %v1066 = vld [vmem:[%s845 + $0x152] sm:$0xff]
      %v1067 = vld [vmem:[%s845 + $0x15a] sm:$0xff]
      %v1068 = vld [vmem:[%s845 + $0x16a] sm:$0xff]
      %v1069 = vld [vmem:[%s845 + $0x172] sm:$0xff]
      %s1070 = scalar_lea.vmem [#allocation2], 48
      %v1071 = vld [vmem:[%s1070] sm:$0xff]
      %v1072 = vld [vmem:[%s1070 + $0x8] sm:$0xff]
      %v1073 = vld [vmem:[%s1070 + $0x18] sm:$0xff]
      %v1074 = vld [vmem:[%s1070 + $0x20] sm:$0xff]
      %v1075 = vld [vmem:[%s1070 + $0x30] sm:$0xff]
      %v1076 = vld [vmem:[%s1070 + $0x38] sm:$0xff]
      %v1077 = vld [vmem:[%s1070 + $0x48] sm:$0xff]
      %v1078 = vld [vmem:[%s1070 + $0x50] sm:$0xff]
      %v1079 = vld [vmem:[%s1070 + $0x60] sm:$0xff]
      %v1080 = vld [vmem:[%s1070 + $0x68] sm:$0xff]
      %v1081 = vld [vmem:[%s1070 + $0x78] sm:$0xff]
      %v1082 = vld [vmem:[%s1070 + $0x80] sm:$0xff]
      %v1083 = vld [vmem:[%s1070 + $0x90] sm:$0xff]
      %v1084 = vld [vmem:[%s1070 + $0x98] sm:$0xff]
      %v1085 = vld [vmem:[%s1070 + $0xa8] sm:$0xff]
      %v1086 = vld [vmem:[%s1070 + $0xb0] sm:$0xff]
      %v1087 = vld [vmem:[%s1070 + $0xc0] sm:$0xff]
      %v1088 = vld [vmem:[%s1070 + $0xc8] sm:$0xff]
      %v1089 = vld [vmem:[%s1070 + $0xd8] sm:$0xff]
      %v1090 = vld [vmem:[%s1070 + $0xe0] sm:$0xff]
      %v1091 = vld [vmem:[%s1070 + $0xf0] sm:$0xff]
      %v1092 = vld [vmem:[%s1070 + $0xf8] sm:$0xff]
      %v1093 = vld [vmem:[%s1070 + $0x108] sm:$0xff]
      %v1094 = vld [vmem:[%s1070 + $0x110] sm:$0xff]
      %v1095 = vld [vmem:[%s1070 + $0x120] sm:$0xff]
      %v1096 = vld [vmem:[%s1070 + $0x128] sm:$0xff]
      %v1097 = vld [vmem:[%s1070 + $0x138] sm:$0xff]
      %v1098 = vld [vmem:[%s1070 + $0x140] sm:$0xff]
      %v1099 = vld [vmem:[%s1070 + $0x150] sm:$0xff]
      %v1100 = vld [vmem:[%s1070 + $0x158] sm:$0xff]
      %v1101 = vld [vmem:[%s1070 + $0x168] sm:$0xff]
      %v1102 = vld [vmem:[%s1070 + $0x170] sm:$0xff]
      %v1103 = vld [vmem:[%s1070 + $0x1] sm:$0xff]
      %v1104 = vld [vmem:[%s1070 + $0x9] sm:$0xff]
      %v1105 = vld [vmem:[%s1070 + $0x19] sm:$0xff]
      %v1106 = vld [vmem:[%s1070 + $0x21] sm:$0xff]
      %v1107 = vld [vmem:[%s1070 + $0x31] sm:$0xff]
      %v1108 = vld [vmem:[%s1070 + $0x39] sm:$0xff]
      %v1109 = vld [vmem:[%s1070 + $0x49] sm:$0xff]
      %v1110 = vld [vmem:[%s1070 + $0x51] sm:$0xff]
      %v1111 = vld [vmem:[%s1070 + $0x61] sm:$0xff]
      %v1112 = vld [vmem:[%s1070 + $0x69] sm:$0xff]
      %v1113 = vld [vmem:[%s1070 + $0x79] sm:$0xff]
      %v1114 = vld [vmem:[%s1070 + $0x81] sm:$0xff]
      %v1115 = vld [vmem:[%s1070 + $0x91] sm:$0xff]
      %v1116 = vld [vmem:[%s1070 + $0x99] sm:$0xff]
      %v1117 = vld [vmem:[%s1070 + $0xa9] sm:$0xff]
      %v1118 = vld [vmem:[%s1070 + $0xb1] sm:$0xff]
      %v1119 = vld [vmem:[%s1070 + $0xc1] sm:$0xff]
      %v1120 = vld [vmem:[%s1070 + $0xc9] sm:$0xff]
      %v1121 = vld [vmem:[%s1070 + $0xd9] sm:$0xff]
      %v1122 = vld [vmem:[%s1070 + $0xe1] sm:$0xff]
      %v1123 = vld [vmem:[%s1070 + $0xf1] sm:$0xff]
      %v1124 = vld [vmem:[%s1070 + $0xf9] sm:$0xff]
      %v1125 = vld [vmem:[%s1070 + $0x109] sm:$0xff]
      %v1126 = vld [vmem:[%s1070 + $0x111] sm:$0xff]
      %v1127 = vld [vmem:[%s1070 + $0x121] sm:$0xff]
      %v1128 = vld [vmem:[%s1070 + $0x129] sm:$0xff]
      %v1129 = vld [vmem:[%s1070 + $0x139] sm:$0xff]
      %v1130 = vld [vmem:[%s1070 + $0x141] sm:$0xff]
      %v1131 = vld [vmem:[%s1070 + $0x151] sm:$0xff]
      %v1132 = vld [vmem:[%s1070 + $0x159] sm:$0xff]
      %v1133 = vld [vmem:[%s1070 + $0x169] sm:$0xff]
      %v1134 = vld [vmem:[%s1070 + $0x171] sm:$0xff]
      %v1135 = vld [vmem:[%s1070 + $0x2] sm:$0xff]
      %v1136 = vld [vmem:[%s1070 + $0xa] sm:$0xff]
      %v1137 = vld [vmem:[%s1070 + $0x1a] sm:$0xff]
      %v1138 = vld [vmem:[%s1070 + $0x22] sm:$0xff]
      %v1139 = vld [vmem:[%s1070 + $0x32] sm:$0xff]
      %v1140 = vld [vmem:[%s1070 + $0x3a] sm:$0xff]
      %v1141 = vld [vmem:[%s1070 + $0x4a] sm:$0xff]
      %v1142 = vld [vmem:[%s1070 + $0x52] sm:$0xff]
      %v1143 = vld [vmem:[%s1070 + $0x62] sm:$0xff]
      %v1144 = vld [vmem:[%s1070 + $0x6a] sm:$0xff]
      %v1145 = vld [vmem:[%s1070 + $0x7a] sm:$0xff]
      %v1146 = vld [vmem:[%s1070 + $0x82] sm:$0xff]
      %v1147 = vld [vmem:[%s1070 + $0x92] sm:$0xff]
      %v1148 = vld [vmem:[%s1070 + $0x9a] sm:$0xff]
      %v1149 = vld [vmem:[%s1070 + $0xaa] sm:$0xff]
      %v1150 = vld [vmem:[%s1070 + $0xb2] sm:$0xff]
      %v1151 = vld [vmem:[%s1070 + $0xc2] sm:$0xff]
      %v1152 = vld [vmem:[%s1070 + $0xca] sm:$0xff]
      %v1153 = vld [vmem:[%s1070 + $0xda] sm:$0xff]
      %v1154 = vld [vmem:[%s1070 + $0xe2] sm:$0xff]
      %v1155 = vld [vmem:[%s1070 + $0xf2] sm:$0xff]
      %v1156 = vld [vmem:[%s1070 + $0xfa] sm:$0xff]
      %v1157 = vld [vmem:[%s1070 + $0x10a] sm:$0xff]
      %v1158 = vld [vmem:[%s1070 + $0x112] sm:$0xff]
      %v1159 = vld [vmem:[%s1070 + $0x122] sm:$0xff]
      %v1160 = vld [vmem:[%s1070 + $0x12a] sm:$0xff]
      %v1161 = vld [vmem:[%s1070 + $0x13a] sm:$0xff]
      %v1162 = vld [vmem:[%s1070 + $0x142] sm:$0xff]
      %v1163 = vld [vmem:[%s1070 + $0x152] sm:$0xff]
      %v1164 = vld [vmem:[%s1070 + $0x15a] sm:$0xff]
      %v1165 = vld [vmem:[%s1070 + $0x16a] sm:$0xff]
      %v1166 = vld [vmem:[%s1070 + $0x172] sm:$0xff]
      %1199 = vrot.lane.b32.xlu0 %v910, 8
      %v1200 = vpop.permute.xlu0 %1199
      %1201 = vrot.lane.b32.xlu0 %v911, 8
      %v1202 = vpop.permute.xlu0 %1201
      %1203 = vrot.lane.b32.xlu0 %v912, 8
      %v1204 = vpop.permute.xlu0 %1203
      %1205 = vrot.lane.b32.xlu0 %v913, 8
      %v1206 = vpop.permute.xlu0 %1205
      %1207 = vrot.lane.b32.xlu0 %v914, 8
      %v1208 = vpop.permute.xlu0 %1207
      %1209 = vrot.lane.b32.xlu0 %v915, 8
      %v1210 = vpop.permute.xlu0 %1209
      %1211 = vrot.lane.b32.xlu0 %v916, 8
      %v1212 = vpop.permute.xlu0 %1211
      %1213 = vrot.lane.b32.xlu0 %v917, 8
      %v1214 = vpop.permute.xlu0 %1213
      %1215 = vrot.lane.b32.xlu0 %v918, 8
      %v1216 = vpop.permute.xlu0 %1215
      %1217 = vrot.lane.b32.xlu0 %v919, 8
      %v1218 = vpop.permute.xlu0 %1217
      %1219 = vrot.lane.b32.xlu0 %v920, 8
      %v1220 = vpop.permute.xlu0 %1219
      %1221 = vrot.lane.b32.xlu0 %v921, 8
      %v1222 = vpop.permute.xlu0 %1221
      %1223 = vrot.lane.b32.xlu0 %v922, 8
      %v1224 = vpop.permute.xlu0 %1223
      %1225 = vrot.lane.b32.xlu0 %v923, 8
      %v1226 = vpop.permute.xlu0 %1225
      %1227 = vrot.lane.b32.xlu0 %v924, 8
      %v1228 = vpop.permute.xlu0 %1227
      %1229 = vrot.lane.b32.xlu0 %v925, 8
      %v1230 = vpop.permute.xlu0 %1229
      %1231 = vrot.lane.b32.xlu0 %v926, 8
      %v1232 = vpop.permute.xlu0 %1231
      %1233 = vrot.lane.b32.xlu0 %v927, 8
      %v1234 = vpop.permute.xlu0 %1233
      %1235 = vrot.lane.b32.xlu0 %v928, 8
      %v1236 = vpop.permute.xlu0 %1235
      %1237 = vrot.lane.b32.xlu0 %v929, 8
      %v1238 = vpop.permute.xlu0 %1237
      %1239 = vrot.lane.b32.xlu0 %v930, 8
      %v1240 = vpop.permute.xlu0 %1239
      %1241 = vrot.lane.b32.xlu0 %v931, 8
      %v1242 = vpop.permute.xlu0 %1241
      %1243 = vrot.lane.b32.xlu0 %v932, 8
      %v1244 = vpop.permute.xlu0 %1243
      %1245 = vrot.lane.b32.xlu0 %v933, 8
      %v1246 = vpop.permute.xlu0 %1245
      %1247 = vrot.lane.b32.xlu0 %v934, 8
      %v1248 = vpop.permute.xlu0 %1247
      %1249 = vrot.lane.b32.xlu0 %v935, 8
      %v1250 = vpop.permute.xlu0 %1249
      %1251 = vrot.lane.b32.xlu0 %v936, 8
      %v1252 = vpop.permute.xlu0 %1251
      %1253 = vrot.lane.b32.xlu0 %v937, 8
      %v1254 = vpop.permute.xlu0 %1253
      %1255 = vrot.lane.b32.xlu0 %v938, 8
      %v1256 = vpop.permute.xlu0 %1255
      %1257 = vrot.lane.b32.xlu0 %v939, 8
      %v1258 = vpop.permute.xlu0 %1257
      %1259 = vrot.lane.b32.xlu0 %v940, 8
      %v1260 = vpop.permute.xlu0 %1259
      %1261 = vrot.lane.b32.xlu0 %v941, 8
      %v1262 = vpop.permute.xlu0 %1261
      %1327 = vrot.lane.b32.xlu0 %v942, 16
      %v1328 = vpop.permute.xlu0 %1327
      %1329 = vrot.lane.b32.xlu0 %v943, 16
      %v1330 = vpop.permute.xlu0 %1329
      %1331 = vrot.lane.b32.xlu0 %v944, 16
      %v1332 = vpop.permute.xlu0 %1331
      %1333 = vrot.lane.b32.xlu0 %v945, 16
      %v1334 = vpop.permute.xlu0 %1333
      %1335 = vrot.lane.b32.xlu0 %v946, 16
      %v1336 = vpop.permute.xlu0 %1335
      %1337 = vrot.lane.b32.xlu0 %v947, 16
      %v1338 = vpop.permute.xlu0 %1337
      %1339 = vrot.lane.b32.xlu0 %v948, 16
      %v1340 = vpop.permute.xlu0 %1339
      %1341 = vrot.lane.b32.xlu0 %v949, 16
      %v1342 = vpop.permute.xlu0 %1341
      %1343 = vrot.lane.b32.xlu0 %v950, 16
      %v1344 = vpop.permute.xlu0 %1343
      %1345 = vrot.lane.b32.xlu0 %v951, 16
      %v1346 = vpop.permute.xlu0 %1345
      %1347 = vrot.lane.b32.xlu0 %v952, 16
      %v1348 = vpop.permute.xlu0 %1347
      %1349 = vrot.lane.b32.xlu0 %v953, 16
      %v1350 = vpop.permute.xlu0 %1349
      %1351 = vrot.lane.b32.xlu0 %v954, 16
      %v1352 = vpop.permute.xlu0 %1351
      %1353 = vrot.lane.b32.xlu0 %v955, 16
      %v1354 = vpop.permute.xlu0 %1353
      %1355 = vrot.lane.b32.xlu0 %v956, 16
      %v1356 = vpop.permute.xlu0 %1355
      %1357 = vrot.lane.b32.xlu0 %v957, 16
      %v1358 = vpop.permute.xlu0 %1357
      %1359 = vrot.lane.b32.xlu0 %v958, 16
      %v1360 = vpop.permute.xlu0 %1359
      %1361 = vrot.lane.b32.xlu0 %v959, 16
      %v1362 = vpop.permute.xlu0 %1361
      %1363 = vrot.lane.b32.xlu0 %v960, 16
      %v1364 = vpop.permute.xlu0 %1363
      %1365 = vrot.lane.b32.xlu0 %v961, 16
      %v1366 = vpop.permute.xlu0 %1365
      %1367 = vrot.lane.b32.xlu0 %v962, 16
      %v1368 = vpop.permute.xlu0 %1367
      %1369 = vrot.lane.b32.xlu0 %v963, 16
      %v1370 = vpop.permute.xlu0 %1369
      %1371 = vrot.lane.b32.xlu0 %v964, 16
      %v1372 = vpop.permute.xlu0 %1371
      %1373 = vrot.lane.b32.xlu0 %v965, 16
      %v1374 = vpop.permute.xlu0 %1373
      %1375 = vrot.lane.b32.xlu0 %v966, 16
      %v1376 = vpop.permute.xlu0 %1375
      %1377 = vrot.lane.b32.xlu0 %v967, 16
      %v1378 = vpop.permute.xlu0 %1377
      %1379 = vrot.lane.b32.xlu0 %v968, 16
      %v1380 = vpop.permute.xlu0 %1379
      %1381 = vrot.lane.b32.xlu0 %v969, 16
      %v1382 = vpop.permute.xlu0 %1381
      %1383 = vrot.lane.b32.xlu0 %v970, 16
      %v1384 = vpop.permute.xlu0 %1383
      %1385 = vrot.lane.b32.xlu0 %v971, 16
      %v1386 = vpop.permute.xlu0 %1385
      %1387 = vrot.lane.b32.xlu0 %v972, 16
      %v1388 = vpop.permute.xlu0 %1387
      %1389 = vrot.lane.b32.xlu0 %v973, 16
      %v1390 = vpop.permute.xlu0 %1389
      %1455 = vrot.lane.b32.xlu0 %v974, 24
      %v1456 = vpop.permute.xlu0 %1455
      %1457 = vrot.lane.b32.xlu0 %v975, 24
      %v1458 = vpop.permute.xlu0 %1457
      %1459 = vrot.lane.b32.xlu0 %v976, 24
      %v1460 = vpop.permute.xlu0 %1459
      %1461 = vrot.lane.b32.xlu0 %v977, 24
      %v1462 = vpop.permute.xlu0 %1461
      %1463 = vrot.lane.b32.xlu0 %v978, 24
      %v1464 = vpop.permute.xlu0 %1463
      %1465 = vrot.lane.b32.xlu0 %v979, 24
      %v1466 = vpop.permute.xlu0 %1465
      %1467 = vrot.lane.b32.xlu0 %v980, 24
      %v1468 = vpop.permute.xlu0 %1467
      %1469 = vrot.lane.b32.xlu0 %v981, 24
      %v1470 = vpop.permute.xlu0 %1469
      %1471 = vrot.lane.b32.xlu0 %v982, 24
      %v1472 = vpop.permute.xlu0 %1471
      %1473 = vrot.lane.b32.xlu0 %v983, 24
      %v1474 = vpop.permute.xlu0 %1473
      %1475 = vrot.lane.b32.xlu0 %v984, 24
      %v1476 = vpop.permute.xlu0 %1475
      %1477 = vrot.lane.b32.xlu0 %v985, 24
      %v1478 = vpop.permute.xlu0 %1477
      %1479 = vrot.lane.b32.xlu0 %v986, 24
      %v1480 = vpop.permute.xlu0 %1479
      %1481 = vrot.lane.b32.xlu0 %v987, 24
      %v1482 = vpop.permute.xlu0 %1481
      %1483 = vrot.lane.b32.xlu0 %v988, 24
      %v1484 = vpop.permute.xlu0 %1483
      %1485 = vrot.lane.b32.xlu0 %v989, 24
      %v1486 = vpop.permute.xlu0 %1485
      %1487 = vrot.lane.b32.xlu0 %v990, 24
      %v1488 = vpop.permute.xlu0 %1487
      %1489 = vrot.lane.b32.xlu0 %v991, 24
      %v1490 = vpop.permute.xlu0 %1489
      %1491 = vrot.lane.b32.xlu0 %v992, 24
      %v1492 = vpop.permute.xlu0 %1491
      %1493 = vrot.lane.b32.xlu0 %v993, 24
      %v1494 = vpop.permute.xlu0 %1493
      %1495 = vrot.lane.b32.xlu0 %v994, 24
      %v1496 = vpop.permute.xlu0 %1495
      %1497 = vrot.lane.b32.xlu0 %v995, 24
      %v1498 = vpop.permute.xlu0 %1497
      %1499 = vrot.lane.b32.xlu0 %v996, 24
      %v1500 = vpop.permute.xlu0 %1499
      %1501 = vrot.lane.b32.xlu0 %v997, 24
      %v1502 = vpop.permute.xlu0 %1501
      %1503 = vrot.lane.b32.xlu0 %v998, 24
      %v1504 = vpop.permute.xlu0 %1503
      %1505 = vrot.lane.b32.xlu0 %v999, 24
      %v1506 = vpop.permute.xlu0 %1505
      %1507 = vrot.lane.b32.xlu0 %v1000, 24
      %v1508 = vpop.permute.xlu0 %1507
      %1509 = vrot.lane.b32.xlu0 %v1001, 24
      %v1510 = vpop.permute.xlu0 %1509
      %1511 = vrot.lane.b32.xlu0 %v1002, 24
      %v1512 = vpop.permute.xlu0 %1511
      %1513 = vrot.lane.b32.xlu0 %v1003, 24
      %v1514 = vpop.permute.xlu0 %1513
      %1515 = vrot.lane.b32.xlu0 %v1004, 24
      %v1516 = vpop.permute.xlu0 %1515
      %1517 = vrot.lane.b32.xlu0 %v1005, 24
      %v1518 = vpop.permute.xlu0 %1517
      %1583 = vrot.lane.b32.xlu0 %v1006, 32
      %v1584 = vpop.permute.xlu0 %1583
      %1585 = vrot.lane.b32.xlu0 %v1007, 32
      %v1586 = vpop.permute.xlu0 %1585
      %1587 = vrot.lane.b32.xlu0 %v1008, 32
      %v1588 = vpop.permute.xlu0 %1587
      %1589 = vrot.lane.b32.xlu0 %v1009, 32
      %v1590 = vpop.permute.xlu0 %1589
      %1591 = vrot.lane.b32.xlu0 %v1010, 32
      %v1592 = vpop.permute.xlu0 %1591
      %1593 = vrot.lane.b32.xlu0 %v1011, 32
      %v1594 = vpop.permute.xlu0 %1593
      %1595 = vrot.lane.b32.xlu0 %v1012, 32
      %v1596 = vpop.permute.xlu0 %1595
      %1597 = vrot.lane.b32.xlu0 %v1013, 32
      %v1598 = vpop.permute.xlu0 %1597
      %1599 = vrot.lane.b32.xlu0 %v1014, 32
      %v1600 = vpop.permute.xlu0 %1599
      %1601 = vrot.lane.b32.xlu0 %v1015, 32
      %v1602 = vpop.permute.xlu0 %1601
      %1603 = vrot.lane.b32.xlu0 %v1016, 32
      %v1604 = vpop.permute.xlu0 %1603
      %1605 = vrot.lane.b32.xlu0 %v1017, 32
      %v1606 = vpop.permute.xlu0 %1605
      %1607 = vrot.lane.b32.xlu0 %v1018, 32
      %v1608 = vpop.permute.xlu0 %1607
      %1609 = vrot.lane.b32.xlu0 %v1019, 32
      %v1610 = vpop.permute.xlu0 %1609
      %1611 = vrot.lane.b32.xlu0 %v1020, 32
      %v1612 = vpop.permute.xlu0 %1611
      %1613 = vrot.lane.b32.xlu0 %v1021, 32
      %v1614 = vpop.permute.xlu0 %1613
      %1615 = vrot.lane.b32.xlu0 %v1022, 32
      %v1616 = vpop.permute.xlu0 %1615
      %1617 = vrot.lane.b32.xlu0 %v1023, 32
      %v1618 = vpop.permute.xlu0 %1617
      %1619 = vrot.lane.b32.xlu0 %v1024, 32
      %v1620 = vpop.permute.xlu0 %1619
      %1621 = vrot.lane.b32.xlu0 %v1025, 32
      %v1622 = vpop.permute.xlu0 %1621
      %1623 = vrot.lane.b32.xlu0 %v1026, 32
      %v1624 = vpop.permute.xlu0 %1623
      %1625 = vrot.lane.b32.xlu0 %v1027, 32
      %v1626 = vpop.permute.xlu0 %1625
      %1627 = vrot.lane.b32.xlu0 %v1028, 32
      %v1628 = vpop.permute.xlu0 %1627
      %1629 = vrot.lane.b32.xlu0 %v1029, 32
      %v1630 = vpop.permute.xlu0 %1629
      %1631 = vrot.lane.b32.xlu0 %v1030, 32
      %v1632 = vpop.permute.xlu0 %1631
      %1633 = vrot.lane.b32.xlu0 %v1031, 32
      %v1634 = vpop.permute.xlu0 %1633
      %1635 = vrot.lane.b32.xlu0 %v1032, 32
      %v1636 = vpop.permute.xlu0 %1635
      %1637 = vrot.lane.b32.xlu0 %v1033, 32
      %v1638 = vpop.permute.xlu0 %1637
      %1639 = vrot.lane.b32.xlu0 %v1034, 32
      %v1640 = vpop.permute.xlu0 %1639
      %1641 = vrot.lane.b32.xlu0 %v1035, 32
      %v1642 = vpop.permute.xlu0 %1641
      %1643 = vrot.lane.b32.xlu0 %v1036, 32
      %v1644 = vpop.permute.xlu0 %1643
      %1645 = vrot.lane.b32.xlu0 %v1037, 32
      %v1646 = vpop.permute.xlu0 %1645
      %1711 = vrot.lane.b32.xlu0 %v1038, 40
      %v1712 = vpop.permute.xlu0 %1711
      %1713 = vrot.lane.b32.xlu0 %v1039, 40
      %v1714 = vpop.permute.xlu0 %1713
      %1715 = vrot.lane.b32.xlu0 %v1040, 40
      %v1716 = vpop.permute.xlu0 %1715
      %1717 = vrot.lane.b32.xlu0 %v1041, 40
      %v1718 = vpop.permute.xlu0 %1717
      %1719 = vrot.lane.b32.xlu0 %v1042, 40
      %v1720 = vpop.permute.xlu0 %1719
      %1721 = vrot.lane.b32.xlu0 %v1043, 40
      %v1722 = vpop.permute.xlu0 %1721
      %1723 = vrot.lane.b32.xlu0 %v1044, 40
      %v1724 = vpop.permute.xlu0 %1723
      %1725 = vrot.lane.b32.xlu0 %v1045, 40
      %v1726 = vpop.permute.xlu0 %1725
      %1727 = vrot.lane.b32.xlu0 %v1046, 40
      %v1728 = vpop.permute.xlu0 %1727
      %1729 = vrot.lane.b32.xlu0 %v1047, 40
      %v1730 = vpop.permute.xlu0 %1729
      %1731 = vrot.lane.b32.xlu0 %v1048, 40
      %v1732 = vpop.permute.xlu0 %1731
      %1733 = vrot.lane.b32.xlu0 %v1049, 40
      %v1734 = vpop.permute.xlu0 %1733
      %1735 = vrot.lane.b32.xlu0 %v1050, 40
      %v1736 = vpop.permute.xlu0 %1735
      %1737 = vrot.lane.b32.xlu0 %v1051, 40
      %v1738 = vpop.permute.xlu0 %1737
      %1739 = vrot.lane.b32.xlu0 %v1052, 40
      %v1740 = vpop.permute.xlu0 %1739
      %1741 = vrot.lane.b32.xlu0 %v1053, 40
      %v1742 = vpop.permute.xlu0 %1741
      %1743 = vrot.lane.b32.xlu0 %v1054, 40
      %v1744 = vpop.permute.xlu0 %1743
      %1745 = vrot.lane.b32.xlu0 %v1055, 40
      %v1746 = vpop.permute.xlu0 %1745
      %1747 = vrot.lane.b32.xlu0 %v1056, 40
      %v1748 = vpop.permute.xlu0 %1747
      %1749 = vrot.lane.b32.xlu0 %v1057, 40
      %v1750 = vpop.permute.xlu0 %1749
      %1751 = vrot.lane.b32.xlu0 %v1058, 40
      %v1752 = vpop.permute.xlu0 %1751
      %1753 = vrot.lane.b32.xlu0 %v1059, 40
      %v1754 = vpop.permute.xlu0 %1753
      %1755 = vrot.lane.b32.xlu0 %v1060, 40
      %v1756 = vpop.permute.xlu0 %1755
      %1757 = vrot.lane.b32.xlu0 %v1061, 40
      %v1758 = vpop.permute.xlu0 %1757
      %1759 = vrot.lane.b32.xlu0 %v1062, 40
      %v1760 = vpop.permute.xlu0 %1759
      %1761 = vrot.lane.b32.xlu0 %v1063, 40
      %v1762 = vpop.permute.xlu0 %1761
      %1763 = vrot.lane.b32.xlu0 %v1064, 40
      %v1764 = vpop.permute.xlu0 %1763
      %1765 = vrot.lane.b32.xlu0 %v1065, 40
      %v1766 = vpop.permute.xlu0 %1765
      %1767 = vrot.lane.b32.xlu0 %v1066, 40
      %v1768 = vpop.permute.xlu0 %1767
      %1769 = vrot.lane.b32.xlu0 %v1067, 40
      %v1770 = vpop.permute.xlu0 %1769
      %1771 = vrot.lane.b32.xlu0 %v1068, 40
      %v1772 = vpop.permute.xlu0 %1771
      %1773 = vrot.lane.b32.xlu0 %v1069, 40
      %v1774 = vpop.permute.xlu0 %1773
      %1839 = vrot.lane.b32.xlu0 %v1071, 48
      %v1840 = vpop.permute.xlu0 %1839
      %1841 = vrot.lane.b32.xlu0 %v1072, 48
      %v1842 = vpop.permute.xlu0 %1841
      %1843 = vrot.lane.b32.xlu0 %v1073, 48
      %v1844 = vpop.permute.xlu0 %1843
      %1845 = vrot.lane.b32.xlu0 %v1074, 48
      %v1846 = vpop.permute.xlu0 %1845
      %1847 = vrot.lane.b32.xlu0 %v1075, 48
      %v1848 = vpop.permute.xlu0 %1847
      %1849 = vrot.lane.b32.xlu0 %v1076, 48
      %v1850 = vpop.permute.xlu0 %1849
      %1851 = vrot.lane.b32.xlu0 %v1077, 48
      %v1852 = vpop.permute.xlu0 %1851
      %1853 = vrot.lane.b32.xlu0 %v1078, 48
      %v1854 = vpop.permute.xlu0 %1853
      %1855 = vrot.lane.b32.xlu0 %v1079, 48
      %v1856 = vpop.permute.xlu0 %1855
      %1857 = vrot.lane.b32.xlu0 %v1080, 48
      %v1858 = vpop.permute.xlu0 %1857
      %1859 = vrot.lane.b32.xlu0 %v1081, 48
      %v1860 = vpop.permute.xlu0 %1859
      %1861 = vrot.lane.b32.xlu0 %v1082, 48
      %v1862 = vpop.permute.xlu0 %1861
      %1863 = vrot.lane.b32.xlu0 %v1083, 48
      %v1864 = vpop.permute.xlu0 %1863
      %1865 = vrot.lane.b32.xlu0 %v1084, 48
      %v1866 = vpop.permute.xlu0 %1865
      %1867 = vrot.lane.b32.xlu0 %v1085, 48
      %v1868 = vpop.permute.xlu0 %1867
      %1869 = vrot.lane.b32.xlu0 %v1086, 48
      %v1870 = vpop.permute.xlu0 %1869
      %1871 = vrot.lane.b32.xlu0 %v1087, 48
      %v1872 = vpop.permute.xlu0 %1871
      %1873 = vrot.lane.b32.xlu0 %v1088, 48
      %v1874 = vpop.permute.xlu0 %1873
      %1875 = vrot.lane.b32.xlu0 %v1089, 48
      %v1876 = vpop.permute.xlu0 %1875
      %1877 = vrot.lane.b32.xlu0 %v1090, 48
      %v1878 = vpop.permute.xlu0 %1877
      %1879 = vrot.lane.b32.xlu0 %v1091, 48
      %v1880 = vpop.permute.xlu0 %1879
      %1881 = vrot.lane.b32.xlu0 %v1092, 48
      %v1882 = vpop.permute.xlu0 %1881
      %1883 = vrot.lane.b32.xlu0 %v1093, 48
      %v1884 = vpop.permute.xlu0 %1883
      %1885 = vrot.lane.b32.xlu0 %v1094, 48
      %v1886 = vpop.permute.xlu0 %1885
      %1887 = vrot.lane.b32.xlu0 %v1095, 48
      %v1888 = vpop.permute.xlu0 %1887
      %1889 = vrot.lane.b32.xlu0 %v1096, 48
      %v1890 = vpop.permute.xlu0 %1889
      %1891 = vrot.lane.b32.xlu0 %v1097, 48
      %v1892 = vpop.permute.xlu0 %1891
      %1893 = vrot.lane.b32.xlu0 %v1098, 48
      %v1894 = vpop.permute.xlu0 %1893
      %1895 = vrot.lane.b32.xlu0 %v1099, 48
      %v1896 = vpop.permute.xlu0 %1895
      %1897 = vrot.lane.b32.xlu0 %v1100, 48
      %v1898 = vpop.permute.xlu0 %1897
      %1899 = vrot.lane.b32.xlu0 %v1101, 48
      %v1900 = vpop.permute.xlu0 %1899
      %1901 = vrot.lane.b32.xlu0 %v1102, 48
      %v1902 = vpop.permute.xlu0 %1901
      %1967 = vrot.lane.b32.xlu0 %v1103, 56
      %v1968 = vpop.permute.xlu0 %1967
      %1969 = vrot.lane.b32.xlu0 %v1104, 56
      %v1970 = vpop.permute.xlu0 %1969
      %1971 = vrot.lane.b32.xlu0 %v1105, 56
      %v1972 = vpop.permute.xlu0 %1971
      %1973 = vrot.lane.b32.xlu0 %v1106, 56
      %v1974 = vpop.permute.xlu0 %1973
      %1975 = vrot.lane.b32.xlu0 %v1107, 56
      %v1976 = vpop.permute.xlu0 %1975
      %1977 = vrot.lane.b32.xlu0 %v1108, 56
      %v1978 = vpop.permute.xlu0 %1977
      %1979 = vrot.lane.b32.xlu0 %v1109, 56
      %v1980 = vpop.permute.xlu0 %1979
      %1981 = vrot.lane.b32.xlu0 %v1110, 56
      %v1982 = vpop.permute.xlu0 %1981
      %1983 = vrot.lane.b32.xlu0 %v1111, 56
      %v1984 = vpop.permute.xlu0 %1983
      %1985 = vrot.lane.b32.xlu0 %v1112, 56
      %v1986 = vpop.permute.xlu0 %1985
      %1987 = vrot.lane.b32.xlu0 %v1113, 56
      %v1988 = vpop.permute.xlu0 %1987
      %1989 = vrot.lane.b32.xlu0 %v1114, 56
      %v1990 = vpop.permute.xlu0 %1989
      %1991 = vrot.lane.b32.xlu0 %v1115, 56
      %v1992 = vpop.permute.xlu0 %1991
      %1993 = vrot.lane.b32.xlu0 %v1116, 56
      %v1994 = vpop.permute.xlu0 %1993
      %1995 = vrot.lane.b32.xlu0 %v1117, 56
      %v1996 = vpop.permute.xlu0 %1995
      %1997 = vrot.lane.b32.xlu0 %v1118, 56
      %v1998 = vpop.permute.xlu0 %1997
      %1999 = vrot.lane.b32.xlu0 %v1119, 56
      %v2000 = vpop.permute.xlu0 %1999
      %2001 = vrot.lane.b32.xlu0 %v1120, 56
      %v2002 = vpop.permute.xlu0 %2001
      %2003 = vrot.lane.b32.xlu0 %v1121, 56
      %v2004 = vpop.permute.xlu0 %2003
      %2005 = vrot.lane.b32.xlu0 %v1122, 56
      %v2006 = vpop.permute.xlu0 %2005
      %2007 = vrot.lane.b32.xlu0 %v1123, 56
      %v2008 = vpop.permute.xlu0 %2007
      %2009 = vrot.lane.b32.xlu0 %v1124, 56
      %v2010 = vpop.permute.xlu0 %2009
      %2011 = vrot.lane.b32.xlu0 %v1125, 56
      %v2012 = vpop.permute.xlu0 %2011
      %2013 = vrot.lane.b32.xlu0 %v1126, 56
      %v2014 = vpop.permute.xlu0 %2013
      %2015 = vrot.lane.b32.xlu0 %v1127, 56
      %v2016 = vpop.permute.xlu0 %2015
      %2017 = vrot.lane.b32.xlu0 %v1128, 56
      %v2018 = vpop.permute.xlu0 %2017
      %2019 = vrot.lane.b32.xlu0 %v1129, 56
      %v2020 = vpop.permute.xlu0 %2019
      %2021 = vrot.lane.b32.xlu0 %v1130, 56
      %v2022 = vpop.permute.xlu0 %2021
      %2023 = vrot.lane.b32.xlu0 %v1131, 56
      %v2024 = vpop.permute.xlu0 %2023
      %2025 = vrot.lane.b32.xlu0 %v1132, 56
      %v2026 = vpop.permute.xlu0 %2025
      %2027 = vrot.lane.b32.xlu0 %v1133, 56
      %v2028 = vpop.permute.xlu0 %2027
      %2029 = vrot.lane.b32.xlu0 %v1134, 56
      %v2030 = vpop.permute.xlu0 %2029
      %2095 = vrot.lane.b32.xlu0 %v1135, 64
      %v2096 = vpop.permute.xlu0 %2095
      %2097 = vrot.lane.b32.xlu0 %v1136, 64
      %v2098 = vpop.permute.xlu0 %2097
      %2099 = vrot.lane.b32.xlu0 %v1137, 64
      %v2100 = vpop.permute.xlu0 %2099
      %2101 = vrot.lane.b32.xlu0 %v1138, 64
      %v2102 = vpop.permute.xlu0 %2101
      %2103 = vrot.lane.b32.xlu0 %v1139, 64
      %v2104 = vpop.permute.xlu0 %2103
      %2105 = vrot.lane.b32.xlu0 %v1140, 64
      %v2106 = vpop.permute.xlu0 %2105
      %2107 = vrot.lane.b32.xlu0 %v1141, 64
      %v2108 = vpop.permute.xlu0 %2107
      %2109 = vrot.lane.b32.xlu0 %v1142, 64
      %v2110 = vpop.permute.xlu0 %2109
      %2111 = vrot.lane.b32.xlu0 %v1143, 64
      %v2112 = vpop.permute.xlu0 %2111
      %2113 = vrot.lane.b32.xlu0 %v1144, 64
      %v2114 = vpop.permute.xlu0 %2113
      %2115 = vrot.lane.b32.xlu0 %v1145, 64
      %v2116 = vpop.permute.xlu0 %2115
      %2117 = vrot.lane.b32.xlu0 %v1146, 64
      %v2118 = vpop.permute.xlu0 %2117
      %2119 = vrot.lane.b32.xlu0 %v1147, 64
      %v2120 = vpop.permute.xlu0 %2119
      %2121 = vrot.lane.b32.xlu0 %v1148, 64
      %v2122 = vpop.permute.xlu0 %2121
      %2123 = vrot.lane.b32.xlu0 %v1149, 64
      %v2124 = vpop.permute.xlu0 %2123
      %2125 = vrot.lane.b32.xlu0 %v1150, 64
      %v2126 = vpop.permute.xlu0 %2125
      %2127 = vrot.lane.b32.xlu0 %v1151, 64
      %v2128 = vpop.permute.xlu0 %2127
      %2129 = vrot.lane.b32.xlu0 %v1152, 64
      %v2130 = vpop.permute.xlu0 %2129
      %2131 = vrot.lane.b32.xlu0 %v1153, 64
      %v2132 = vpop.permute.xlu0 %2131
      %2133 = vrot.lane.b32.xlu0 %v1154, 64
      %v2134 = vpop.permute.xlu0 %2133
      %2135 = vrot.lane.b32.xlu0 %v1155, 64
      %v2136 = vpop.permute.xlu0 %2135
      %2137 = vrot.lane.b32.xlu0 %v1156, 64
      %v2138 = vpop.permute.xlu0 %2137
      %2139 = vrot.lane.b32.xlu0 %v1157, 64
      %v2140 = vpop.permute.xlu0 %2139
      %2141 = vrot.lane.b32.xlu0 %v1158, 64
      %v2142 = vpop.permute.xlu0 %2141
      %2143 = vrot.lane.b32.xlu0 %v1159, 64
      %v2144 = vpop.permute.xlu0 %2143
      %2145 = vrot.lane.b32.xlu0 %v1160, 64
      %v2146 = vpop.permute.xlu0 %2145
      %2147 = vrot.lane.b32.xlu0 %v1161, 64
      %v2148 = vpop.permute.xlu0 %2147
      %2149 = vrot.lane.b32.xlu0 %v1162, 64
      %v2150 = vpop.permute.xlu0 %2149
      %2151 = vrot.lane.b32.xlu0 %v1163, 64
      %v2152 = vpop.permute.xlu0 %2151
      %2153 = vrot.lane.b32.xlu0 %v1164, 64
      %v2154 = vpop.permute.xlu0 %2153
      %2155 = vrot.lane.b32.xlu0 %v1165, 64
      %v2156 = vpop.permute.xlu0 %2155
      %2157 = vrot.lane.b32.xlu0 %v1166, 64
      %v2158 = vpop.permute.xlu0 %2157
      %v2191 = vsel %vm596, %v878, %v1200
      %v2192 = vsel %vm596, %v879, %v1202
      %v2193 = vsel %vm596, %v880, %v1204
      %v2194 = vsel %vm596, %v881, %v1206
      %v2195 = vsel %vm596, %v882, %v1208
      %v2196 = vsel %vm596, %v883, %v1210
      %v2197 = vsel %vm596, %v884, %v1212
      %v2198 = vsel %vm596, %v885, %v1214
      %v2199 = vsel %vm596, %v886, %v1216
      %v2200 = vsel %vm596, %v887, %v1218
      %v2201 = vsel %vm596, %v888, %v1220
      %v2202 = vsel %vm596, %v889, %v1222
      %v2203 = vsel %vm596, %v890, %v1224
      %v2204 = vsel %vm596, %v891, %v1226
      %v2205 = vsel %vm596, %v892, %v1228
      %v2206 = vsel %vm596, %v893, %v1230
      %v2207 = vsel %vm596, %v894, %v1232
      %v2208 = vsel %vm596, %v895, %v1234
      %v2209 = vsel %vm596, %v896, %v1236
      %v2210 = vsel %vm596, %v897, %v1238
      %v2211 = vsel %vm596, %v898, %v1240
      %v2212 = vsel %vm596, %v899, %v1242
      %v2213 = vsel %vm596, %v900, %v1244
      %v2214 = vsel %vm596, %v901, %v1246
      %v2215 = vsel %vm596, %v902, %v1248
      %v2216 = vsel %vm596, %v903, %v1250
      %v2217 = vsel %vm596, %v904, %v1252
      %v2218 = vsel %vm596, %v905, %v1254
      %v2219 = vsel %vm596, %v906, %v1256
      %v2220 = vsel %vm596, %v907, %v1258
      %v2221 = vsel %vm596, %v908, %v1260
      %v2222 = vsel %vm596, %v909, %v1262
      %vm2223 = vcmask 130048
      %v2224 = vsel %vm2223, %v2191, %v1328
      %v2225 = vsel %vm2223, %v2192, %v1330
      %v2226 = vsel %vm2223, %v2193, %v1332
      %v2227 = vsel %vm2223, %v2194, %v1334
      %v2228 = vsel %vm2223, %v2195, %v1336
      %v2229 = vsel %vm2223, %v2196, %v1338
      %v2230 = vsel %vm2223, %v2197, %v1340
      %v2231 = vsel %vm2223, %v2198, %v1342
      %v2232 = vsel %vm2223, %v2199, %v1344
      %v2233 = vsel %vm2223, %v2200, %v1346
      %v2234 = vsel %vm2223, %v2201, %v1348
      %v2235 = vsel %vm2223, %v2202, %v1350
      %v2236 = vsel %vm2223, %v2203, %v1352
      %v2237 = vsel %vm2223, %v2204, %v1354
      %v2238 = vsel %vm2223, %v2205, %v1356
      %v2239 = vsel %vm2223, %v2206, %v1358
      %v2240 = vsel %vm2223, %v2207, %v1360
      %v2241 = vsel %vm2223, %v2208, %v1362
      %v2242 = vsel %vm2223, %v2209, %v1364
      %v2243 = vsel %vm2223, %v2210, %v1366
      %v2244 = vsel %vm2223, %v2211, %v1368
      %v2245 = vsel %vm2223, %v2212, %v1370
      %v2246 = vsel %vm2223, %v2213, %v1372
      %v2247 = vsel %vm2223, %v2214, %v1374
      %v2248 = vsel %vm2223, %v2215, %v1376
      %v2249 = vsel %vm2223, %v2216, %v1378
      %v2250 = vsel %vm2223, %v2217, %v1380
      %v2251 = vsel %vm2223, %v2218, %v1382
      %v2252 = vsel %vm2223, %v2219, %v1384
      %v2253 = vsel %vm2223, %v2220, %v1386
      %v2254 = vsel %vm2223, %v2221, %v1388
      %v2255 = vsel %vm2223, %v2222, %v1390
      %vm2256 = vcmask 195584
      %v2257 = vsel %vm2256, %v2224, %v1456
      %v2258 = vsel %vm2256, %v2225, %v1458
      %v2259 = vsel %vm2256, %v2226, %v1460
      %v2260 = vsel %vm2256, %v2227, %v1462
      %v2261 = vsel %vm2256, %v2228, %v1464
      %v2262 = vsel %vm2256, %v2229, %v1466
      %v2263 = vsel %vm2256, %v2230, %v1468
      %v2264 = vsel %vm2256, %v2231, %v1470
      %v2265 = vsel %vm2256, %v2232, %v1472
      %v2266 = vsel %vm2256, %v2233, %v1474
      %v2267 = vsel %vm2256, %v2234, %v1476
      %v2268 = vsel %vm2256, %v2235, %v1478
      %v2269 = vsel %vm2256, %v2236, %v1480
      %v2270 = vsel %vm2256, %v2237, %v1482
      %v2271 = vsel %vm2256, %v2238, %v1484
      %v2272 = vsel %vm2256, %v2239, %v1486
      %v2273 = vsel %vm2256, %v2240, %v1488
      %v2274 = vsel %vm2256, %v2241, %v1490
      %v2275 = vsel %vm2256, %v2242, %v1492
      %v2276 = vsel %vm2256, %v2243, %v1494
      %v2277 = vsel %vm2256, %v2244, %v1496
      %v2278 = vsel %vm2256, %v2245, %v1498
      %v2279 = vsel %vm2256, %v2246, %v1500
      %v2280 = vsel %vm2256, %v2247, %v1502
      %v2281 = vsel %vm2256, %v2248, %v1504
      %v2282 = vsel %vm2256, %v2249, %v1506
      %v2283 = vsel %vm2256, %v2250, %v1508
      %v2284 = vsel %vm2256, %v2251, %v1510
      %v2285 = vsel %vm2256, %v2252, %v1512
      %v2286 = vsel %vm2256, %v2253, %v1514
      %v2287 = vsel %vm2256, %v2254, %v1516
      %v2288 = vsel %vm2256, %v2255, %v1518
      %vm2289 = vcmask 261120
      %v2290 = vsel %vm2289, %v2257, %v1584
      %v2291 = vsel %vm2289, %v2258, %v1586
      %v2292 = vsel %vm2289, %v2259, %v1588
      %v2293 = vsel %vm2289, %v2260, %v1590
      %v2294 = vsel %vm2289, %v2261, %v1592
      %v2295 = vsel %vm2289, %v2262, %v1594
      %v2296 = vsel %vm2289, %v2263, %v1596
      %v2297 = vsel %vm2289, %v2264, %v1598
      %v2298 = vsel %vm2289, %v2265, %v1600
      %v2299 = vsel %vm2289, %v2266, %v1602
      %v2300 = vsel %vm2289, %v2267, %v1604
      %v2301 = vsel %vm2289, %v2268, %v1606
      %v2302 = vsel %vm2289, %v2269, %v1608
      %v2303 = vsel %vm2289, %v2270, %v1610
      %v2304 = vsel %vm2289, %v2271, %v1612
      %v2305 = vsel %vm2289, %v2272, %v1614
      %v2306 = vsel %vm2289, %v2273, %v1616
      %v2307 = vsel %vm2289, %v2274, %v1618
      %v2308 = vsel %vm2289, %v2275, %v1620
      %v2309 = vsel %vm2289, %v2276, %v1622
      %v2310 = vsel %vm2289, %v2277, %v1624
      %v2311 = vsel %vm2289, %v2278, %v1626
      %v2312 = vsel %vm2289, %v2279, %v1628
      %v2313 = vsel %vm2289, %v2280, %v1630
      %v2314 = vsel %vm2289, %v2281, %v1632
      %v2315 = vsel %vm2289, %v2282, %v1634
      %v2316 = vsel %vm2289, %v2283, %v1636
      %v2317 = vsel %vm2289, %v2284, %v1638
      %v2318 = vsel %vm2289, %v2285, %v1640
      %v2319 = vsel %vm2289, %v2286, %v1642
      %v2320 = vsel %vm2289, %v2287, %v1644
      %v2321 = vsel %vm2289, %v2288, %v1646
      %vm2322 = vcmask 326656
      %v2323 = vsel %vm2322, %v2290, %v1712
      %v2324 = vsel %vm2322, %v2291, %v1714
      %v2325 = vsel %vm2322, %v2292, %v1716
      %v2326 = vsel %vm2322, %v2293, %v1718
      %v2327 = vsel %vm2322, %v2294, %v1720
      %v2328 = vsel %vm2322, %v2295, %v1722
      %v2329 = vsel %vm2322, %v2296, %v1724
      %v2330 = vsel %vm2322, %v2297, %v1726
      %v2331 = vsel %vm2322, %v2298, %v1728
      %v2332 = vsel %vm2322, %v2299, %v1730
      %v2333 = vsel %vm2322, %v2300, %v1732
      %v2334 = vsel %vm2322, %v2301, %v1734
      %v2335 = vsel %vm2322, %v2302, %v1736
      %v2336 = vsel %vm2322, %v2303, %v1738
      %v2337 = vsel %vm2322, %v2304, %v1740
      %v2338 = vsel %vm2322, %v2305, %v1742
      %v2339 = vsel %vm2322, %v2306, %v1744
      %v2340 = vsel %vm2322, %v2307, %v1746
      %v2341 = vsel %vm2322, %v2308, %v1748
      %v2342 = vsel %vm2322, %v2309, %v1750
      %v2343 = vsel %vm2322, %v2310, %v1752
      %v2344 = vsel %vm2322, %v2311, %v1754
      %v2345 = vsel %vm2322, %v2312, %v1756
      %v2346 = vsel %vm2322, %v2313, %v1758
      %v2347 = vsel %vm2322, %v2314, %v1760
      %v2348 = vsel %vm2322, %v2315, %v1762
      %v2349 = vsel %vm2322, %v2316, %v1764
      %v2350 = vsel %vm2322, %v2317, %v1766
      %v2351 = vsel %vm2322, %v2318, %v1768
      %v2352 = vsel %vm2322, %v2319, %v1770
      %v2353 = vsel %vm2322, %v2320, %v1772
      %v2354 = vsel %vm2322, %v2321, %v1774
      %vm2355 = vcmask 392192
      %v2356 = vsel %vm2355, %v2323, %v1840
      %v2357 = vsel %vm2355, %v2324, %v1842
      %v2358 = vsel %vm2355, %v2325, %v1844
      %v2359 = vsel %vm2355, %v2326, %v1846
      %v2360 = vsel %vm2355, %v2327, %v1848
      %v2361 = vsel %vm2355, %v2328, %v1850
      %v2362 = vsel %vm2355, %v2329, %v1852
      %v2363 = vsel %vm2355, %v2330, %v1854
      %v2364 = vsel %vm2355, %v2331, %v1856
      %v2365 = vsel %vm2355, %v2332, %v1858
      %v2366 = vsel %vm2355, %v2333, %v1860
      %v2367 = vsel %vm2355, %v2334, %v1862
      %v2368 = vsel %vm2355, %v2335, %v1864
      %v2369 = vsel %vm2355, %v2336, %v1866
      %v2370 = vsel %vm2355, %v2337, %v1868
      %v2371 = vsel %vm2355, %v2338, %v1870
      %v2372 = vsel %vm2355, %v2339, %v1872
      %v2373 = vsel %vm2355, %v2340, %v1874
      %v2374 = vsel %vm2355, %v2341, %v1876
      %v2375 = vsel %vm2355, %v2342, %v1878
      %v2376 = vsel %vm2355, %v2343, %v1880
      %v2377 = vsel %vm2355, %v2344, %v1882
      %v2378 = vsel %vm2355, %v2345, %v1884
      %v2379 = vsel %vm2355, %v2346, %v1886
      %v2380 = vsel %vm2355, %v2347, %v1888
      %v2381 = vsel %vm2355, %v2348, %v1890
      %v2382 = vsel %vm2355, %v2349, %v1892
      %v2383 = vsel %vm2355, %v2350, %v1894
      %v2384 = vsel %vm2355, %v2351, %v1896
      %v2385 = vsel %vm2355, %v2352, %v1898
      %v2386 = vsel %vm2355, %v2353, %v1900
      %v2387 = vsel %vm2355, %v2354, %v1902
      %vm2388 = vcmask 457728
      %v2389 = vsel %vm2388, %v2356, %v1968
      %v2390 = vsel %vm2388, %v2357, %v1970
      %v2391 = vsel %vm2388, %v2358, %v1972
      %v2392 = vsel %vm2388, %v2359, %v1974
      %v2393 = vsel %vm2388, %v2360, %v1976
      %v2394 = vsel %vm2388, %v2361, %v1978
      %v2395 = vsel %vm2388, %v2362, %v1980
      %v2396 = vsel %vm2388, %v2363, %v1982
      %v2397 = vsel %vm2388, %v2364, %v1984
      %v2398 = vsel %vm2388, %v2365, %v1986
      %v2399 = vsel %vm2388, %v2366, %v1988
      %v2400 = vsel %vm2388, %v2367, %v1990
      %v2401 = vsel %vm2388, %v2368, %v1992
      %v2402 = vsel %vm2388, %v2369, %v1994
      %v2403 = vsel %vm2388, %v2370, %v1996
      %v2404 = vsel %vm2388, %v2371, %v1998
      %v2405 = vsel %vm2388, %v2372, %v2000
      %v2406 = vsel %vm2388, %v2373, %v2002
      %v2407 = vsel %vm2388, %v2374, %v2004
      %v2408 = vsel %vm2388, %v2375, %v2006
      %v2409 = vsel %vm2388, %v2376, %v2008
      %v2410 = vsel %vm2388, %v2377, %v2010
      %v2411 = vsel %vm2388, %v2378, %v2012
      %v2412 = vsel %vm2388, %v2379, %v2014
      %v2413 = vsel %vm2388, %v2380, %v2016
      %v2414 = vsel %vm2388, %v2381, %v2018
      %v2415 = vsel %vm2388, %v2382, %v2020
      %v2416 = vsel %vm2388, %v2383, %v2022
      %v2417 = vsel %vm2388, %v2384, %v2024
      %v2418 = vsel %vm2388, %v2385, %v2026
      %v2419 = vsel %vm2388, %v2386, %v2028
      %v2420 = vsel %vm2388, %v2387, %v2030
      %v2421 = vsel %vm383, %v2389, %v2096
      %v2422 = vsel %vm383, %v2390, %v2098
      %v2423 = vsel %vm383, %v2391, %v2100
      %v2424 = vsel %vm383, %v2392, %v2102
      %v2425 = vsel %vm383, %v2393, %v2104
      %v2426 = vsel %vm383, %v2394, %v2106
      %v2427 = vsel %vm383, %v2395, %v2108
      %v2428 = vsel %vm383, %v2396, %v2110
      %v2429 = vsel %vm383, %v2397, %v2112
      %v2430 = vsel %vm383, %v2398, %v2114
      %v2431 = vsel %vm383, %v2399, %v2116
      %v2432 = vsel %vm383, %v2400, %v2118
      %v2433 = vsel %vm383, %v2401, %v2120
      %v2434 = vsel %vm383, %v2402, %v2122
      %v2435 = vsel %vm383, %v2403, %v2124
      %v2436 = vsel %vm383, %v2404, %v2126
      %v2437 = vsel %vm383, %v2405, %v2128
      %v2438 = vsel %vm383, %v2406, %v2130
      %v2439 = vsel %vm383, %v2407, %v2132
      %v2440 = vsel %vm383, %v2408, %v2134
      %v2441 = vsel %vm383, %v2409, %v2136
      %v2442 = vsel %vm383, %v2410, %v2138
      %v2443 = vsel %vm383, %v2411, %v2140
      %v2444 = vsel %vm383, %v2412, %v2142
      %v2445 = vsel %vm383, %v2413, %v2144
      %v2446 = vsel %vm383, %v2414, %v2146
      %v2447 = vsel %vm383, %v2415, %v2148
      %v2448 = vsel %vm383, %v2416, %v2150
      %v2449 = vsel %vm383, %v2417, %v2152
      %v2450 = vsel %vm383, %v2418, %v2154
      %v2451 = vsel %vm383, %v2419, %v2156
      %v2452 = vsel %vm383, %v2420, %v2158
      %v2453 = vld [vmem:[%s3] sm:$0xff]
      %v2454 = vld [vmem:[%s3 + $0x8] sm:$0xff]
      %v2455 = vld [vmem:[%s3 + $0x10] sm:$0xff]
      %v2456 = vld [vmem:[%s3 + $0x18] sm:$0xff]
      %v2457 = vld [vmem:[%s3 + $0x20] sm:$0xff]
      %v2458 = vld [vmem:[%s3 + $0x28] sm:$0xff]
      %v2459 = vld [vmem:[%s3 + $0x30] sm:$0xff]
      %v2460 = vld [vmem:[%s3 + $0x38] sm:$0xff]
      %v2461 = vld [vmem:[%s3 + $0x40] sm:$0xff]
      %vm2462 = vcmask 588800
      %v2464 = vsel %vm2462, %v2421, 0
      %v2467 = vsel %vm2462, %v2422, 0
      %v2470 = vsel %vm2462, %v2423, 0
      %v2473 = vsel %vm2462, %v2424, 0
      %v2476 = vsel %vm2462, %v2425, 0
      %v2479 = vsel %vm2462, %v2426, 0
      %v2482 = vsel %vm2462, %v2427, 0
      %v2485 = vsel %vm2462, %v2428, 0
      %v2488 = vsel %vm2462, %v2429, 0
      %v2491 = vsel %vm2462, %v2430, 0
      %v2494 = vsel %vm2462, %v2431, 0
      %v2497 = vsel %vm2462, %v2432, 0
      %v2500 = vsel %vm2462, %v2433, 0
      %v2503 = vsel %vm2462, %v2434, 0
      %v2506 = vsel %vm2462, %v2435, 0
      %v2509 = vsel %vm2462, %v2436, 0
      %v2512 = vsel %vm2462, %v2437, 0
      %v2515 = vsel %vm2462, %v2438, 0
      %v2518 = vsel %vm2462, %v2439, 0
      %v2521 = vsel %vm2462, %v2440, 0
      %v2524 = vsel %vm2462, %v2441, 0
      %v2527 = vsel %vm2462, %v2442, 0
      %v2530 = vsel %vm2462, %v2443, 0
      %v2533 = vsel %vm2462, %v2444, 0
      %v2536 = vsel %vm2462, %v2445, 0
      %v2539 = vsel %vm2462, %v2446, 0
      %v2542 = vsel %vm2462, %v2447, 0
      %v2545 = vsel %vm2462, %v2448, 0
      %v2548 = vsel %vm2462, %v2449, 0
      %v2551 = vsel %vm2462, %v2450, 0
      %v2554 = vsel %vm2462, %v2451, 0
      %v2557 = vsel %vm2462, %v2452, 0
      %2559 = vmatpush.msra.mxu0 0.0
      %2560 = vmatpush.msra.mxu0 0.0
      %2561 = vmatpush.msra.mxu0 0.0
      %2562 = vmatpush.msra.mxu0 0.0
      %2563 = vmatpush.msra.mxu0 0.0
      %2564 = vmatpush.msra.mxu0 0.0
      %2565 = vmatpush.msra.mxu0 0.0
      %2566 = vmatpush.msra.mxu0 %v2461
      %2567 = vmatpush.msra.mxu0 %v2460
      %2568 = vmatpush.msra.mxu0 %v2459
      %2569 = vmatpush.msra.mxu0 %v2458
      %2570 = vmatpush.msra.mxu0 %v2457
      %2571 = vmatpush.msra.mxu0 %v2456
      %2572 = vmatpush.msra.mxu0 %v2455
      %2573 = vmatpush.msra.mxu0 %v2454
      %2574 = vmatpush.msra.mxu0 %v2453
      %2575 = vmatmul.f32.gmra.mxu0 %v2464
      %v2576 = vpop.f32.mrf.mxu0
      %v2577 = vadd.f32 0.0, %v2576
      %2578 = vmatmul.f32.gmra.mxu0 %v2467
      %v2579 = vpop.f32.mrf.mxu0
      %v2580 = vadd.f32 0.0, %v2579
      %2581 = vmatmul.f32.gmra.mxu0 %v2470
      %v2582 = vpop.f32.mrf.mxu0
      %v2583 = vadd.f32 0.0, %v2582
      %2584 = vmatmul.f32.gmra.mxu0 %v2473
      %v2585 = vpop.f32.mrf.mxu0
      %v2586 = vadd.f32 0.0, %v2585
      %2587 = vmatmul.f32.gmra.mxu0 %v2476
      %v2588 = vpop.f32.mrf.mxu0
      %v2589 = vadd.f32 0.0, %v2588
      %2590 = vmatmul.f32.gmra.mxu0 %v2479
      %v2591 = vpop.f32.mrf.mxu0
      %v2592 = vadd.f32 0.0, %v2591
      %2593 = vmatmul.f32.gmra.mxu0 %v2482
      %v2594 = vpop.f32.mrf.mxu0
      %v2595 = vadd.f32 0.0, %v2594
      %2596 = vmatmul.f32.gmra.mxu0 %v2485
      %v2597 = vpop.f32.mrf.mxu0
      %v2598 = vadd.f32 0.0, %v2597
      %2599 = vmatmul.f32.gmra.mxu0 %v2488
      %v2600 = vpop.f32.mrf.mxu0
      %v2601 = vadd.f32 0.0, %v2600
      %2602 = vmatmul.f32.gmra.mxu0 %v2491
      %v2603 = vpop.f32.mrf.mxu0
      %v2604 = vadd.f32 0.0, %v2603
      %2605 = vmatmul.f32.gmra.mxu0 %v2494
      %v2606 = vpop.f32.mrf.mxu0
      %v2607 = vadd.f32 0.0, %v2606
      %2608 = vmatmul.f32.gmra.mxu0 %v2497
      %v2609 = vpop.f32.mrf.mxu0
      %v2610 = vadd.f32 0.0, %v2609
      %2611 = vmatmul.f32.gmra.mxu0 %v2500
      %v2612 = vpop.f32.mrf.mxu0
      %v2613 = vadd.f32 0.0, %v2612
      %2614 = vmatmul.f32.gmra.mxu0 %v2503
      %v2615 = vpop.f32.mrf.mxu0
      %v2616 = vadd.f32 0.0, %v2615
      %2617 = vmatmul.f32.gmra.mxu0 %v2506
      %v2618 = vpop.f32.mrf.mxu0
      %v2619 = vadd.f32 0.0, %v2618
      %2620 = vmatmul.f32.gmra.mxu0 %v2509
      %v2621 = vpop.f32.mrf.mxu0
      %v2622 = vadd.f32 0.0, %v2621
      %2623 = vmatmul.f32.gmra.mxu0 %v2512
      %v2624 = vpop.f32.mrf.mxu0
      %v2625 = vadd.f32 0.0, %v2624
      %2626 = vmatmul.f32.gmra.mxu0 %v2515
      %v2627 = vpop.f32.mrf.mxu0
      %v2628 = vadd.f32 0.0, %v2627
      %2629 = vmatmul.f32.gmra.mxu0 %v2518
      %v2630 = vpop.f32.mrf.mxu0
      %v2631 = vadd.f32 0.0, %v2630
      %2632 = vmatmul.f32.gmra.mxu0 %v2521
      %v2633 = vpop.f32.mrf.mxu0
      %v2634 = vadd.f32 0.0, %v2633
      %2635 = vmatmul.f32.gmra.mxu0 %v2524
      %v2636 = vpop.f32.mrf.mxu0
      %v2637 = vadd.f32 0.0, %v2636
      %2638 = vmatmul.f32.gmra.mxu0 %v2527
      %v2639 = vpop.f32.mrf.mxu0
      %v2640 = vadd.f32 0.0, %v2639
      %2641 = vmatmul.f32.gmra.mxu0 %v2530
      %v2642 = vpop.f32.mrf.mxu0
      %v2643 = vadd.f32 0.0, %v2642
      %2644 = vmatmul.f32.gmra.mxu0 %v2533
      %v2645 = vpop.f32.mrf.mxu0
      %v2646 = vadd.f32 0.0, %v2645
      %2647 = vmatmul.f32.gmra.mxu0 %v2536
      %v2648 = vpop.f32.mrf.mxu0
      %v2649 = vadd.f32 0.0, %v2648
      %2650 = vmatmul.f32.gmra.mxu0 %v2539
      %v2651 = vpop.f32.mrf.mxu0
      %v2652 = vadd.f32 0.0, %v2651
      %2653 = vmatmul.f32.gmra.mxu0 %v2542
      %v2654 = vpop.f32.mrf.mxu0
      %v2655 = vadd.f32 0.0, %v2654
      %2656 = vmatmul.f32.gmra.mxu0 %v2545
      %v2657 = vpop.f32.mrf.mxu0
      %v2658 = vadd.f32 0.0, %v2657
      %2659 = vmatmul.f32.gmra.mxu0 %v2548
      %v2660 = vpop.f32.mrf.mxu0
      %v2661 = vadd.f32 0.0, %v2660
      %2662 = vmatmul.f32.gmra.mxu0 %v2551
      %v2663 = vpop.f32.mrf.mxu0
      %v2664 = vadd.f32 0.0, %v2663
      %2665 = vmatmul.f32.gmra.mxu0 %v2554
      %v2666 = vpop.f32.mrf.mxu0
      %v2667 = vadd.f32 0.0, %v2666
      %2668 = vmatmul.f32.gmra.mxu0 %v2557
      %v2669 = vpop.f32.mrf.mxu0
      %v2670 = vadd.f32 0.0, %v2669
      %2671 = vdwg.mxu0
      %v2672 = vld [vmem:[%s4] sm:$0x1]
      %v2674 = vperm.slane %v2672, 0
      %v2676 = vmul.f32 %v2577, %v2674
      %v2677 = vmul.f32 %v2580, %v2674
      %v2678 = vmul.f32 %v2583, %v2674
      %v2679 = vmul.f32 %v2586, %v2674
      %v2680 = vmul.f32 %v2589, %v2674
      %v2681 = vmul.f32 %v2592, %v2674
      %v2682 = vmul.f32 %v2595, %v2674
      %v2683 = vmul.f32 %v2598, %v2674
      %v2684 = vmul.f32 %v2601, %v2674
      %v2685 = vmul.f32 %v2604, %v2674
      %v2686 = vmul.f32 %v2607, %v2674
      %v2687 = vmul.f32 %v2610, %v2674
      %v2688 = vmul.f32 %v2613, %v2674
      %v2689 = vmul.f32 %v2616, %v2674
      %v2690 = vmul.f32 %v2619, %v2674
      %v2691 = vmul.f32 %v2622, %v2674
      %v2692 = vmul.f32 %v2625, %v2674
      %v2693 = vmul.f32 %v2628, %v2674
      %v2694 = vmul.f32 %v2631, %v2674
      %v2695 = vmul.f32 %v2634, %v2674
      %v2696 = vmul.f32 %v2637, %v2674
      %v2697 = vmul.f32 %v2640, %v2674
      %v2698 = vmul.f32 %v2643, %v2674
      %v2699 = vmul.f32 %v2646, %v2674
      %v2700 = vmul.f32 %v2649, %v2674
      %v2701 = vmul.f32 %v2652, %v2674
      %v2702 = vmul.f32 %v2655, %v2674
      %v2703 = vmul.f32 %v2658, %v2674
      %v2704 = vmul.f32 %v2661, %v2674
      %v2705 = vmul.f32 %v2664, %v2674
      %v2706 = vmul.f32 %v2667, %v2674
      %v2707 = vmul.f32 %v2670, %v2674
      %v2708 = vld [vmem:[%s5] sm:$0x1]
      %v2710 = vperm.slane %v2708, 0
      %v2712 = vadd.f32 %v2676, %v2710
      %v2713 = vadd.f32 %v2677, %v2710
      %v2714 = vadd.f32 %v2678, %v2710
      %v2715 = vadd.f32 %v2679, %v2710
      %v2716 = vadd.f32 %v2680, %v2710
      %v2717 = vadd.f32 %v2681, %v2710
      %v2718 = vadd.f32 %v2682, %v2710
      %v2719 = vadd.f32 %v2683, %v2710
      %v2720 = vadd.f32 %v2684, %v2710
      %v2721 = vadd.f32 %v2685, %v2710
      %v2722 = vadd.f32 %v2686, %v2710
      %v2723 = vadd.f32 %v2687, %v2710
      %v2724 = vadd.f32 %v2688, %v2710
      %v2725 = vadd.f32 %v2689, %v2710
      %v2726 = vadd.f32 %v2690, %v2710
      %v2727 = vadd.f32 %v2691, %v2710
      %v2728 = vadd.f32 %v2692, %v2710
      %v2729 = vadd.f32 %v2693, %v2710
      %v2730 = vadd.f32 %v2694, %v2710
      %v2731 = vadd.f32 %v2695, %v2710
      %v2732 = vadd.f32 %v2696, %v2710
      %v2733 = vadd.f32 %v2697, %v2710
      %v2734 = vadd.f32 %v2698, %v2710
      %v2735 = vadd.f32 %v2699, %v2710
      %v2736 = vadd.f32 %v2700, %v2710
      %v2737 = vadd.f32 %v2701, %v2710
      %v2738 = vadd.f32 %v2702, %v2710
      %v2739 = vadd.f32 %v2703, %v2710
      %v2740 = vadd.f32 %v2704, %v2710
      %v2741 = vadd.f32 %v2705, %v2710
      %v2742 = vadd.f32 %v2706, %v2710
      %v2743 = vadd.f32 %v2707, %v2710
      %v2744 = vmax.f32 %v2712, 0.0
      %v2745 = vmax.f32 %v2713, 0.0
      %v2746 = vmax.f32 %v2714, 0.0
      %v2747 = vmax.f32 %v2715, 0.0
      %v2748 = vmax.f32 %v2716, 0.0
      %v2749 = vmax.f32 %v2717, 0.0
      %v2750 = vmax.f32 %v2718, 0.0
      %v2751 = vmax.f32 %v2719, 0.0
      %v2752 = vmax.f32 %v2720, 0.0
      %v2753 = vmax.f32 %v2721, 0.0
      %v2754 = vmax.f32 %v2722, 0.0
      %v2755 = vmax.f32 %v2723, 0.0
      %v2756 = vmax.f32 %v2724, 0.0
      %v2757 = vmax.f32 %v2725, 0.0
      %v2758 = vmax.f32 %v2726, 0.0
      %v2759 = vmax.f32 %v2727, 0.0
      %v2760 = vmax.f32 %v2728, 0.0
      %v2761 = vmax.f32 %v2729, 0.0
      %v2762 = vmax.f32 %v2730, 0.0
      %v2763 = vmax.f32 %v2731, 0.0
      %v2764 = vmax.f32 %v2732, 0.0
      %v2765 = vmax.f32 %v2733, 0.0
      %v2766 = vmax.f32 %v2734, 0.0
      %v2767 = vmax.f32 %v2735, 0.0
      %v2768 = vmax.f32 %v2736, 0.0
      %v2769 = vmax.f32 %v2737, 0.0
      %v2770 = vmax.f32 %v2738, 0.0
      %v2771 = vmax.f32 %v2739, 0.0
      %v2772 = vmax.f32 %v2740, 0.0
      %v2773 = vmax.f32 %v2741, 0.0
      %v2774 = vmax.f32 %v2742, 0.0
      %v2775 = vmax.f32 %v2743, 0.0
      %2776 = vst.msk [vmem:[#allocation3] sm:$0xff] %vm812, 0.0
      %2777 = vst.msk [vmem:[#allocation3 + $0x8] sm:$0xff] %vm812, 0.0
      %vm2778 = vcmask 25600
      %2779 = vst.msk [vmem:[#allocation3 + $0x10] sm:$0x3] %vm2778, 0.0
      %2780 = vst.msk [vmem:[#allocation3 + $0x18] sm:$0xff] %vm812, 0.0
      %2781 = vst.msk [vmem:[#allocation3 + $0x20] sm:$0xff] %vm812, 0.0
      %2782 = vst.msk [vmem:[#allocation3 + $0x28] sm:$0x3] %vm2778, 0.0
      %2783 = vst.msk [vmem:[#allocation3 + $0x30] sm:$0xff] %vm812, 0.0
      %2784 = vst.msk [vmem:[#allocation3 + $0x38] sm:$0xff] %vm812, 0.0
      %2785 = vst.msk [vmem:[#allocation3 + $0x40] sm:$0x3] %vm2778, 0.0
      %2786 = vst.msk [vmem:[#allocation3 + $0x48] sm:$0xff] %vm812, 0.0
      %2787 = vst.msk [vmem:[#allocation3 + $0x50] sm:$0xff] %vm812, 0.0
      %2788 = vst.msk [vmem:[#allocation3 + $0x58] sm:$0x3] %vm2778, 0.0
      %2789 = vst.msk [vmem:[#allocation3 + $0x60] sm:$0xff] %vm812, 0.0
      %2790 = vst.msk [vmem:[#allocation3 + $0x68] sm:$0xff] %vm812, 0.0
      %2791 = vst.msk [vmem:[#allocation3 + $0x70] sm:$0x3] %vm2778, 0.0
      %2792 = vst.msk [vmem:[#allocation3 + $0x78] sm:$0xff] %vm812, 0.0
      %2793 = vst.msk [vmem:[#allocation3 + $0x80] sm:$0xff] %vm812, 0.0
      %2794 = vst.msk [vmem:[#allocation3 + $0x88] sm:$0x3] %vm2778, 0.0
      %2795 = vst.msk [vmem:[#allocation3 + $0x90] sm:$0xff] %vm812, 0.0
      %2796 = vst.msk [vmem:[#allocation3 + $0x98] sm:$0xff] %vm812, 0.0
      %2797 = vst.msk [vmem:[#allocation3 + $0xa0] sm:$0x3] %vm2778, 0.0
      %2798 = vst.msk [vmem:[#allocation3 + $0xa8] sm:$0xff] %vm812, 0.0
      %2799 = vst.msk [vmem:[#allocation3 + $0xb0] sm:$0xff] %vm812, 0.0
      %2800 = vst.msk [vmem:[#allocation3 + $0xb8] sm:$0x3] %vm2778, 0.0
      %2801 = vst.msk [vmem:[#allocation3 + $0xc0] sm:$0xff] %vm812, 0.0
      %2802 = vst.msk [vmem:[#allocation3 + $0xc8] sm:$0xff] %vm812, 0.0
      %2803 = vst.msk [vmem:[#allocation3 + $0xd0] sm:$0x3] %vm2778, 0.0
      %2804 = vst.msk [vmem:[#allocation3 + $0xd8] sm:$0xff] %vm812, 0.0
      %2805 = vst.msk [vmem:[#allocation3 + $0xe0] sm:$0xff] %vm812, 0.0
      %2806 = vst.msk [vmem:[#allocation3 + $0xe8] sm:$0x3] %vm2778, 0.0
      %2807 = vst.msk [vmem:[#allocation3 + $0xf0] sm:$0xff] %vm812, 0.0
      %2808 = vst.msk [vmem:[#allocation3 + $0xf8] sm:$0xff] %vm812, 0.0
      %2809 = vst.msk [vmem:[#allocation3 + $0x100] sm:$0x3] %vm2778, 0.0
      %2810 = vst.msk [vmem:[#allocation3 + $0x108] sm:$0xff] %vm812, 0.0
      %2811 = vst.msk [vmem:[#allocation3 + $0x110] sm:$0xff] %vm812, 0.0
      %2812 = vst.msk [vmem:[#allocation3 + $0x118] sm:$0x3] %vm2778, 0.0
      %2813 = vst.msk [vmem:[#allocation3 + $0x120] sm:$0xff] %vm812, 0.0
      %2814 = vst.msk [vmem:[#allocation3 + $0x128] sm:$0xff] %vm812, 0.0
      %2815 = vst.msk [vmem:[#allocation3 + $0x130] sm:$0x3] %vm2778, 0.0
      %2816 = vst.msk [vmem:[#allocation3 + $0x138] sm:$0xff] %vm812, 0.0
      %2817 = vst.msk [vmem:[#allocation3 + $0x140] sm:$0xff] %vm812, 0.0
      %2818 = vst.msk [vmem:[#allocation3 + $0x148] sm:$0x3] %vm2778, 0.0
      %2819 = vst.msk [vmem:[#allocation3 + $0x150] sm:$0xff] %vm812, 0.0
      %2820 = vst.msk [vmem:[#allocation3 + $0x158] sm:$0xff] %vm812, 0.0
      %2821 = vst.msk [vmem:[#allocation3 + $0x160] sm:$0x3] %vm2778, 0.0
      %2822 = vst.msk [vmem:[#allocation3 + $0x168] sm:$0xff] %vm812, 0.0
      %2823 = vst.msk [vmem:[#allocation3 + $0x170] sm:$0xff] %vm812, 0.0
      %2824 = vst.msk [vmem:[#allocation3 + $0x178] sm:$0x3] %vm2778, 0.0
      %2825 = vst.msk [vmem:[#allocation3 + $0x180] sm:$0xff] %vm812, 0.0
      %2826 = vst.msk [vmem:[#allocation3 + $0x188] sm:$0xff] %vm812, 0.0
      %2827 = vst.msk [vmem:[#allocation3 + $0x190] sm:$0x3] %vm2778, 0.0
      %2828 = vst.msk [vmem:[#allocation3 + $0x198] sm:$0xff] %vm812, 0.0
      %2829 = vst.msk [vmem:[#allocation3 + $0x1a0] sm:$0xff] %vm812, 0.0
      %2830 = vst.msk [vmem:[#allocation3 + $0x1a8] sm:$0x3] %vm2778, 0.0
      %s2831 = scalar_lea.vmem [#allocation3], 24
      %2832 = vst.msk [vmem:[%s2831 + $0x1] sm:$0xff] %vm812, %v2744
      %2833 = vst.msk [vmem:[%s2831 + $0x9] sm:$0xff] %vm812, %v2745
      %2834 = vst.msk [vmem:[%s2831 + $0x19] sm:$0xff] %vm812, %v2746
      %2835 = vst.msk [vmem:[%s2831 + $0x21] sm:$0xff] %vm812, %v2747
      %2836 = vst.msk [vmem:[%s2831 + $0x31] sm:$0xff] %vm812, %v2748
      %2837 = vst.msk [vmem:[%s2831 + $0x39] sm:$0xff] %vm812, %v2749
      %2838 = vst.msk [vmem:[%s2831 + $0x49] sm:$0xff] %vm812, %v2750
      %2839 = vst.msk [vmem:[%s2831 + $0x51] sm:$0xff] %vm812, %v2751
      %2840 = vst.msk [vmem:[%s2831 + $0x61] sm:$0xff] %vm812, %v2752
      %2841 = vst.msk [vmem:[%s2831 + $0x69] sm:$0xff] %vm812, %v2753
      %2842 = vst.msk [vmem:[%s2831 + $0x79] sm:$0xff] %vm812, %v2754
      %2843 = vst.msk [vmem:[%s2831 + $0x81] sm:$0xff] %vm812, %v2755
      %2844 = vst.msk [vmem:[%s2831 + $0x91] sm:$0xff] %vm812, %v2756
      %2845 = vst.msk [vmem:[%s2831 + $0x99] sm:$0xff] %vm812, %v2757
      %2846 = vst.msk [vmem:[%s2831 + $0xa9] sm:$0xff] %vm812, %v2758
      %2847 = vst.msk [vmem:[%s2831 + $0xb1] sm:$0xff] %vm812, %v2759
      %2848 = vst.msk [vmem:[%s2831 + $0xc1] sm:$0xff] %vm812, %v2760
      %2849 = vst.msk [vmem:[%s2831 + $0xc9] sm:$0xff] %vm812, %v2761
      %2850 = vst.msk [vmem:[%s2831 + $0xd9] sm:$0xff] %vm812, %v2762
      %2851 = vst.msk [vmem:[%s2831 + $0xe1] sm:$0xff] %vm812, %v2763
      %2852 = vst.msk [vmem:[%s2831 + $0xf1] sm:$0xff] %vm812, %v2764
      %2853 = vst.msk [vmem:[%s2831 + $0xf9] sm:$0xff] %vm812, %v2765
      %2854 = vst.msk [vmem:[%s2831 + $0x109] sm:$0xff] %vm812, %v2766
      %2855 = vst.msk [vmem:[%s2831 + $0x111] sm:$0xff] %vm812, %v2767
      %2856 = vst.msk [vmem:[%s2831 + $0x121] sm:$0xff] %vm812, %v2768
      %2857 = vst.msk [vmem:[%s2831 + $0x129] sm:$0xff] %vm812, %v2769
      %2858 = vst.msk [vmem:[%s2831 + $0x139] sm:$0xff] %vm812, %v2770
      %2859 = vst.msk [vmem:[%s2831 + $0x141] sm:$0xff] %vm812, %v2771
      %2860 = vst.msk [vmem:[%s2831 + $0x151] sm:$0xff] %vm812, %v2772
      %2861 = vst.msk [vmem:[%s2831 + $0x159] sm:$0xff] %vm812, %v2773
      %2862 = vst.msk [vmem:[%s2831 + $0x169] sm:$0xff] %vm812, %v2774
      %2863 = vst.msk [vmem:[%s2831 + $0x171] sm:$0xff] %vm812, %v2775
      %v2864 = vld [vmem:[#allocation3] sm:$0xff]
      %v2865 = vld [vmem:[#allocation3 + $0x8] sm:$0xff]
      %v2866 = vld [vmem:[#allocation3 + $0x18] sm:$0xff]
      %v2867 = vld [vmem:[#allocation3 + $0x20] sm:$0xff]
      %v2868 = vld [vmem:[#allocation3 + $0x30] sm:$0xff]
      %v2869 = vld [vmem:[#allocation3 + $0x38] sm:$0xff]
      %v2870 = vld [vmem:[#allocation3 + $0x48] sm:$0xff]
      %v2871 = vld [vmem:[#allocation3 + $0x50] sm:$0xff]
      %v2872 = vld [vmem:[#allocation3 + $0x60] sm:$0xff]
      %v2873 = vld [vmem:[#allocation3 + $0x68] sm:$0xff]
      %v2874 = vld [vmem:[#allocation3 + $0x78] sm:$0xff]
      %v2875 = vld [vmem:[#allocation3 + $0x80] sm:$0xff]
      %v2876 = vld [vmem:[#allocation3 + $0x90] sm:$0xff]
      %v2877 = vld [vmem:[#allocation3 + $0x98] sm:$0xff]
      %v2878 = vld [vmem:[#allocation3 + $0xa8] sm:$0xff]
      %v2879 = vld [vmem:[#allocation3 + $0xb0] sm:$0xff]
      %v2880 = vld [vmem:[#allocation3 + $0xc0] sm:$0xff]
      %v2881 = vld [vmem:[#allocation3 + $0xc8] sm:$0xff]
      %v2882 = vld [vmem:[#allocation3 + $0xd8] sm:$0xff]
      %v2883 = vld [vmem:[#allocation3 + $0xe0] sm:$0xff]
      %v2884 = vld [vmem:[#allocation3 + $0xf0] sm:$0xff]
      %v2885 = vld [vmem:[#allocation3 + $0xf8] sm:$0xff]
      %v2886 = vld [vmem:[#allocation3 + $0x108] sm:$0xff]
      %v2887 = vld [vmem:[#allocation3 + $0x110] sm:$0xff]
      %v2888 = vld [vmem:[#allocation3 + $0x120] sm:$0xff]
      %v2889 = vld [vmem:[#allocation3 + $0x128] sm:$0xff]
      %v2890 = vld [vmem:[#allocation3 + $0x138] sm:$0xff]
      %v2891 = vld [vmem:[#allocation3 + $0x140] sm:$0xff]
      %v2892 = vld [vmem:[#allocation3 + $0x150] sm:$0xff]
      %v2893 = vld [vmem:[#allocation3 + $0x158] sm:$0xff]
      %v2894 = vld [vmem:[#allocation3 + $0x168] sm:$0xff]
      %v2895 = vld [vmem:[#allocation3 + $0x170] sm:$0xff]
      %v2896 = vld [vmem:[#allocation3 + $0x1] sm:$0xff]
      %v2897 = vld [vmem:[#allocation3 + $0x9] sm:$0xff]
      %v2898 = vld [vmem:[#allocation3 + $0x19] sm:$0xff]
      %v2899 = vld [vmem:[#allocation3 + $0x21] sm:$0xff]
      %v2900 = vld [vmem:[#allocation3 + $0x31] sm:$0xff]
      %v2901 = vld [vmem:[#allocation3 + $0x39] sm:$0xff]
      %v2902 = vld [vmem:[#allocation3 + $0x49] sm:$0xff]
      %v2903 = vld [vmem:[#allocation3 + $0x51] sm:$0xff]
      %v2904 = vld [vmem:[#allocation3 + $0x61] sm:$0xff]
      %v2905 = vld [vmem:[#allocation3 + $0x69] sm:$0xff]
      %v2906 = vld [vmem:[#allocation3 + $0x79] sm:$0xff]
      %v2907 = vld [vmem:[#allocation3 + $0x81] sm:$0xff]
      %v2908 = vld [vmem:[#allocation3 + $0x91] sm:$0xff]
      %v2909 = vld [vmem:[#allocation3 + $0x99] sm:$0xff]
      %v2910 = vld [vmem:[#allocation3 + $0xa9] sm:$0xff]
      %v2911 = vld [vmem:[#allocation3 + $0xb1] sm:$0xff]
      %v2912 = vld [vmem:[#allocation3 + $0xc1] sm:$0xff]
      %v2913 = vld [vmem:[#allocation3 + $0xc9] sm:$0xff]
      %v2914 = vld [vmem:[#allocation3 + $0xd9] sm:$0xff]
      %v2915 = vld [vmem:[#allocation3 + $0xe1] sm:$0xff]
      %v2916 = vld [vmem:[#allocation3 + $0xf1] sm:$0xff]
      %v2917 = vld [vmem:[#allocation3 + $0xf9] sm:$0xff]
      %v2918 = vld [vmem:[#allocation3 + $0x109] sm:$0xff]
      %v2919 = vld [vmem:[#allocation3 + $0x111] sm:$0xff]
      %v2920 = vld [vmem:[#allocation3 + $0x121] sm:$0xff]
      %v2921 = vld [vmem:[#allocation3 + $0x129] sm:$0xff]
      %v2922 = vld [vmem:[#allocation3 + $0x139] sm:$0xff]
      %v2923 = vld [vmem:[#allocation3 + $0x141] sm:$0xff]
      %v2924 = vld [vmem:[#allocation3 + $0x151] sm:$0xff]
      %v2925 = vld [vmem:[#allocation3 + $0x159] sm:$0xff]
      %v2926 = vld [vmem:[#allocation3 + $0x169] sm:$0xff]
      %v2927 = vld [vmem:[#allocation3 + $0x171] sm:$0xff]
      %v2928 = vld [vmem:[#allocation3 + $0x2] sm:$0xff]
      %v2929 = vld [vmem:[#allocation3 + $0xa] sm:$0xff]
      %v2930 = vld [vmem:[#allocation3 + $0x1a] sm:$0xff]
      %v2931 = vld [vmem:[#allocation3 + $0x22] sm:$0xff]
      %v2932 = vld [vmem:[#allocation3 + $0x32] sm:$0xff]
      %v2933 = vld [vmem:[#allocation3 + $0x3a] sm:$0xff]
      %v2934 = vld [vmem:[#allocation3 + $0x4a] sm:$0xff]
      %v2935 = vld [vmem:[#allocation3 + $0x52] sm:$0xff]
      %v2936 = vld [vmem:[#allocation3 + $0x62] sm:$0xff]
      %v2937 = vld [vmem:[#allocation3 + $0x6a] sm:$0xff]
      %v2938 = vld [vmem:[#allocation3 + $0x7a] sm:$0xff]
      %v2939 = vld [vmem:[#allocation3 + $0x82] sm:$0xff]
      %v2940 = vld [vmem:[#allocation3 + $0x92] sm:$0xff]
      %v2941 = vld [vmem:[#allocation3 + $0x9a] sm:$0xff]
      %v2942 = vld [vmem:[#allocation3 + $0xaa] sm:$0xff]
      %v2943 = vld [vmem:[#allocation3 + $0xb2] sm:$0xff]
      %v2944 = vld [vmem:[#allocation3 + $0xc2] sm:$0xff]
      %v2945 = vld [vmem:[#allocation3 + $0xca] sm:$0xff]
      %v2946 = vld [vmem:[#allocation3 + $0xda] sm:$0xff]
      %v2947 = vld [vmem:[#allocation3 + $0xe2] sm:$0xff]
      %v2948 = vld [vmem:[#allocation3 + $0xf2] sm:$0xff]
      %v2949 = vld [vmem:[#allocation3 + $0xfa] sm:$0xff]
      %v2950 = vld [vmem:[#allocation3 + $0x10a] sm:$0xff]
      %v2951 = vld [vmem:[#allocation3 + $0x112] sm:$0xff]
      %v2952 = vld [vmem:[#allocation3 + $0x122] sm:$0xff]
      %v2953 = vld [vmem:[#allocation3 + $0x12a] sm:$0xff]
      %v2954 = vld [vmem:[#allocation3 + $0x13a] sm:$0xff]
      %v2955 = vld [vmem:[#allocation3 + $0x142] sm:$0xff]
      %v2956 = vld [vmem:[#allocation3 + $0x152] sm:$0xff]
      %v2957 = vld [vmem:[#allocation3 + $0x15a] sm:$0xff]
      %v2958 = vld [vmem:[#allocation3 + $0x16a] sm:$0xff]
      %v2959 = vld [vmem:[#allocation3 + $0x172] sm:$0xff]
      %v2960 = vld [vmem:[%s2831] sm:$0xff]
      %v2961 = vld [vmem:[%s2831 + $0x8] sm:$0xff]
      %v2962 = vld [vmem:[%s2831 + $0x18] sm:$0xff]
      %v2963 = vld [vmem:[%s2831 + $0x20] sm:$0xff]
      %v2964 = vld [vmem:[%s2831 + $0x30] sm:$0xff]
      %v2965 = vld [vmem:[%s2831 + $0x38] sm:$0xff]
      %v2966 = vld [vmem:[%s2831 + $0x48] sm:$0xff]
      %v2967 = vld [vmem:[%s2831 + $0x50] sm:$0xff]
      %v2968 = vld [vmem:[%s2831 + $0x60] sm:$0xff]
      %v2969 = vld [vmem:[%s2831 + $0x68] sm:$0xff]
      %v2970 = vld [vmem:[%s2831 + $0x78] sm:$0xff]
      %v2971 = vld [vmem:[%s2831 + $0x80] sm:$0xff]
      %v2972 = vld [vmem:[%s2831 + $0x90] sm:$0xff]
      %v2973 = vld [vmem:[%s2831 + $0x98] sm:$0xff]
      %v2974 = vld [vmem:[%s2831 + $0xa8] sm:$0xff]
      %v2975 = vld [vmem:[%s2831 + $0xb0] sm:$0xff]
      %v2976 = vld [vmem:[%s2831 + $0xc0] sm:$0xff]
      %v2977 = vld [vmem:[%s2831 + $0xc8] sm:$0xff]
      %v2978 = vld [vmem:[%s2831 + $0xd8] sm:$0xff]
      %v2979 = vld [vmem:[%s2831 + $0xe0] sm:$0xff]
      %v2980 = vld [vmem:[%s2831 + $0xf0] sm:$0xff]
      %v2981 = vld [vmem:[%s2831 + $0xf8] sm:$0xff]
      %v2982 = vld [vmem:[%s2831 + $0x108] sm:$0xff]
      %v2983 = vld [vmem:[%s2831 + $0x110] sm:$0xff]
      %v2984 = vld [vmem:[%s2831 + $0x120] sm:$0xff]
      %v2985 = vld [vmem:[%s2831 + $0x128] sm:$0xff]
      %v2986 = vld [vmem:[%s2831 + $0x138] sm:$0xff]
      %v2987 = vld [vmem:[%s2831 + $0x140] sm:$0xff]
      %v2988 = vld [vmem:[%s2831 + $0x150] sm:$0xff]
      %v2989 = vld [vmem:[%s2831 + $0x158] sm:$0xff]
      %v2990 = vld [vmem:[%s2831 + $0x168] sm:$0xff]
      %v2991 = vld [vmem:[%s2831 + $0x170] sm:$0xff]
      %v2992 = vld [vmem:[%s2831 + $0x1] sm:$0xff]
      %v2993 = vld [vmem:[%s2831 + $0x9] sm:$0xff]
      %v2994 = vld [vmem:[%s2831 + $0x19] sm:$0xff]
      %v2995 = vld [vmem:[%s2831 + $0x21] sm:$0xff]
      %v2996 = vld [vmem:[%s2831 + $0x31] sm:$0xff]
      %v2997 = vld [vmem:[%s2831 + $0x39] sm:$0xff]
      %v2998 = vld [vmem:[%s2831 + $0x49] sm:$0xff]
      %v2999 = vld [vmem:[%s2831 + $0x51] sm:$0xff]
      %v3000 = vld [vmem:[%s2831 + $0x61] sm:$0xff]
      %v3001 = vld [vmem:[%s2831 + $0x69] sm:$0xff]
      %v3002 = vld [vmem:[%s2831 + $0x79] sm:$0xff]
      %v3003 = vld [vmem:[%s2831 + $0x81] sm:$0xff]
      %v3004 = vld [vmem:[%s2831 + $0x91] sm:$0xff]
      %v3005 = vld [vmem:[%s2831 + $0x99] sm:$0xff]
      %v3006 = vld [vmem:[%s2831 + $0xa9] sm:$0xff]
      %v3007 = vld [vmem:[%s2831 + $0xb1] sm:$0xff]
      %v3008 = vld [vmem:[%s2831 + $0xc1] sm:$0xff]
      %v3009 = vld [vmem:[%s2831 + $0xc9] sm:$0xff]
      %v3010 = vld [vmem:[%s2831 + $0xd9] sm:$0xff]
      %v3011 = vld [vmem:[%s2831 + $0xe1] sm:$0xff]
      %v3012 = vld [vmem:[%s2831 + $0xf1] sm:$0xff]
      %v3013 = vld [vmem:[%s2831 + $0xf9] sm:$0xff]
      %v3014 = vld [vmem:[%s2831 + $0x109] sm:$0xff]
      %v3015 = vld [vmem:[%s2831 + $0x111] sm:$0xff]
      %v3016 = vld [vmem:[%s2831 + $0x121] sm:$0xff]
      %v3017 = vld [vmem:[%s2831 + $0x129] sm:$0xff]
      %v3018 = vld [vmem:[%s2831 + $0x139] sm:$0xff]
      %v3019 = vld [vmem:[%s2831 + $0x141] sm:$0xff]
      %v3020 = vld [vmem:[%s2831 + $0x151] sm:$0xff]
      %v3021 = vld [vmem:[%s2831 + $0x159] sm:$0xff]
      %v3022 = vld [vmem:[%s2831 + $0x169] sm:$0xff]
      %v3023 = vld [vmem:[%s2831 + $0x171] sm:$0xff]
      %v3024 = vld [vmem:[%s2831 + $0x2] sm:$0xff]
      %v3025 = vld [vmem:[%s2831 + $0xa] sm:$0xff]
      %v3026 = vld [vmem:[%s2831 + $0x1a] sm:$0xff]
      %v3027 = vld [vmem:[%s2831 + $0x22] sm:$0xff]
      %v3028 = vld [vmem:[%s2831 + $0x32] sm:$0xff]
      %v3029 = vld [vmem:[%s2831 + $0x3a] sm:$0xff]
      %v3030 = vld [vmem:[%s2831 + $0x4a] sm:$0xff]
      %v3031 = vld [vmem:[%s2831 + $0x52] sm:$0xff]
      %v3032 = vld [vmem:[%s2831 + $0x62] sm:$0xff]
      %v3033 = vld [vmem:[%s2831 + $0x6a] sm:$0xff]
      %v3034 = vld [vmem:[%s2831 + $0x7a] sm:$0xff]
      %v3035 = vld [vmem:[%s2831 + $0x82] sm:$0xff]
      %v3036 = vld [vmem:[%s2831 + $0x92] sm:$0xff]
      %v3037 = vld [vmem:[%s2831 + $0x9a] sm:$0xff]
      %v3038 = vld [vmem:[%s2831 + $0xaa] sm:$0xff]
      %v3039 = vld [vmem:[%s2831 + $0xb2] sm:$0xff]
      %v3040 = vld [vmem:[%s2831 + $0xc2] sm:$0xff]
      %v3041 = vld [vmem:[%s2831 + $0xca] sm:$0xff]
      %v3042 = vld [vmem:[%s2831 + $0xda] sm:$0xff]
      %v3043 = vld [vmem:[%s2831 + $0xe2] sm:$0xff]
      %v3044 = vld [vmem:[%s2831 + $0xf2] sm:$0xff]
      %v3045 = vld [vmem:[%s2831 + $0xfa] sm:$0xff]
      %v3046 = vld [vmem:[%s2831 + $0x10a] sm:$0xff]
      %v3047 = vld [vmem:[%s2831 + $0x112] sm:$0xff]
      %v3048 = vld [vmem:[%s2831 + $0x122] sm:$0xff]
      %v3049 = vld [vmem:[%s2831 + $0x12a] sm:$0xff]
      %v3050 = vld [vmem:[%s2831 + $0x13a] sm:$0xff]
      %v3051 = vld [vmem:[%s2831 + $0x142] sm:$0xff]
      %v3052 = vld [vmem:[%s2831 + $0x152] sm:$0xff]
      %v3053 = vld [vmem:[%s2831 + $0x15a] sm:$0xff]
      %v3054 = vld [vmem:[%s2831 + $0x16a] sm:$0xff]
      %v3055 = vld [vmem:[%s2831 + $0x172] sm:$0xff]
      %s3056 = scalar_lea.vmem [#allocation3], 48
      %v3057 = vld [vmem:[%s3056] sm:$0xff]
      %v3058 = vld [vmem:[%s3056 + $0x8] sm:$0xff]
      %v3059 = vld [vmem:[%s3056 + $0x18] sm:$0xff]
      %v3060 = vld [vmem:[%s3056 + $0x20] sm:$0xff]
      %v3061 = vld [vmem:[%s3056 + $0x30] sm:$0xff]
      %v3062 = vld [vmem:[%s3056 + $0x38] sm:$0xff]
      %v3063 = vld [vmem:[%s3056 + $0x48] sm:$0xff]
      %v3064 = vld [vmem:[%s3056 + $0x50] sm:$0xff]
      %v3065 = vld [vmem:[%s3056 + $0x60] sm:$0xff]
      %v3066 = vld [vmem:[%s3056 + $0x68] sm:$0xff]
      %v3067 = vld [vmem:[%s3056 + $0x78] sm:$0xff]
      %v3068 = vld [vmem:[%s3056 + $0x80] sm:$0xff]
      %v3069 = vld [vmem:[%s3056 + $0x90] sm:$0xff]
      %v3070 = vld [vmem:[%s3056 + $0x98] sm:$0xff]
      %v3071 = vld [vmem:[%s3056 + $0xa8] sm:$0xff]
      %v3072 = vld [vmem:[%s3056 + $0xb0] sm:$0xff]
      %v3073 = vld [vmem:[%s3056 + $0xc0] sm:$0xff]
      %v3074 = vld [vmem:[%s3056 + $0xc8] sm:$0xff]
      %v3075 = vld [vmem:[%s3056 + $0xd8] sm:$0xff]
      %v3076 = vld [vmem:[%s3056 + $0xe0] sm:$0xff]
      %v3077 = vld [vmem:[%s3056 + $0xf0] sm:$0xff]
      %v3078 = vld [vmem:[%s3056 + $0xf8] sm:$0xff]
      %v3079 = vld [vmem:[%s3056 + $0x108] sm:$0xff]
      %v3080 = vld [vmem:[%s3056 + $0x110] sm:$0xff]
      %v3081 = vld [vmem:[%s3056 + $0x120] sm:$0xff]
      %v3082 = vld [vmem:[%s3056 + $0x128] sm:$0xff]
      %v3083 = vld [vmem:[%s3056 + $0x138] sm:$0xff]
      %v3084 = vld [vmem:[%s3056 + $0x140] sm:$0xff]
      %v3085 = vld [vmem:[%s3056 + $0x150] sm:$0xff]
      %v3086 = vld [vmem:[%s3056 + $0x158] sm:$0xff]
      %v3087 = vld [vmem:[%s3056 + $0x168] sm:$0xff]
      %v3088 = vld [vmem:[%s3056 + $0x170] sm:$0xff]
      %v3089 = vld [vmem:[%s3056 + $0x1] sm:$0xff]
      %v3090 = vld [vmem:[%s3056 + $0x9] sm:$0xff]
      %v3091 = vld [vmem:[%s3056 + $0x19] sm:$0xff]
      %v3092 = vld [vmem:[%s3056 + $0x21] sm:$0xff]
      %v3093 = vld [vmem:[%s3056 + $0x31] sm:$0xff]
      %v3094 = vld [vmem:[%s3056 + $0x39] sm:$0xff]
      %v3095 = vld [vmem:[%s3056 + $0x49] sm:$0xff]
      %v3096 = vld [vmem:[%s3056 + $0x51] sm:$0xff]
      %v3097 = vld [vmem:[%s3056 + $0x61] sm:$0xff]
      %v3098 = vld [vmem:[%s3056 + $0x69] sm:$0xff]
      %v3099 = vld [vmem:[%s3056 + $0x79] sm:$0xff]
      %v3100 = vld [vmem:[%s3056 + $0x81] sm:$0xff]
      %v3101 = vld [vmem:[%s3056 + $0x91] sm:$0xff]
      %v3102 = vld [vmem:[%s3056 + $0x99] sm:$0xff]
      %v3103 = vld [vmem:[%s3056 + $0xa9] sm:$0xff]
      %v3104 = vld [vmem:[%s3056 + $0xb1] sm:$0xff]
      %v3105 = vld [vmem:[%s3056 + $0xc1] sm:$0xff]
      %v3106 = vld [vmem:[%s3056 + $0xc9] sm:$0xff]
      %v3107 = vld [vmem:[%s3056 + $0xd9] sm:$0xff]
      %v3108 = vld [vmem:[%s3056 + $0xe1] sm:$0xff]
      %v3109 = vld [vmem:[%s3056 + $0xf1] sm:$0xff]
      %v3110 = vld [vmem:[%s3056 + $0xf9] sm:$0xff]
      %v3111 = vld [vmem:[%s3056 + $0x109] sm:$0xff]
      %v3112 = vld [vmem:[%s3056 + $0x111] sm:$0xff]
      %v3113 = vld [vmem:[%s3056 + $0x121] sm:$0xff]
      %v3114 = vld [vmem:[%s3056 + $0x129] sm:$0xff]
      %v3115 = vld [vmem:[%s3056 + $0x139] sm:$0xff]
      %v3116 = vld [vmem:[%s3056 + $0x141] sm:$0xff]
      %v3117 = vld [vmem:[%s3056 + $0x151] sm:$0xff]
      %v3118 = vld [vmem:[%s3056 + $0x159] sm:$0xff]
      %v3119 = vld [vmem:[%s3056 + $0x169] sm:$0xff]
      %v3120 = vld [vmem:[%s3056 + $0x171] sm:$0xff]
      %v3121 = vld [vmem:[%s3056 + $0x2] sm:$0xff]
      %v3122 = vld [vmem:[%s3056 + $0xa] sm:$0xff]
      %v3123 = vld [vmem:[%s3056 + $0x1a] sm:$0xff]
      %v3124 = vld [vmem:[%s3056 + $0x22] sm:$0xff]
      %v3125 = vld [vmem:[%s3056 + $0x32] sm:$0xff]
      %v3126 = vld [vmem:[%s3056 + $0x3a] sm:$0xff]
      %v3127 = vld [vmem:[%s3056 + $0x4a] sm:$0xff]
      %v3128 = vld [vmem:[%s3056 + $0x52] sm:$0xff]
      %v3129 = vld [vmem:[%s3056 + $0x62] sm:$0xff]
      %v3130 = vld [vmem:[%s3056 + $0x6a] sm:$0xff]
      %v3131 = vld [vmem:[%s3056 + $0x7a] sm:$0xff]
      %v3132 = vld [vmem:[%s3056 + $0x82] sm:$0xff]
      %v3133 = vld [vmem:[%s3056 + $0x92] sm:$0xff]
      %v3134 = vld [vmem:[%s3056 + $0x9a] sm:$0xff]
      %v3135 = vld [vmem:[%s3056 + $0xaa] sm:$0xff]
      %v3136 = vld [vmem:[%s3056 + $0xb2] sm:$0xff]
      %v3137 = vld [vmem:[%s3056 + $0xc2] sm:$0xff]
      %v3138 = vld [vmem:[%s3056 + $0xca] sm:$0xff]
      %v3139 = vld [vmem:[%s3056 + $0xda] sm:$0xff]
      %v3140 = vld [vmem:[%s3056 + $0xe2] sm:$0xff]
      %v3141 = vld [vmem:[%s3056 + $0xf2] sm:$0xff]
      %v3142 = vld [vmem:[%s3056 + $0xfa] sm:$0xff]
      %v3143 = vld [vmem:[%s3056 + $0x10a] sm:$0xff]
      %v3144 = vld [vmem:[%s3056 + $0x112] sm:$0xff]
      %v3145 = vld [vmem:[%s3056 + $0x122] sm:$0xff]
      %v3146 = vld [vmem:[%s3056 + $0x12a] sm:$0xff]
      %v3147 = vld [vmem:[%s3056 + $0x13a] sm:$0xff]
      %v3148 = vld [vmem:[%s3056 + $0x142] sm:$0xff]
      %v3149 = vld [vmem:[%s3056 + $0x152] sm:$0xff]
      %v3150 = vld [vmem:[%s3056 + $0x15a] sm:$0xff]
      %v3151 = vld [vmem:[%s3056 + $0x16a] sm:$0xff]
      %v3152 = vld [vmem:[%s3056 + $0x172] sm:$0xff]
      %3185 = vrot.lane.b32.xlu0 %v2896, 4
      %v3186 = vpop.permute.xlu0 %3185
      %3187 = vrot.lane.b32.xlu0 %v2897, 4
      %v3188 = vpop.permute.xlu0 %3187
      %3189 = vrot.lane.b32.xlu0 %v2898, 4
      %v3190 = vpop.permute.xlu0 %3189
      %3191 = vrot.lane.b32.xlu0 %v2899, 4
      %v3192 = vpop.permute.xlu0 %3191
      %3193 = vrot.lane.b32.xlu0 %v2900, 4
      %v3194 = vpop.permute.xlu0 %3193
      %3195 = vrot.lane.b32.xlu0 %v2901, 4
      %v3196 = vpop.permute.xlu0 %3195
      %3197 = vrot.lane.b32.xlu0 %v2902, 4
      %v3198 = vpop.permute.xlu0 %3197
      %3199 = vrot.lane.b32.xlu0 %v2903, 4
      %v3200 = vpop.permute.xlu0 %3199
      %3201 = vrot.lane.b32.xlu0 %v2904, 4
      %v3202 = vpop.permute.xlu0 %3201
      %3203 = vrot.lane.b32.xlu0 %v2905, 4
      %v3204 = vpop.permute.xlu0 %3203
      %3205 = vrot.lane.b32.xlu0 %v2906, 4
      %v3206 = vpop.permute.xlu0 %3205
      %3207 = vrot.lane.b32.xlu0 %v2907, 4
      %v3208 = vpop.permute.xlu0 %3207
      %3209 = vrot.lane.b32.xlu0 %v2908, 4
      %v3210 = vpop.permute.xlu0 %3209
      %3211 = vrot.lane.b32.xlu0 %v2909, 4
      %v3212 = vpop.permute.xlu0 %3211
      %3213 = vrot.lane.b32.xlu0 %v2910, 4
      %v3214 = vpop.permute.xlu0 %3213
      %3215 = vrot.lane.b32.xlu0 %v2911, 4
      %v3216 = vpop.permute.xlu0 %3215
      %3217 = vrot.lane.b32.xlu0 %v2912, 4
      %v3218 = vpop.permute.xlu0 %3217
      %3219 = vrot.lane.b32.xlu0 %v2913, 4
      %v3220 = vpop.permute.xlu0 %3219
      %3221 = vrot.lane.b32.xlu0 %v2914, 4
      %v3222 = vpop.permute.xlu0 %3221
      %3223 = vrot.lane.b32.xlu0 %v2915, 4
      %v3224 = vpop.permute.xlu0 %3223
      %3225 = vrot.lane.b32.xlu0 %v2916, 4
      %v3226 = vpop.permute.xlu0 %3225
      %3227 = vrot.lane.b32.xlu0 %v2917, 4
      %v3228 = vpop.permute.xlu0 %3227
      %3229 = vrot.lane.b32.xlu0 %v2918, 4
      %v3230 = vpop.permute.xlu0 %3229
      %3231 = vrot.lane.b32.xlu0 %v2919, 4
      %v3232 = vpop.permute.xlu0 %3231
      %3233 = vrot.lane.b32.xlu0 %v2920, 4
      %v3234 = vpop.permute.xlu0 %3233
      %3235 = vrot.lane.b32.xlu0 %v2921, 4
      %v3236 = vpop.permute.xlu0 %3235
      %3237 = vrot.lane.b32.xlu0 %v2922, 4
      %v3238 = vpop.permute.xlu0 %3237
      %3239 = vrot.lane.b32.xlu0 %v2923, 4
      %v3240 = vpop.permute.xlu0 %3239
      %3241 = vrot.lane.b32.xlu0 %v2924, 4
      %v3242 = vpop.permute.xlu0 %3241
      %3243 = vrot.lane.b32.xlu0 %v2925, 4
      %v3244 = vpop.permute.xlu0 %3243
      %3245 = vrot.lane.b32.xlu0 %v2926, 4
      %v3246 = vpop.permute.xlu0 %3245
      %3247 = vrot.lane.b32.xlu0 %v2927, 4
      %v3248 = vpop.permute.xlu0 %3247
      %3313 = vrot.lane.b32.xlu0 %v2928, 8
      %v3314 = vpop.permute.xlu0 %3313
      %3315 = vrot.lane.b32.xlu0 %v2929, 8
      %v3316 = vpop.permute.xlu0 %3315
      %3317 = vrot.lane.b32.xlu0 %v2930, 8
      %v3318 = vpop.permute.xlu0 %3317
      %3319 = vrot.lane.b32.xlu0 %v2931, 8
      %v3320 = vpop.permute.xlu0 %3319
      %3321 = vrot.lane.b32.xlu0 %v2932, 8
      %v3322 = vpop.permute.xlu0 %3321
      %3323 = vrot.lane.b32.xlu0 %v2933, 8
      %v3324 = vpop.permute.xlu0 %3323
      %3325 = vrot.lane.b32.xlu0 %v2934, 8
      %v3326 = vpop.permute.xlu0 %3325
      %3327 = vrot.lane.b32.xlu0 %v2935, 8
      %v3328 = vpop.permute.xlu0 %3327
      %3329 = vrot.lane.b32.xlu0 %v2936, 8
      %v3330 = vpop.permute.xlu0 %3329
      %3331 = vrot.lane.b32.xlu0 %v2937, 8
      %v3332 = vpop.permute.xlu0 %3331
      %3333 = vrot.lane.b32.xlu0 %v2938, 8
      %v3334 = vpop.permute.xlu0 %3333
      %3335 = vrot.lane.b32.xlu0 %v2939, 8
      %v3336 = vpop.permute.xlu0 %3335
      %3337 = vrot.lane.b32.xlu0 %v2940, 8
      %v3338 = vpop.permute.xlu0 %3337
      %3339 = vrot.lane.b32.xlu0 %v2941, 8
      %v3340 = vpop.permute.xlu0 %3339
      %3341 = vrot.lane.b32.xlu0 %v2942, 8
      %v3342 = vpop.permute.xlu0 %3341
      %3343 = vrot.lane.b32.xlu0 %v2943, 8
      %v3344 = vpop.permute.xlu0 %3343
      %3345 = vrot.lane.b32.xlu0 %v2944, 8
      %v3346 = vpop.permute.xlu0 %3345
      %3347 = vrot.lane.b32.xlu0 %v2945, 8
      %v3348 = vpop.permute.xlu0 %3347
      %3349 = vrot.lane.b32.xlu0 %v2946, 8
      %v3350 = vpop.permute.xlu0 %3349
      %3351 = vrot.lane.b32.xlu0 %v2947, 8
      %v3352 = vpop.permute.xlu0 %3351
      %3353 = vrot.lane.b32.xlu0 %v2948, 8
      %v3354 = vpop.permute.xlu0 %3353
      %3355 = vrot.lane.b32.xlu0 %v2949, 8
      %v3356 = vpop.permute.xlu0 %3355
      %3357 = vrot.lane.b32.xlu0 %v2950, 8
      %v3358 = vpop.permute.xlu0 %3357
      %3359 = vrot.lane.b32.xlu0 %v2951, 8
      %v3360 = vpop.permute.xlu0 %3359
      %3361 = vrot.lane.b32.xlu0 %v2952, 8
      %v3362 = vpop.permute.xlu0 %3361
      %3363 = vrot.lane.b32.xlu0 %v2953, 8
      %v3364 = vpop.permute.xlu0 %3363
      %3365 = vrot.lane.b32.xlu0 %v2954, 8
      %v3366 = vpop.permute.xlu0 %3365
      %3367 = vrot.lane.b32.xlu0 %v2955, 8
      %v3368 = vpop.permute.xlu0 %3367
      %3369 = vrot.lane.b32.xlu0 %v2956, 8
      %v3370 = vpop.permute.xlu0 %3369
      %3371 = vrot.lane.b32.xlu0 %v2957, 8
      %v3372 = vpop.permute.xlu0 %3371
      %3373 = vrot.lane.b32.xlu0 %v2958, 8
      %v3374 = vpop.permute.xlu0 %3373
      %3375 = vrot.lane.b32.xlu0 %v2959, 8
      %v3376 = vpop.permute.xlu0 %3375
      %3441 = vrot.lane.b32.xlu0 %v2960, 12
      %v3442 = vpop.permute.xlu0 %3441
      %3443 = vrot.lane.b32.xlu0 %v2961, 12
      %v3444 = vpop.permute.xlu0 %3443
      %3445 = vrot.lane.b32.xlu0 %v2962, 12
      %v3446 = vpop.permute.xlu0 %3445
      %3447 = vrot.lane.b32.xlu0 %v2963, 12
      %v3448 = vpop.permute.xlu0 %3447
      %3449 = vrot.lane.b32.xlu0 %v2964, 12
      %v3450 = vpop.permute.xlu0 %3449
      %3451 = vrot.lane.b32.xlu0 %v2965, 12
      %v3452 = vpop.permute.xlu0 %3451
      %3453 = vrot.lane.b32.xlu0 %v2966, 12
      %v3454 = vpop.permute.xlu0 %3453
      %3455 = vrot.lane.b32.xlu0 %v2967, 12
      %v3456 = vpop.permute.xlu0 %3455
      %3457 = vrot.lane.b32.xlu0 %v2968, 12
      %v3458 = vpop.permute.xlu0 %3457
      %3459 = vrot.lane.b32.xlu0 %v2969, 12
      %v3460 = vpop.permute.xlu0 %3459
      %3461 = vrot.lane.b32.xlu0 %v2970, 12
      %v3462 = vpop.permute.xlu0 %3461
      %3463 = vrot.lane.b32.xlu0 %v2971, 12
      %v3464 = vpop.permute.xlu0 %3463
      %3465 = vrot.lane.b32.xlu0 %v2972, 12
      %v3466 = vpop.permute.xlu0 %3465
      %3467 = vrot.lane.b32.xlu0 %v2973, 12
      %v3468 = vpop.permute.xlu0 %3467
      %3469 = vrot.lane.b32.xlu0 %v2974, 12
      %v3470 = vpop.permute.xlu0 %3469
      %3471 = vrot.lane.b32.xlu0 %v2975, 12
      %v3472 = vpop.permute.xlu0 %3471
      %3473 = vrot.lane.b32.xlu0 %v2976, 12
      %v3474 = vpop.permute.xlu0 %3473
      %3475 = vrot.lane.b32.xlu0 %v2977, 12
      %v3476 = vpop.permute.xlu0 %3475
      %3477 = vrot.lane.b32.xlu0 %v2978, 12
      %v3478 = vpop.permute.xlu0 %3477
      %3479 = vrot.lane.b32.xlu0 %v2979, 12
      %v3480 = vpop.permute.xlu0 %3479
      %3481 = vrot.lane.b32.xlu0 %v2980, 12
      %v3482 = vpop.permute.xlu0 %3481
      %3483 = vrot.lane.b32.xlu0 %v2981, 12
      %v3484 = vpop.permute.xlu0 %3483
      %3485 = vrot.lane.b32.xlu0 %v2982, 12
      %v3486 = vpop.permute.xlu0 %3485
      %3487 = vrot.lane.b32.xlu0 %v2983, 12
      %v3488 = vpop.permute.xlu0 %3487
      %3489 = vrot.lane.b32.xlu0 %v2984, 12
      %v3490 = vpop.permute.xlu0 %3489
      %3491 = vrot.lane.b32.xlu0 %v2985, 12
      %v3492 = vpop.permute.xlu0 %3491
      %3493 = vrot.lane.b32.xlu0 %v2986, 12
      %v3494 = vpop.permute.xlu0 %3493
      %3495 = vrot.lane.b32.xlu0 %v2987, 12
      %v3496 = vpop.permute.xlu0 %3495
      %3497 = vrot.lane.b32.xlu0 %v2988, 12
      %v3498 = vpop.permute.xlu0 %3497
      %3499 = vrot.lane.b32.xlu0 %v2989, 12
      %v3500 = vpop.permute.xlu0 %3499
      %3501 = vrot.lane.b32.xlu0 %v2990, 12
      %v3502 = vpop.permute.xlu0 %3501
      %3503 = vrot.lane.b32.xlu0 %v2991, 12
      %v3504 = vpop.permute.xlu0 %3503
      %3569 = vrot.lane.b32.xlu0 %v2992, 16
      %v3570 = vpop.permute.xlu0 %3569
      %3571 = vrot.lane.b32.xlu0 %v2993, 16
      %v3572 = vpop.permute.xlu0 %3571
      %3573 = vrot.lane.b32.xlu0 %v2994, 16
      %v3574 = vpop.permute.xlu0 %3573
      %3575 = vrot.lane.b32.xlu0 %v2995, 16
      %v3576 = vpop.permute.xlu0 %3575
      %3577 = vrot.lane.b32.xlu0 %v2996, 16
      %v3578 = vpop.permute.xlu0 %3577
      %3579 = vrot.lane.b32.xlu0 %v2997, 16
      %v3580 = vpop.permute.xlu0 %3579
      %3581 = vrot.lane.b32.xlu0 %v2998, 16
      %v3582 = vpop.permute.xlu0 %3581
      %3583 = vrot.lane.b32.xlu0 %v2999, 16
      %v3584 = vpop.permute.xlu0 %3583
      %3585 = vrot.lane.b32.xlu0 %v3000, 16
      %v3586 = vpop.permute.xlu0 %3585
      %3587 = vrot.lane.b32.xlu0 %v3001, 16
      %v3588 = vpop.permute.xlu0 %3587
      %3589 = vrot.lane.b32.xlu0 %v3002, 16
      %v3590 = vpop.permute.xlu0 %3589
      %3591 = vrot.lane.b32.xlu0 %v3003, 16
      %v3592 = vpop.permute.xlu0 %3591
      %3593 = vrot.lane.b32.xlu0 %v3004, 16
      %v3594 = vpop.permute.xlu0 %3593
      %3595 = vrot.lane.b32.xlu0 %v3005, 16
      %v3596 = vpop.permute.xlu0 %3595
      %3597 = vrot.lane.b32.xlu0 %v3006, 16
      %v3598 = vpop.permute.xlu0 %3597
      %3599 = vrot.lane.b32.xlu0 %v3007, 16
      %v3600 = vpop.permute.xlu0 %3599
      %3601 = vrot.lane.b32.xlu0 %v3008, 16
      %v3602 = vpop.permute.xlu0 %3601
      %3603 = vrot.lane.b32.xlu0 %v3009, 16
      %v3604 = vpop.permute.xlu0 %3603
      %3605 = vrot.lane.b32.xlu0 %v3010, 16
      %v3606 = vpop.permute.xlu0 %3605
      %3607 = vrot.lane.b32.xlu0 %v3011, 16
      %v3608 = vpop.permute.xlu0 %3607
      %3609 = vrot.lane.b32.xlu0 %v3012, 16
      %v3610 = vpop.permute.xlu0 %3609
      %3611 = vrot.lane.b32.xlu0 %v3013, 16
      %v3612 = vpop.permute.xlu0 %3611
      %3613 = vrot.lane.b32.xlu0 %v3014, 16
      %v3614 = vpop.permute.xlu0 %3613
      %3615 = vrot.lane.b32.xlu0 %v3015, 16
      %v3616 = vpop.permute.xlu0 %3615
      %3617 = vrot.lane.b32.xlu0 %v3016, 16
      %v3618 = vpop.permute.xlu0 %3617
      %3619 = vrot.lane.b32.xlu0 %v3017, 16
      %v3620 = vpop.permute.xlu0 %3619
      %3621 = vrot.lane.b32.xlu0 %v3018, 16
      %v3622 = vpop.permute.xlu0 %3621
      %3623 = vrot.lane.b32.xlu0 %v3019, 16
      %v3624 = vpop.permute.xlu0 %3623
      %3625 = vrot.lane.b32.xlu0 %v3020, 16
      %v3626 = vpop.permute.xlu0 %3625
      %3627 = vrot.lane.b32.xlu0 %v3021, 16
      %v3628 = vpop.permute.xlu0 %3627
      %3629 = vrot.lane.b32.xlu0 %v3022, 16
      %v3630 = vpop.permute.xlu0 %3629
      %3631 = vrot.lane.b32.xlu0 %v3023, 16
      %v3632 = vpop.permute.xlu0 %3631
      %3697 = vrot.lane.b32.xlu0 %v3024, 20
      %v3698 = vpop.permute.xlu0 %3697
      %3699 = vrot.lane.b32.xlu0 %v3025, 20
      %v3700 = vpop.permute.xlu0 %3699
      %3701 = vrot.lane.b32.xlu0 %v3026, 20
      %v3702 = vpop.permute.xlu0 %3701
      %3703 = vrot.lane.b32.xlu0 %v3027, 20
      %v3704 = vpop.permute.xlu0 %3703
      %3705 = vrot.lane.b32.xlu0 %v3028, 20
      %v3706 = vpop.permute.xlu0 %3705
      %3707 = vrot.lane.b32.xlu0 %v3029, 20
      %v3708 = vpop.permute.xlu0 %3707
      %3709 = vrot.lane.b32.xlu0 %v3030, 20
      %v3710 = vpop.permute.xlu0 %3709
      %3711 = vrot.lane.b32.xlu0 %v3031, 20
      %v3712 = vpop.permute.xlu0 %3711
      %3713 = vrot.lane.b32.xlu0 %v3032, 20
      %v3714 = vpop.permute.xlu0 %3713
      %3715 = vrot.lane.b32.xlu0 %v3033, 20
      %v3716 = vpop.permute.xlu0 %3715
      %3717 = vrot.lane.b32.xlu0 %v3034, 20
      %v3718 = vpop.permute.xlu0 %3717
      %3719 = vrot.lane.b32.xlu0 %v3035, 20
      %v3720 = vpop.permute.xlu0 %3719
      %3721 = vrot.lane.b32.xlu0 %v3036, 20
      %v3722 = vpop.permute.xlu0 %3721
      %3723 = vrot.lane.b32.xlu0 %v3037, 20
      %v3724 = vpop.permute.xlu0 %3723
      %3725 = vrot.lane.b32.xlu0 %v3038, 20
      %v3726 = vpop.permute.xlu0 %3725
      %3727 = vrot.lane.b32.xlu0 %v3039, 20
      %v3728 = vpop.permute.xlu0 %3727
      %3729 = vrot.lane.b32.xlu0 %v3040, 20
      %v3730 = vpop.permute.xlu0 %3729
      %3731 = vrot.lane.b32.xlu0 %v3041, 20
      %v3732 = vpop.permute.xlu0 %3731
      %3733 = vrot.lane.b32.xlu0 %v3042, 20
      %v3734 = vpop.permute.xlu0 %3733
      %3735 = vrot.lane.b32.xlu0 %v3043, 20
      %v3736 = vpop.permute.xlu0 %3735
      %3737 = vrot.lane.b32.xlu0 %v3044, 20
      %v3738 = vpop.permute.xlu0 %3737
      %3739 = vrot.lane.b32.xlu0 %v3045, 20
      %v3740 = vpop.permute.xlu0 %3739
      %3741 = vrot.lane.b32.xlu0 %v3046, 20
      %v3742 = vpop.permute.xlu0 %3741
      %3743 = vrot.lane.b32.xlu0 %v3047, 20
      %v3744 = vpop.permute.xlu0 %3743
      %3745 = vrot.lane.b32.xlu0 %v3048, 20
      %v3746 = vpop.permute.xlu0 %3745
      %3747 = vrot.lane.b32.xlu0 %v3049, 20
      %v3748 = vpop.permute.xlu0 %3747
      %3749 = vrot.lane.b32.xlu0 %v3050, 20
      %v3750 = vpop.permute.xlu0 %3749
      %3751 = vrot.lane.b32.xlu0 %v3051, 20
      %v3752 = vpop.permute.xlu0 %3751
      %3753 = vrot.lane.b32.xlu0 %v3052, 20
      %v3754 = vpop.permute.xlu0 %3753
      %3755 = vrot.lane.b32.xlu0 %v3053, 20
      %v3756 = vpop.permute.xlu0 %3755
      %3757 = vrot.lane.b32.xlu0 %v3054, 20
      %v3758 = vpop.permute.xlu0 %3757
      %3759 = vrot.lane.b32.xlu0 %v3055, 20
      %v3760 = vpop.permute.xlu0 %3759
      %3825 = vrot.lane.b32.xlu0 %v3057, 24
      %v3826 = vpop.permute.xlu0 %3825
      %3827 = vrot.lane.b32.xlu0 %v3058, 24
      %v3828 = vpop.permute.xlu0 %3827
      %3829 = vrot.lane.b32.xlu0 %v3059, 24
      %v3830 = vpop.permute.xlu0 %3829
      %3831 = vrot.lane.b32.xlu0 %v3060, 24
      %v3832 = vpop.permute.xlu0 %3831
      %3833 = vrot.lane.b32.xlu0 %v3061, 24
      %v3834 = vpop.permute.xlu0 %3833
      %3835 = vrot.lane.b32.xlu0 %v3062, 24
      %v3836 = vpop.permute.xlu0 %3835
      %3837 = vrot.lane.b32.xlu0 %v3063, 24
      %v3838 = vpop.permute.xlu0 %3837
      %3839 = vrot.lane.b32.xlu0 %v3064, 24
      %v3840 = vpop.permute.xlu0 %3839
      %3841 = vrot.lane.b32.xlu0 %v3065, 24
      %v3842 = vpop.permute.xlu0 %3841
      %3843 = vrot.lane.b32.xlu0 %v3066, 24
      %v3844 = vpop.permute.xlu0 %3843
      %3845 = vrot.lane.b32.xlu0 %v3067, 24
      %v3846 = vpop.permute.xlu0 %3845
      %3847 = vrot.lane.b32.xlu0 %v3068, 24
      %v3848 = vpop.permute.xlu0 %3847
      %3849 = vrot.lane.b32.xlu0 %v3069, 24
      %v3850 = vpop.permute.xlu0 %3849
      %3851 = vrot.lane.b32.xlu0 %v3070, 24
      %v3852 = vpop.permute.xlu0 %3851
      %3853 = vrot.lane.b32.xlu0 %v3071, 24
      %v3854 = vpop.permute.xlu0 %3853
      %3855 = vrot.lane.b32.xlu0 %v3072, 24
      %v3856 = vpop.permute.xlu0 %3855
      %3857 = vrot.lane.b32.xlu0 %v3073, 24
      %v3858 = vpop.permute.xlu0 %3857
      %3859 = vrot.lane.b32.xlu0 %v3074, 24
      %v3860 = vpop.permute.xlu0 %3859
      %3861 = vrot.lane.b32.xlu0 %v3075, 24
      %v3862 = vpop.permute.xlu0 %3861
      %3863 = vrot.lane.b32.xlu0 %v3076, 24
      %v3864 = vpop.permute.xlu0 %3863
      %3865 = vrot.lane.b32.xlu0 %v3077, 24
      %v3866 = vpop.permute.xlu0 %3865
      %3867 = vrot.lane.b32.xlu0 %v3078, 24
      %v3868 = vpop.permute.xlu0 %3867
      %3869 = vrot.lane.b32.xlu0 %v3079, 24
      %v3870 = vpop.permute.xlu0 %3869
      %3871 = vrot.lane.b32.xlu0 %v3080, 24
      %v3872 = vpop.permute.xlu0 %3871
      %3873 = vrot.lane.b32.xlu0 %v3081, 24
      %v3874 = vpop.permute.xlu0 %3873
      %3875 = vrot.lane.b32.xlu0 %v3082, 24
      %v3876 = vpop.permute.xlu0 %3875
      %3877 = vrot.lane.b32.xlu0 %v3083, 24
      %v3878 = vpop.permute.xlu0 %3877
      %3879 = vrot.lane.b32.xlu0 %v3084, 24
      %v3880 = vpop.permute.xlu0 %3879
      %3881 = vrot.lane.b32.xlu0 %v3085, 24
      %v3882 = vpop.permute.xlu0 %3881
      %3883 = vrot.lane.b32.xlu0 %v3086, 24
      %v3884 = vpop.permute.xlu0 %3883
      %3885 = vrot.lane.b32.xlu0 %v3087, 24
      %v3886 = vpop.permute.xlu0 %3885
      %3887 = vrot.lane.b32.xlu0 %v3088, 24
      %v3888 = vpop.permute.xlu0 %3887
      %3953 = vrot.lane.b32.xlu0 %v3089, 28
      %v3954 = vpop.permute.xlu0 %3953
      %3955 = vrot.lane.b32.xlu0 %v3090, 28
      %v3956 = vpop.permute.xlu0 %3955
      %3957 = vrot.lane.b32.xlu0 %v3091, 28
      %v3958 = vpop.permute.xlu0 %3957
      %3959 = vrot.lane.b32.xlu0 %v3092, 28
      %v3960 = vpop.permute.xlu0 %3959
      %3961 = vrot.lane.b32.xlu0 %v3093, 28
      %v3962 = vpop.permute.xlu0 %3961
      %3963 = vrot.lane.b32.xlu0 %v3094, 28
      %v3964 = vpop.permute.xlu0 %3963
      %3965 = vrot.lane.b32.xlu0 %v3095, 28
      %v3966 = vpop.permute.xlu0 %3965
      %3967 = vrot.lane.b32.xlu0 %v3096, 28
      %v3968 = vpop.permute.xlu0 %3967
      %3969 = vrot.lane.b32.xlu0 %v3097, 28
      %v3970 = vpop.permute.xlu0 %3969
      %3971 = vrot.lane.b32.xlu0 %v3098, 28
      %v3972 = vpop.permute.xlu0 %3971
      %3973 = vrot.lane.b32.xlu0 %v3099, 28
      %v3974 = vpop.permute.xlu0 %3973
      %3975 = vrot.lane.b32.xlu0 %v3100, 28
      %v3976 = vpop.permute.xlu0 %3975
      %3977 = vrot.lane.b32.xlu0 %v3101, 28
      %v3978 = vpop.permute.xlu0 %3977
      %3979 = vrot.lane.b32.xlu0 %v3102, 28
      %v3980 = vpop.permute.xlu0 %3979
      %3981 = vrot.lane.b32.xlu0 %v3103, 28
      %v3982 = vpop.permute.xlu0 %3981
      %3983 = vrot.lane.b32.xlu0 %v3104, 28
      %v3984 = vpop.permute.xlu0 %3983
      %3985 = vrot.lane.b32.xlu0 %v3105, 28
      %v3986 = vpop.permute.xlu0 %3985
      %3987 = vrot.lane.b32.xlu0 %v3106, 28
      %v3988 = vpop.permute.xlu0 %3987
      %3989 = vrot.lane.b32.xlu0 %v3107, 28
      %v3990 = vpop.permute.xlu0 %3989
      %3991 = vrot.lane.b32.xlu0 %v3108, 28
      %v3992 = vpop.permute.xlu0 %3991
      %3993 = vrot.lane.b32.xlu0 %v3109, 28
      %v3994 = vpop.permute.xlu0 %3993
      %3995 = vrot.lane.b32.xlu0 %v3110, 28
      %v3996 = vpop.permute.xlu0 %3995
      %3997 = vrot.lane.b32.xlu0 %v3111, 28
      %v3998 = vpop.permute.xlu0 %3997
      %3999 = vrot.lane.b32.xlu0 %v3112, 28
      %v4000 = vpop.permute.xlu0 %3999
      %4001 = vrot.lane.b32.xlu0 %v3113, 28
      %v4002 = vpop.permute.xlu0 %4001
      %4003 = vrot.lane.b32.xlu0 %v3114, 28
      %v4004 = vpop.permute.xlu0 %4003
      %4005 = vrot.lane.b32.xlu0 %v3115, 28
      %v4006 = vpop.permute.xlu0 %4005
      %4007 = vrot.lane.b32.xlu0 %v3116, 28
      %v4008 = vpop.permute.xlu0 %4007
      %4009 = vrot.lane.b32.xlu0 %v3117, 28
      %v4010 = vpop.permute.xlu0 %4009
      %4011 = vrot.lane.b32.xlu0 %v3118, 28
      %v4012 = vpop.permute.xlu0 %4011
      %4013 = vrot.lane.b32.xlu0 %v3119, 28
      %v4014 = vpop.permute.xlu0 %4013
      %4015 = vrot.lane.b32.xlu0 %v3120, 28
      %v4016 = vpop.permute.xlu0 %4015
      %4081 = vrot.lane.b32.xlu0 %v3121, 32
      %v4082 = vpop.permute.xlu0 %4081
      %4083 = vrot.lane.b32.xlu0 %v3122, 32
      %v4084 = vpop.permute.xlu0 %4083
      %4085 = vrot.lane.b32.xlu0 %v3123, 32
      %v4086 = vpop.permute.xlu0 %4085
      %4087 = vrot.lane.b32.xlu0 %v3124, 32
      %v4088 = vpop.permute.xlu0 %4087
      %4089 = vrot.lane.b32.xlu0 %v3125, 32
      %v4090 = vpop.permute.xlu0 %4089
      %4091 = vrot.lane.b32.xlu0 %v3126, 32
      %v4092 = vpop.permute.xlu0 %4091
      %4093 = vrot.lane.b32.xlu0 %v3127, 32
      %v4094 = vpop.permute.xlu0 %4093
      %4095 = vrot.lane.b32.xlu0 %v3128, 32
      %v4096 = vpop.permute.xlu0 %4095
      %4097 = vrot.lane.b32.xlu0 %v3129, 32
      %v4098 = vpop.permute.xlu0 %4097
      %4099 = vrot.lane.b32.xlu0 %v3130, 32
      %v4100 = vpop.permute.xlu0 %4099
      %4101 = vrot.lane.b32.xlu0 %v3131, 32
      %v4102 = vpop.permute.xlu0 %4101
      %4103 = vrot.lane.b32.xlu0 %v3132, 32
      %v4104 = vpop.permute.xlu0 %4103
      %4105 = vrot.lane.b32.xlu0 %v3133, 32
      %v4106 = vpop.permute.xlu0 %4105
      %4107 = vrot.lane.b32.xlu0 %v3134, 32
      %v4108 = vpop.permute.xlu0 %4107
      %4109 = vrot.lane.b32.xlu0 %v3135, 32
      %v4110 = vpop.permute.xlu0 %4109
      %4111 = vrot.lane.b32.xlu0 %v3136, 32
      %v4112 = vpop.permute.xlu0 %4111
      %4113 = vrot.lane.b32.xlu0 %v3137, 32
      %v4114 = vpop.permute.xlu0 %4113
      %4115 = vrot.lane.b32.xlu0 %v3138, 32
      %v4116 = vpop.permute.xlu0 %4115
      %4117 = vrot.lane.b32.xlu0 %v3139, 32
      %v4118 = vpop.permute.xlu0 %4117
      %4119 = vrot.lane.b32.xlu0 %v3140, 32
      %v4120 = vpop.permute.xlu0 %4119
      %4121 = vrot.lane.b32.xlu0 %v3141, 32
      %v4122 = vpop.permute.xlu0 %4121
      %4123 = vrot.lane.b32.xlu0 %v3142, 32
      %v4124 = vpop.permute.xlu0 %4123
      %4125 = vrot.lane.b32.xlu0 %v3143, 32
      %v4126 = vpop.permute.xlu0 %4125
      %4127 = vrot.lane.b32.xlu0 %v3144, 32
      %v4128 = vpop.permute.xlu0 %4127
      %4129 = vrot.lane.b32.xlu0 %v3145, 32
      %v4130 = vpop.permute.xlu0 %4129
      %4131 = vrot.lane.b32.xlu0 %v3146, 32
      %v4132 = vpop.permute.xlu0 %4131
      %4133 = vrot.lane.b32.xlu0 %v3147, 32
      %v4134 = vpop.permute.xlu0 %4133
      %4135 = vrot.lane.b32.xlu0 %v3148, 32
      %v4136 = vpop.permute.xlu0 %4135
      %4137 = vrot.lane.b32.xlu0 %v3149, 32
      %v4138 = vpop.permute.xlu0 %4137
      %4139 = vrot.lane.b32.xlu0 %v3150, 32
      %v4140 = vpop.permute.xlu0 %4139
      %4141 = vrot.lane.b32.xlu0 %v3151, 32
      %v4142 = vpop.permute.xlu0 %4141
      %4143 = vrot.lane.b32.xlu0 %v3152, 32
      %v4144 = vpop.permute.xlu0 %4143
      %v4177 = vsel %vm812, %v2864, %v3186
      %v4178 = vsel %vm812, %v2865, %v3188
      %v4179 = vsel %vm812, %v2866, %v3190
      %v4180 = vsel %vm812, %v2867, %v3192
      %v4181 = vsel %vm812, %v2868, %v3194
      %v4182 = vsel %vm812, %v2869, %v3196
      %v4183 = vsel %vm812, %v2870, %v3198
      %v4184 = vsel %vm812, %v2871, %v3200
      %v4185 = vsel %vm812, %v2872, %v3202
      %v4186 = vsel %vm812, %v2873, %v3204
      %v4187 = vsel %vm812, %v2874, %v3206
      %v4188 = vsel %vm812, %v2875, %v3208
      %v4189 = vsel %vm812, %v2876, %v3210
      %v4190 = vsel %vm812, %v2877, %v3212
      %v4191 = vsel %vm812, %v2878, %v3214
      %v4192 = vsel %vm812, %v2879, %v3216
      %v4193 = vsel %vm812, %v2880, %v3218
      %v4194 = vsel %vm812, %v2881, %v3220
      %v4195 = vsel %vm812, %v2882, %v3222
      %v4196 = vsel %vm812, %v2883, %v3224
      %v4197 = vsel %vm812, %v2884, %v3226
      %v4198 = vsel %vm812, %v2885, %v3228
      %v4199 = vsel %vm812, %v2886, %v3230
      %v4200 = vsel %vm812, %v2887, %v3232
      %v4201 = vsel %vm812, %v2888, %v3234
      %v4202 = vsel %vm812, %v2889, %v3236
      %v4203 = vsel %vm812, %v2890, %v3238
      %v4204 = vsel %vm812, %v2891, %v3240
      %v4205 = vsel %vm812, %v2892, %v3242
      %v4206 = vsel %vm812, %v2893, %v3244
      %v4207 = vsel %vm812, %v2894, %v3246
      %v4208 = vsel %vm812, %v2895, %v3248
      %v4209 = vsel %vm596, %v4177, %v3314
      %v4210 = vsel %vm596, %v4178, %v3316
      %v4211 = vsel %vm596, %v4179, %v3318
      %v4212 = vsel %vm596, %v4180, %v3320
      %v4213 = vsel %vm596, %v4181, %v3322
      %v4214 = vsel %vm596, %v4182, %v3324
      %v4215 = vsel %vm596, %v4183, %v3326
      %v4216 = vsel %vm596, %v4184, %v3328
      %v4217 = vsel %vm596, %v4185, %v3330
      %v4218 = vsel %vm596, %v4186, %v3332
      %v4219 = vsel %vm596, %v4187, %v3334
      %v4220 = vsel %vm596, %v4188, %v3336
      %v4221 = vsel %vm596, %v4189, %v3338
      %v4222 = vsel %vm596, %v4190, %v3340
      %v4223 = vsel %vm596, %v4191, %v3342
      %v4224 = vsel %vm596, %v4192, %v3344
      %v4225 = vsel %vm596, %v4193, %v3346
      %v4226 = vsel %vm596, %v4194, %v3348
      %v4227 = vsel %vm596, %v4195, %v3350
      %v4228 = vsel %vm596, %v4196, %v3352
      %v4229 = vsel %vm596, %v4197, %v3354
      %v4230 = vsel %vm596, %v4198, %v3356
      %v4231 = vsel %vm596, %v4199, %v3358
      %v4232 = vsel %vm596, %v4200, %v3360
      %v4233 = vsel %vm596, %v4201, %v3362
      %v4234 = vsel %vm596, %v4202, %v3364
      %v4235 = vsel %vm596, %v4203, %v3366
      %v4236 = vsel %vm596, %v4204, %v3368
      %v4237 = vsel %vm596, %v4205, %v3370
      %v4238 = vsel %vm596, %v4206, %v3372
      %v4239 = vsel %vm596, %v4207, %v3374
      %v4240 = vsel %vm596, %v4208, %v3376
      %vm4241 = vcmask 97280
      %v4242 = vsel %vm4241, %v4209, %v3442
      %v4243 = vsel %vm4241, %v4210, %v3444
      %v4244 = vsel %vm4241, %v4211, %v3446
      %v4245 = vsel %vm4241, %v4212, %v3448
      %v4246 = vsel %vm4241, %v4213, %v3450
      %v4247 = vsel %vm4241, %v4214, %v3452
      %v4248 = vsel %vm4241, %v4215, %v3454
      %v4249 = vsel %vm4241, %v4216, %v3456
      %v4250 = vsel %vm4241, %v4217, %v3458
      %v4251 = vsel %vm4241, %v4218, %v3460
      %v4252 = vsel %vm4241, %v4219, %v3462
      %v4253 = vsel %vm4241, %v4220, %v3464
      %v4254 = vsel %vm4241, %v4221, %v3466
      %v4255 = vsel %vm4241, %v4222, %v3468
      %v4256 = vsel %vm4241, %v4223, %v3470
      %v4257 = vsel %vm4241, %v4224, %v3472
      %v4258 = vsel %vm4241, %v4225, %v3474
      %v4259 = vsel %vm4241, %v4226, %v3476
      %v4260 = vsel %vm4241, %v4227, %v3478
      %v4261 = vsel %vm4241, %v4228, %v3480
      %v4262 = vsel %vm4241, %v4229, %v3482
      %v4263 = vsel %vm4241, %v4230, %v3484
      %v4264 = vsel %vm4241, %v4231, %v3486
      %v4265 = vsel %vm4241, %v4232, %v3488
      %v4266 = vsel %vm4241, %v4233, %v3490
      %v4267 = vsel %vm4241, %v4234, %v3492
      %v4268 = vsel %vm4241, %v4235, %v3494
      %v4269 = vsel %vm4241, %v4236, %v3496
      %v4270 = vsel %vm4241, %v4237, %v3498
      %v4271 = vsel %vm4241, %v4238, %v3500
      %v4272 = vsel %vm4241, %v4239, %v3502
      %v4273 = vsel %vm4241, %v4240, %v3504
      %v4274 = vsel %vm2223, %v4242, %v3570
      %v4275 = vsel %vm2223, %v4243, %v3572
      %v4276 = vsel %vm2223, %v4244, %v3574
      %v4277 = vsel %vm2223, %v4245, %v3576
      %v4278 = vsel %vm2223, %v4246, %v3578
      %v4279 = vsel %vm2223, %v4247, %v3580
      %v4280 = vsel %vm2223, %v4248, %v3582
      %v4281 = vsel %vm2223, %v4249, %v3584
      %v4282 = vsel %vm2223, %v4250, %v3586
      %v4283 = vsel %vm2223, %v4251, %v3588
      %v4284 = vsel %vm2223, %v4252, %v3590
      %v4285 = vsel %vm2223, %v4253, %v3592
      %v4286 = vsel %vm2223, %v4254, %v3594
      %v4287 = vsel %vm2223, %v4255, %v3596
      %v4288 = vsel %vm2223, %v4256, %v3598
      %v4289 = vsel %vm2223, %v4257, %v3600
      %v4290 = vsel %vm2223, %v4258, %v3602
      %v4291 = vsel %vm2223, %v4259, %v3604
      %v4292 = vsel %vm2223, %v4260, %v3606
      %v4293 = vsel %vm2223, %v4261, %v3608
      %v4294 = vsel %vm2223, %v4262, %v3610
      %v4295 = vsel %vm2223, %v4263, %v3612
      %v4296 = vsel %vm2223, %v4264, %v3614
      %v4297 = vsel %vm2223, %v4265, %v3616
      %v4298 = vsel %vm2223, %v4266, %v3618
      %v4299 = vsel %vm2223, %v4267, %v3620
      %v4300 = vsel %vm2223, %v4268, %v3622
      %v4301 = vsel %vm2223, %v4269, %v3624
      %v4302 = vsel %vm2223, %v4270, %v3626
      %v4303 = vsel %vm2223, %v4271, %v3628
      %v4304 = vsel %vm2223, %v4272, %v3630
      %v4305 = vsel %vm2223, %v4273, %v3632
      %vm4306 = vcmask 162816
      %v4307 = vsel %vm4306, %v4274, %v3698
      %v4308 = vsel %vm4306, %v4275, %v3700
      %v4309 = vsel %vm4306, %v4276, %v3702
      %v4310 = vsel %vm4306, %v4277, %v3704
      %v4311 = vsel %vm4306, %v4278, %v3706
      %v4312 = vsel %vm4306, %v4279, %v3708
      %v4313 = vsel %vm4306, %v4280, %v3710
      %v4314 = vsel %vm4306, %v4281, %v3712
      %v4315 = vsel %vm4306, %v4282, %v3714
      %v4316 = vsel %vm4306, %v4283, %v3716
      %v4317 = vsel %vm4306, %v4284, %v3718
      %v4318 = vsel %vm4306, %v4285, %v3720
      %v4319 = vsel %vm4306, %v4286, %v3722
      %v4320 = vsel %vm4306, %v4287, %v3724
      %v4321 = vsel %vm4306, %v4288, %v3726
      %v4322 = vsel %vm4306, %v4289, %v3728
      %v4323 = vsel %vm4306, %v4290, %v3730
      %v4324 = vsel %vm4306, %v4291, %v3732
      %v4325 = vsel %vm4306, %v4292, %v3734
      %v4326 = vsel %vm4306, %v4293, %v3736
      %v4327 = vsel %vm4306, %v4294, %v3738
      %v4328 = vsel %vm4306, %v4295, %v3740
      %v4329 = vsel %vm4306, %v4296, %v3742
      %v4330 = vsel %vm4306, %v4297, %v3744
      %v4331 = vsel %vm4306, %v4298, %v3746
      %v4332 = vsel %vm4306, %v4299, %v3748
      %v4333 = vsel %vm4306, %v4300, %v3750
      %v4334 = vsel %vm4306, %v4301, %v3752
      %v4335 = vsel %vm4306, %v4302, %v3754
      %v4336 = vsel %vm4306, %v4303, %v3756
      %v4337 = vsel %vm4306, %v4304, %v3758
      %v4338 = vsel %vm4306, %v4305, %v3760
      %v4339 = vsel %vm2256, %v4307, %v3826
      %v4340 = vsel %vm2256, %v4308, %v3828
      %v4341 = vsel %vm2256, %v4309, %v3830
      %v4342 = vsel %vm2256, %v4310, %v3832
      %v4343 = vsel %vm2256, %v4311, %v3834
      %v4344 = vsel %vm2256, %v4312, %v3836
      %v4345 = vsel %vm2256, %v4313, %v3838
      %v4346 = vsel %vm2256, %v4314, %v3840
      %v4347 = vsel %vm2256, %v4315, %v3842
      %v4348 = vsel %vm2256, %v4316, %v3844
      %v4349 = vsel %vm2256, %v4317, %v3846
      %v4350 = vsel %vm2256, %v4318, %v3848
      %v4351 = vsel %vm2256, %v4319, %v3850
      %v4352 = vsel %vm2256, %v4320, %v3852
      %v4353 = vsel %vm2256, %v4321, %v3854
      %v4354 = vsel %vm2256, %v4322, %v3856
      %v4355 = vsel %vm2256, %v4323, %v3858
      %v4356 = vsel %vm2256, %v4324, %v3860
      %v4357 = vsel %vm2256, %v4325, %v3862
      %v4358 = vsel %vm2256, %v4326, %v3864
      %v4359 = vsel %vm2256, %v4327, %v3866
      %v4360 = vsel %vm2256, %v4328, %v3868
      %v4361 = vsel %vm2256, %v4329, %v3870
      %v4362 = vsel %vm2256, %v4330, %v3872
      %v4363 = vsel %vm2256, %v4331, %v3874
      %v4364 = vsel %vm2256, %v4332, %v3876
      %v4365 = vsel %vm2256, %v4333, %v3878
      %v4366 = vsel %vm2256, %v4334, %v3880
      %v4367 = vsel %vm2256, %v4335, %v3882
      %v4368 = vsel %vm2256, %v4336, %v3884
      %v4369 = vsel %vm2256, %v4337, %v3886
      %v4370 = vsel %vm2256, %v4338, %v3888
      %vm4371 = vcmask 228352
      %v4372 = vsel %vm4371, %v4339, %v3954
      %v4373 = vsel %vm4371, %v4340, %v3956
      %v4374 = vsel %vm4371, %v4341, %v3958
      %v4375 = vsel %vm4371, %v4342, %v3960
      %v4376 = vsel %vm4371, %v4343, %v3962
      %v4377 = vsel %vm4371, %v4344, %v3964
      %v4378 = vsel %vm4371, %v4345, %v3966
      %v4379 = vsel %vm4371, %v4346, %v3968
      %v4380 = vsel %vm4371, %v4347, %v3970
      %v4381 = vsel %vm4371, %v4348, %v3972
      %v4382 = vsel %vm4371, %v4349, %v3974
      %v4383 = vsel %vm4371, %v4350, %v3976
      %v4384 = vsel %vm4371, %v4351, %v3978
      %v4385 = vsel %vm4371, %v4352, %v3980
      %v4386 = vsel %vm4371, %v4353, %v3982
      %v4387 = vsel %vm4371, %v4354, %v3984
      %v4388 = vsel %vm4371, %v4355, %v3986
      %v4389 = vsel %vm4371, %v4356, %v3988
      %v4390 = vsel %vm4371, %v4357, %v3990
      %v4391 = vsel %vm4371, %v4358, %v3992
      %v4392 = vsel %vm4371, %v4359, %v3994
      %v4393 = vsel %vm4371, %v4360, %v3996
      %v4394 = vsel %vm4371, %v4361, %v3998
      %v4395 = vsel %vm4371, %v4362, %v4000
      %v4396 = vsel %vm4371, %v4363, %v4002
      %v4397 = vsel %vm4371, %v4364, %v4004
      %v4398 = vsel %vm4371, %v4365, %v4006
      %v4399 = vsel %vm4371, %v4366, %v4008
      %v4400 = vsel %vm4371, %v4367, %v4010
      %v4401 = vsel %vm4371, %v4368, %v4012
      %v4402 = vsel %vm4371, %v4369, %v4014
      %v4403 = vsel %vm4371, %v4370, %v4016
      %v4404 = vsel %vm2289, %v4372, %v4082
      %v4405 = vsel %vm2289, %v4373, %v4084
      %v4406 = vsel %vm2289, %v4374, %v4086
      %v4407 = vsel %vm2289, %v4375, %v4088
      %v4408 = vsel %vm2289, %v4376, %v4090
      %v4409 = vsel %vm2289, %v4377, %v4092
      %v4410 = vsel %vm2289, %v4378, %v4094
      %v4411 = vsel %vm2289, %v4379, %v4096
      %v4412 = vsel %vm2289, %v4380, %v4098
      %v4413 = vsel %vm2289, %v4381, %v4100
      %v4414 = vsel %vm2289, %v4382, %v4102
      %v4415 = vsel %vm2289, %v4383, %v4104
      %v4416 = vsel %vm2289, %v4384, %v4106
      %v4417 = vsel %vm2289, %v4385, %v4108
      %v4418 = vsel %vm2289, %v4386, %v4110
      %v4419 = vsel %vm2289, %v4387, %v4112
      %v4420 = vsel %vm2289, %v4388, %v4114
      %v4421 = vsel %vm2289, %v4389, %v4116
      %v4422 = vsel %vm2289, %v4390, %v4118
      %v4423 = vsel %vm2289, %v4391, %v4120
      %v4424 = vsel %vm2289, %v4392, %v4122
      %v4425 = vsel %vm2289, %v4393, %v4124
      %v4426 = vsel %vm2289, %v4394, %v4126
      %v4427 = vsel %vm2289, %v4395, %v4128
      %v4428 = vsel %vm2289, %v4396, %v4130
      %v4429 = vsel %vm2289, %v4397, %v4132
      %v4430 = vsel %vm2289, %v4398, %v4134
      %v4431 = vsel %vm2289, %v4399, %v4136
      %v4432 = vsel %vm2289, %v4400, %v4138
      %v4433 = vsel %vm2289, %v4401, %v4140
      %v4434 = vsel %vm2289, %v4402, %v4142
      %v4435 = vsel %vm2289, %v4403, %v4144
      %v4436 = vld [vmem:[%s6] sm:$0xf]
      %vm4437 = vcmask 293888
      %v4439 = vsel %vm4437, %v4436, 0
      %v4442 = vsel %vm4437, %v4404, 0
      %v4445 = vsel %vm4437, %v4405, 0
      %v4448 = vsel %vm4437, %v4406, 0
      %v4451 = vsel %vm4437, %v4407, 0
      %v4454 = vsel %vm4437, %v4408, 0
      %v4457 = vsel %vm4437, %v4409, 0
      %v4460 = vsel %vm4437, %v4410, 0
      %v4463 = vsel %vm4437, %v4411, 0
      %v4466 = vsel %vm4437, %v4412, 0
      %v4469 = vsel %vm4437, %v4413, 0
      %v4472 = vsel %vm4437, %v4414, 0
      %v4475 = vsel %vm4437, %v4415, 0
      %v4478 = vsel %vm4437, %v4416, 0
      %v4481 = vsel %vm4437, %v4417, 0
      %v4484 = vsel %vm4437, %v4418, 0
      %v4487 = vsel %vm4437, %v4419, 0
      %v4490 = vsel %vm4437, %v4420, 0
      %v4493 = vsel %vm4437, %v4421, 0
      %v4496 = vsel %vm4437, %v4422, 0
      %v4499 = vsel %vm4437, %v4423, 0
      %v4502 = vsel %vm4437, %v4424, 0
      %v4505 = vsel %vm4437, %v4425, 0
      %v4508 = vsel %vm4437, %v4426, 0
      %v4511 = vsel %vm4437, %v4427, 0
      %v4514 = vsel %vm4437, %v4428, 0
      %v4517 = vsel %vm4437, %v4429, 0
      %v4520 = vsel %vm4437, %v4430, 0
      %v4523 = vsel %vm4437, %v4431, 0
      %v4526 = vsel %vm4437, %v4432, 0
      %v4529 = vsel %vm4437, %v4433, 0
      %v4532 = vsel %vm4437, %v4434, 0
      %v4535 = vsel %vm4437, %v4435, 0
      %4537 = vmatpush.xpose.msra.mxu0 %v4487
      %4538 = vmatpush.xpose.msra.mxu0 %v4484
      %4539 = vmatpush.xpose.msra.mxu0 %v4481
      %4540 = vmatpush.xpose.msra.mxu0 %v4478
      %4541 = vmatpush.xpose.msra.mxu0 %v4475
      %4542 = vmatpush.xpose.msra.mxu0 %v4472
      %4543 = vmatpush.xpose.msra.mxu0 %v4469
      %4544 = vmatpush.xpose.msra.mxu0 %v4466
      %4545 = vmatpush.xpose.msra.mxu0 %v4463
      %4546 = vmatpush.xpose.msra.mxu0 %v4460
      %4547 = vmatpush.xpose.msra.mxu0 %v4457
      %4548 = vmatpush.xpose.msra.mxu0 %v4454
      %4549 = vmatpush.xpose.msra.mxu0 %v4451
      %4550 = vmatpush.xpose.msra.mxu0 %v4448
      %4551 = vmatpush.xpose.msra.mxu0 %v4445
      %4552 = vmatpush.xpose.msra.mxu0 %v4442
      %4553 = vmatmul.f32.gmra.mxu0 %v4439
      %v4554 = vpop.f32.mrf.mxu0
      %v4555 = vadd.f32 0.0, %v4554
      %4556 = vdwg.mxu0
      %4557 = vmatpush.xpose.msra.mxu0 %v4535
      %4558 = vmatpush.xpose.msra.mxu0 %v4532
      %4559 = vmatpush.xpose.msra.mxu0 %v4529
      %4560 = vmatpush.xpose.msra.mxu0 %v4526
      %4561 = vmatpush.xpose.msra.mxu0 %v4523
      %4562 = vmatpush.xpose.msra.mxu0 %v4520
      %4563 = vmatpush.xpose.msra.mxu0 %v4517
      %4564 = vmatpush.xpose.msra.mxu0 %v4514
      %4565 = vmatpush.xpose.msra.mxu0 %v4511
      %4566 = vmatpush.xpose.msra.mxu0 %v4508
      %4567 = vmatpush.xpose.msra.mxu0 %v4505
      %4568 = vmatpush.xpose.msra.mxu0 %v4502
      %4569 = vmatpush.xpose.msra.mxu0 %v4499
      %4570 = vmatpush.xpose.msra.mxu0 %v4496
      %4571 = vmatpush.xpose.msra.mxu0 %v4493
      %4572 = vmatpush.xpose.msra.mxu0 %v4490
      %4573 = vmatmul.f32.gmra.mxu0 %v4439
      %v4574 = vpop.f32.mrf.mxu0
      %v4575 = vadd.f32 0.0, %v4574
      %4576 = vdwg.mxu0
      %v4577 = vld [vmem:[%s7] sm:$0xf]
      %4579 = vset.pattern.permute.xlu0 0
      %4580 = vperm.xlu0 %4579, %v4577
      %v4581 = vpop.permute.xlu0 %4580
      %v4583 = vmul.f32 %v4555, %v4581
      %v4584 = vmul.f32 %v4575, %v4581
      %v4585 = vld [vmem:[%s8] sm:$0xf]
      %4587 = vset.pattern.permute.xlu0 0
      %4588 = vperm.xlu0 %4587, %v4585
      %v4589 = vpop.permute.xlu0 %4588
      %v4591 = vadd.f32 %v4583, %v4589
      %v4592 = vadd.f32 %v4584, %v4589
      %v4593 = vmax.f32 %v4591, 0.0
      %v4594 = vmax.f32 %v4592, 0.0
      %v4597 = vrot.slane %v4594, 4
      %vm4598 = vcmask 1043456
      %v4599 = vsel %vm4598, %v4593, %v4597
      %4601 = vst [vmem:[%s349] sm:$0xff] %v4599
      %p4602 = scmp.lt.s32.totalorder %s20, 1
      %s4603 = scalar_select %p4602, %s20, 1
      %s4604 = smul.addr %s4603, 2
      %s4605 = smul.addr %s4604, 4
      %s4606 = scalar_lea.vmem %s9, %s4605
      // Predicated region
      $region57: #{up2_forward.1} parent=55 // pred_check
        %p4607 = pneg %p237
      $region58: #{up2_forward.1} parent=55 // pred_check_branch
        %4609 = sbr.rel (%p4607) target = $region60
      $region59: #{up2_forward.1} parent=55 // pred_region
        _
      $region60: #{up2_forward.1} parent=55 // pred_fallthru
        _
    $region56: #{up2_forward.1} parent=5 // pred_fallthru
      _
    %p4610 = scmp.le.s32.totalorder 2, %s15
    // Predicated region
    $region61: #{up2_forward.1} parent=5 // pred_check
      %p4611 = pneg %p4610
    $region62: #{up2_forward.1} parent=5 // pred_check_branch
      %4613 = sbr.rel (%p4611) target = $region64
    $region63: #{up2_forward.1} parent=5 // pred_region
      %s4614 = ssub.s32 %s15, 2
      // Predicated region
      $region65: #{up2_forward.1} parent=63 // pred_check
        %p4615 = pneg %p243
      $region66: #{up2_forward.1} parent=63 // pred_check_branch
        %4617 = sbr.rel (%p4615) target = $region68
      $region67: #{up2_forward.1} parent=63 // pred_region
        %p4618 = scmp.lt.s32.totalorder %s21, 1
        %s4619 = scalar_select %p4618, %s21, 1
        %s4620 = smul.addr %s4619, 2
        %s4621 = smul.addr %s4620, 4
        %s4622 = scalar_lea.vmem %s9, %s4621
      $region68: #{up2_forward.1} parent=63 // pred_fallthru
        _
    $region64: #{up2_forward.1} parent=5 // pred_fallthru
      _
  $region6: #{up2_forward.1} parent=0 // loop_footer
    %s19 = sadd.s32 1, %s15
  $region7: #{up2_forward.1} parent=0 // loop_footer_branch
    %14 = sbr.rel target = $region3
  $region8: #{up2_forward.1} parent=0 // loop_exit
    _

</llo_original>
